<compile_context>
chip_gen: v5e
topology: v5e:2x2
jax: 0.10.0
libtpu: 0.0.40
codegen_flags: <defaults>
</compile_context>

<pallas_src>
import functools

import jax
import jax.numpy as jnp
import numpy as np
from jax.experimental import pallas as pl
from jax.experimental.pallas import tpu as pltpu

_DEFAULT_BLOCK_B = 256   # default batch tile (multiple of 8)


def _round_up(v, m):
    return ((v + m - 1) // m) * m


# ----------------------------------------------------------------------------
# Fused Pallas kernel: whole forward pass for one batch tile, all in VMEM.
# ----------------------------------------------------------------------------
def _cnn_fused_kernel(x_ref, m1_ref, b1_ref, m2_ref, b2_ref,
                      f1_ref, fb1_ref, f2_ref, fb2_ref, o_ref,
                      acc1_ref, acc2_ref):
    """Shapes (bt = batch tile, multiple of 8):
      x_ref   : (28*bt, 28) bf16, row = h*bt + b (h-major, batch-minor)
      m1_ref  : (5, 28, 256) bf16  conv1 as banded matmul over W; out lane =
                128*p + co*12 + j   (p = W-pool phase, j = pooled output col)
      m2_ref  : (5, 128, 256) bf16 conv2 likewise; in lane = ci*12 + w1,
                out lane = 128*p + co*4 + j2
      f1_ref  : (512, 50) bf16     fc1 with torch x.view(-1, 320) order folded in
      f2_ref  : (50, 10)  bf16     fc2
      b*_ref  : f32 per-lane biases (zero padded lanes)
      o_ref   : (bt, 10) f32       softmax probabilities
      acc1_ref: (24*bt, 256) f32   conv1 accumulator (explicit VMEM scratch)
      acc2_ref: (8*bt, 256)  f32   conv2 accumulator (explicit VMEM scratch)
    """
    bt = o_ref.shape[0]

    # ---- conv1 (5x5, 1->10): 5 banded matmuls over kh; both W-pool phases are
    #      packed into the 256-wide N dim (fills the MXU columns on v6e/v7x).
    for kh in range(5):
        lhs = x_ref[kh * bt:(kh + 24) * bt, :]                     # (24*bt, 28) bf16
        part = jnp.dot(lhs, m1_ref[kh], preferred_element_type=jnp.float32)
        if kh == 0:
            acc1_ref[...] = part
        else:
            acc1_ref[...] += part

    # 2x2 max-pool: W via the two 128-lane halves, H via adjacent bt-row blocks;
    # then bias + ReLU (bias is per-channel so pooling before bias is exact).
    y1 = jnp.maximum(acc1_ref[:, 0:128], acc1_ref[:, 128:256])     # (24*bt, 128)
    z1 = jnp.concatenate(
        [jnp.maximum(y1[(2 * q) * bt:(2 * q + 1) * bt, :],
                     y1[(2 * q + 1) * bt:(2 * q + 2) * bt, :])
         for q in range(12)],
        axis=0)                                                    # (12*bt, 128)
    z1 = jnp.maximum(z1 + b1_ref[...], 0.0).astype(jnp.bfloat16)

    # TODO(synk): nn.Dropout2d after conv2 is train-time stochastic; identity here.

    # ---- conv2 (5x5, 10->20): 5 banded matmuls, W-pool phases packed into N=256.
    for kh in range(5):
        lhs = z1[kh * bt:(kh + 8) * bt, :]                         # (8*bt, 128) bf16
        part = jnp.dot(lhs, m2_ref[kh], preferred_element_type=jnp.float32)
        if kh == 0:
            acc2_ref[...] = part
        else:
            acc2_ref[...] += part

    y2 = jnp.maximum(acc2_ref[:, 0:128], acc2_ref[:, 128:256])     # (8*bt, 128)
    z2_blocks = []
    for q in range(4):                                             # pooled output row
        z2q = jnp.maximum(y2[(2 * q) * bt:(2 * q + 1) * bt, :],
                          y2[(2 * q + 1) * bt:(2 * q + 2) * bt, :])
        z2q = jnp.maximum(z2q + b2_ref[...], 0.0).astype(jnp.bfloat16)   # (bt, 128)
        z2_blocks.append(z2q)

    # ---- fc1 (+ReLU): torch flatten order folded into f1; one K=512 matmul.
    flat = jnp.concatenate(z2_blocks, axis=-1)                     # (bt, 512) bf16
    h = jnp.dot(flat, f1_ref[...], preferred_element_type=jnp.float32) + fb1_ref[...]
    # TODO(synk): F.dropout before fc2 is train-time stochastic; identity here.
    h = jnp.maximum(h, 0.0).astype(jnp.bfloat16)                   # (bt, 50)

    # ---- fc2 + softmax ------------------------------------------------------
    logits = jnp.dot(h, f2_ref[...], preferred_element_type=jnp.float32) + fb2_ref[...]
    m = jnp.max(logits, axis=-1, keepdims=True)
    e = jnp.exp(logits - m)
    o_ref[...] = (e / jnp.sum(e, axis=-1, keepdims=True)).astype(o_ref.dtype)


# ----------------------------------------------------------------------------
# Parameter setup / one-time host-side repack
# ----------------------------------------------------------------------------
def init_params(key):
    """Deterministic PyTorch-default-style uniform init (NCHW / OIHW layouts)."""
    def uniform(key, shape, fan_in):
        bound = 1.0 / jnp.sqrt(jnp.float32(fan_in))
        return jax.random.uniform(key, shape, jnp.float32, -bound, bound)

    ks = jax.random.split(key, 8)
    w1 = uniform(ks[0], (10, 1, 5, 5), 1 * 5 * 5)     # conv1
    b1 = uniform(ks[1], (10,), 1 * 5 * 5)
    w2 = uniform(ks[2], (20, 10, 5, 5), 10 * 5 * 5)   # conv2
    b2 = uniform(ks[3], (20,), 10 * 5 * 5)
    fw1 = uniform(ks[4], (50, 320), 320)              # fc1
    fb1 = uniform(ks[5], (50,), 320)
    fw2 = uniform(ks[6], (10, 50), 50)                # fc2
    fb2 = uniform(ks[7], (10,), 50)
    return w1, b1, w2, b2, fw1, fb1, fw2, fb2


def prepare_params(params):
    """One-time host repack of PyTorch-layout weights into the banded / phase-packed
    bf16 matrices the fused kernel consumes."""
    w1, b1, w2, b2, fw1, fb1, fw2, fb2 = [np.asarray(p, np.float32) for p in params]

    # conv1 (10,1,5,5) -> (5, 28, 256): row = input col w (= 2*j + p + kw),
    # lane = 128*p + co*12 + j  (p = W-pool phase, j = pooled output col).
    m1 = np.zeros((5, 28, 256), np.float32)
    for kh in range(5):
        for p in range(2):
            for j in range(12):
                for kw in range(5):
                    m1[kh, 2 * j + p + kw, 128 * p + j:128 * p + 120:12] = w1[:, 0, kh, kw]
    b1l = np.zeros((1, 128), np.float32)
    b1l[0, :120] = np.repeat(b1, 12)

    # conv2 (20,10,5,5) -> (5, 128, 256): row = ci*12 + w1 (conv1's pooled lane
    # layout, rows 120..127 unused), lane = 128*p + co*4 + j2, w1 = 2*j2 + p + kw.
    m2 = np.zeros((5, 128, 256), np.float32)
    for kh in range(5):
        for p in range(2):
            for j2 in range(4):
                for kw in range(5):
                    for ci in range(10):
                        m2[kh, ci * 12 + 2 * j2 + p + kw,
                           128 * p + j2:128 * p + 80:4] = w2[:, ci, kh, kw]
    b2l = np.zeros((1, 128), np.float32)
    b2l[0, :80] = np.repeat(b2, 4)

    # fc1 (50,320): torch flatten index c*16 + h*4 + w lands at kernel lane
    # 128*h + c*4 + w (pooled-row-major lane concat) -> (512, 50).
    fw1_r = fw1.reshape(50, 20, 4, 4)
    f1 = np.zeros((512, 50), np.float32)
    for h in range(4):
        f1[128 * h:128 * h + 80, :] = fw1_r[:, :, h, :].reshape(50, 80).T
    fb1l = fb1[None, :]                                            # (1, 50)

    f2 = fw2.T.copy()                                              # (50, 10)
    fb2l = fb2[None, :]                                            # (1, 10)

    bf = lambda a: jnp.asarray(a, jnp.bfloat16)
    f32 = lambda a: jnp.asarray(a, jnp.float32)
    return (bf(m1), f32(b1l), bf(m2), f32(b2l), bf(f1), f32(fb1l), bf(f2), f32(fb2l))


# ----------------------------------------------------------------------------
# Forward pass (matches CNN.forward, eval semantics)
# ----------------------------------------------------------------------------
def _vmem_limit_bytes(bt):
    """Conservative VMEM budget for a batch tile of bt rows (clamped so it is
    comfortably above v5e/v6e defaults yet below v7x's 64 MiB physical VMEM)."""
    acc = (24 * bt + 8 * bt) * 256 * 4                      # f32 scratch accumulators
    xin = 2 * (28 * bt) * 128 * 2                           # double-buffered input (lane padded)
    wts = 2 * 2 * (5 * 28 * 256 + 5 * 128 * 256 + 512 * 128 + 64 * 128 + 4 * 128)
    out = 2 * bt * 128 * 4
    tmp = (24 * bt) * 256 * 4 + (24 * bt + 12 * bt) * 128 * 4    # dot result / pooling temps
    est = acc + xin + wts + out + tmp
    return int(min(56 * 2 ** 20, max(32 * 2 ** 20, int(1.5 * est))))


@functools.partial(jax.jit, static_argnames=("block_b",))
def cnn_forward(x, packed, block_b=_DEFAULT_BLOCK_B):
    """x: (B, 1, 28, 28) float32 -> (B, 10) softmax probabilities."""
    m1, b1l, m2, b2l, f1, fb1l, f2, fb2l = packed
    assert x.shape[1:] == (1, 28, 28), x.shape
    B = x.shape[0]

    # Batch tile: large enough to amortize the per-grid-step pipeline overhead
    # and fill the MXU sublanes, capped so (a) the f32 accumulators fit v7x's
    # 64 MiB VMEM and (b) the grid keeps >=2 steps whenever B allows, so both
    # v7x TensorCores get a tile under the "parallel" grid axis.
    bt = max(8, min(_round_up(block_b, 8), _round_up(-(-B // 2), 8)))
    G = -(-B // bt)
    pad = G * bt - B

    xs = x[:, 0, :, :].astype(jnp.bfloat16)          # bf16 halves input DMA bytes
    if pad:
        xs = jnp.pad(xs, ((0, pad), (0, 0), (0, 0)))
    # Relayout rows to h-major / batch-minor within each tile (row = h*bt + b) so
    # every in-kernel conv slice is a contiguous, sublane-aligned slab.
    # TODO(synk): this one small XLA transpose could also be moved in-kernel
    # (sublane copies into a VMEM scratch) to shave its HBM round trip.
    xp = xs.reshape(G, bt, 28, 28).transpose(0, 2, 1, 3).reshape(G * 28 * bt, 28)

    out = pl.pallas_call(
        _cnn_fused_kernel,
        out_shape=jax.ShapeDtypeStruct((G * bt, 10), jnp.float32),
        grid=(G,),
        in_specs=[
            pl.BlockSpec((28 * bt, 28), lambda i: (i, 0)),      # input tile
            pl.BlockSpec((5, 28, 256), lambda i: (0, 0, 0)),    # conv1 weights (resident)
            pl.BlockSpec((1, 128), lambda i: (0, 0)),           # conv1 bias
            pl.BlockSpec((5, 128, 256), lambda i: (0, 0, 0)),   # conv2 weights (resident)
            pl.BlockSpec((1, 128), lambda i: (0, 0)),           # conv2 bias
            pl.BlockSpec((512, 50), lambda i: (0, 0)),          # fc1 weights
            pl.BlockSpec((1, 50), lambda i: (0, 0)),            # fc1 bias
            pl.BlockSpec((50, 10), lambda i: (0, 0)),           # fc2 weights
            pl.BlockSpec((1, 10), lambda i: (0, 0)),            # fc2 bias
        ],
        out_specs=pl.BlockSpec((bt, 10), lambda i: (i, 0)),
        scratch_shapes=[
            pltpu.VMEM((24 * bt, 256), jnp.float32),            # conv1 accumulator
            pltpu.VMEM((8 * bt, 256), jnp.float32),             # conv2 accumulator
        ],
        compiler_params=pltpu.CompilerParams(
            dimension_semantics=("parallel",),                  # batch tiles over TCs
            vmem_limit_bytes=_vmem_limit_bytes(bt),
        ),
    )(xp, m1, b1l, m2, b2l, f1, fb1l, f2, fb2l)
    return out[:B]


# ----------------------------------------------------------------------------
# Pure-JAX reference of the PyTorch module (eval semantics) for verification
# ----------------------------------------------------------------------------
def cnn_reference(x, params):
    w1, b1, w2, b2, fw1, fb1, fw2, fb2 = params

    def conv(x, w, b):
        y = jax.lax.conv_general_dilated(
            x, w, (1, 1), "VALID",
            dimension_numbers=("NCHW", "OIHW", "NCHW"),
            precision=jax.lax.Precision.HIGHEST)
        return y + b[None, :, None, None]

    def pool2(x):
        return jax.lax.reduce_window(x, -jnp.inf, jax.lax.max,
                                     (1, 1, 2, 2), (1, 1, 2, 2), "VALID")

    y = jax.nn.relu(pool2(conv(x, w1, b1)))
    y = jax.nn.relu(pool2(conv(y, w2, b2)))
    y = y.reshape(y.shape[0], -1)
    y = jax.nn.relu(jnp.dot(y, fw1.T, precision=jax.lax.Precision.HIGHEST) + fb1)
    y = jnp.dot(y, fw2.T, precision=jax.lax.Precision.HIGHEST) + fb2
    return jax.nn.softmax(y, axis=1)


if __name__ == "__main__":
    key = jax.random.PRNGKey(0)
    k_param, k_x = jax.random.split(key)
    params = init_params(k_param)
    packed = prepare_params(params)

    # Small deterministic input, single kernel run.
    x = jax.random.normal(k_x, (2, 1, 28, 28), dtype=jnp.float32)
    out = jax.block_until_ready(cnn_forward(x, packed))

    assert out.shape == (2, 10)
    # rows are softmax distributions
    assert bool(jnp.all(jnp.abs(jnp.sum(out, axis=1) - 1.0) < 1e-4))
    # matches the dense f32 JAX reference of the PyTorch module (eval semantics);
    # tolerance accounts for bf16 matmul operands (f32 accumulation).
    ref = cnn_reference(x, params)
    max_err = float(jnp.max(jnp.abs(out - ref)))
    assert max_err < 3e-3, max_err

    # Exercise the multi-tile grid / padded-batch path (G > 1) once as well.
    x2 = jax.random.normal(jax.random.PRNGKey(1), (40, 1, 28, 28), dtype=jnp.float32)
    out2 = jax.block_until_ready(cnn_forward(x2, packed))
    ref2 = cnn_reference(x2, params)
    assert out2.shape == (40, 10)
    max_err2 = float(jnp.max(jnp.abs(out2 - ref2)))
    assert max_err2 < 3e-3, max_err2

    print("KERNEL_OK")
</pallas_src>

<mosaic_0001>
module attributes {stable_mosaic.version = 11 : i64} {
  func.func @_cnn_fused_kernel(%arg0: i32, %arg1: memref<224x28xbf16, #tpu.memory_space<vmem>>, %arg2: memref<5x28x256xbf16, #tpu.memory_space<vmem>>, %arg3: memref<1x128xf32, #tpu.memory_space<vmem>>, %arg4: memref<5x128x256xbf16, #tpu.memory_space<vmem>>, %arg5: memref<1x128xf32, #tpu.memory_space<vmem>>, %arg6: memref<512x50xbf16, #tpu.memory_space<vmem>>, %arg7: memref<1x50xf32, #tpu.memory_space<vmem>>, %arg8: memref<50x10xbf16, #tpu.memory_space<vmem>>, %arg9: memref<1x10xf32, #tpu.memory_space<vmem>>, %arg10: memref<8x10xf32, #tpu.memory_space<vmem>>, %arg11: memref<192x256xf32, #tpu.memory_space<vmem>>, %arg12: memref<64x256xf32, #tpu.memory_space<vmem>>) attributes {dimension_semantics = [#tpu.dimension_semantics<parallel>], iteration_bounds = array<i64: 1>, scalar_prefetch = 0 : i64, scratch_operands = 2 : i64, tpu.core_type = #tpu.core_type<tc>, window_params = [{transform_indices = @transform_0, window_bounds = array<i64: 224, 28>}, {pipeline_mode = #tpu.pipeline_mode<synchronous>, transform_indices = @transform_1, window_bounds = array<i64: 5, 28, 256>}, {pipeline_mode = #tpu.pipeline_mode<synchronous>, transform_indices = @transform_2, window_bounds = array<i64: 1, 128>}, {pipeline_mode = #tpu.pipeline_mode<synchronous>, transform_indices = @transform_3, window_bounds = array<i64: 5, 128, 256>}, {pipeline_mode = #tpu.pipeline_mode<synchronous>, transform_indices = @transform_4, window_bounds = array<i64: 1, 128>}, {pipeline_mode = #tpu.pipeline_mode<synchronous>, transform_indices = @transform_5, window_bounds = array<i64: 512, 50>}, {pipeline_mode = #tpu.pipeline_mode<synchronous>, transform_indices = @transform_6, window_bounds = array<i64: 1, 50>}, {pipeline_mode = #tpu.pipeline_mode<synchronous>, transform_indices = @transform_7, window_bounds = array<i64: 50, 10>}, {pipeline_mode = #tpu.pipeline_mode<synchronous>, transform_indices = @transform_8, window_bounds = array<i64: 1, 10>}, {transform_indices = @transform_9, window_bounds = array<i64: 8, 10>}]} {
    %c0 = arith.constant 0 : index
    %c0_0 = arith.constant 0 : index
    %0 = vector.load %arg1[%c0, %c0_0] : memref<224x28xbf16, #tpu.memory_space<vmem>>, vector<192x28xbf16>
    %c0_1 = arith.constant 0 : index
    %c0_2 = arith.constant 0 : index
    %c0_3 = arith.constant 0 : index
    %1 = vector.load %arg2[%c0_1, %c0_2, %c0_3] : memref<5x28x256xbf16, #tpu.memory_space<vmem>>, vector<1x28x256xbf16>
    %2 = vector.shape_cast %1 : vector<1x28x256xbf16> to vector<28x256xbf16>
    %cst = arith.constant dense<0.000000e+00> : vector<192x256xf32>
    %3 = tpu.matmul %0, %2, %cst {dimension_numbers = #tpu.dot_dimension_numbers<[1], [0], [0], [1], [0, 0, 1, 1], [], []>} : vector<192x28xbf16>, vector<28x256xbf16>, vector<192x256xf32> -> vector<192x256xf32>
    %c0_4 = arith.constant 0 : index
    %c0_5 = arith.constant 0 : index
    %4 = vector.load %arg11[%c0_4, %c0_5] : memref<192x256xf32, #tpu.memory_space<vmem>>, vector<192x256xf32>
    tpu.vector_store %arg11[%c0_4, %c0_5], %3 {strides = array<i32>} : memref<192x256xf32, #tpu.memory_space<vmem>>, vector<192x256xf32>,
    %c8 = arith.constant 8 : index
    %c0_6 = arith.constant 0 : index
    %5 = vector.load %arg1[%c8, %c0_6] : memref<224x28xbf16, #tpu.memory_space<vmem>>, vector<192x28xbf16>
    %c1 = arith.constant 1 : index
    %c0_7 = arith.constant 0 : index
    %c0_8 = arith.constant 0 : index
    %6 = vector.load %arg2[%c1, %c0_7, %c0_8] : memref<5x28x256xbf16, #tpu.memory_space<vmem>>, vector<1x28x256xbf16>
    %7 = vector.shape_cast %6 : vector<1x28x256xbf16> to vector<28x256xbf16>
    %cst_9 = arith.constant dense<0.000000e+00> : vector<192x256xf32>
    %8 = tpu.matmul %5, %7, %cst_9 {dimension_numbers = #tpu.dot_dimension_numbers<[1], [0], [0], [1], [0, 0, 1, 1], [], []>} : vector<192x28xbf16>, vector<28x256xbf16>, vector<192x256xf32> -> vector<192x256xf32>
    %c0_10 = arith.constant 0 : index
    %c0_11 = arith.constant 0 : index
    %9 = vector.load %arg11[%c0_10, %c0_11] : memref<192x256xf32, #tpu.memory_space<vmem>>, vector<192x256xf32>
    %10 = arith.addf %9, %8 : vector<192x256xf32>
    %c0_12 = arith.constant 0 : index
    %c0_13 = arith.constant 0 : index
    %11 = vector.load %arg11[%c0_12, %c0_13] : memref<192x256xf32, #tpu.memory_space<vmem>>, vector<192x256xf32>
    tpu.vector_store %arg11[%c0_12, %c0_13], %10 {strides = array<i32>} : memref<192x256xf32, #tpu.memory_space<vmem>>, vector<192x256xf32>,
    %c16 = arith.constant 16 : index
    %c0_14 = arith.constant 0 : index
    %12 = vector.load %arg1[%c16, %c0_14] : memref<224x28xbf16, #tpu.memory_space<vmem>>, vector<192x28xbf16>
    %c2 = arith.constant 2 : index
    %c0_15 = arith.constant 0 : index
    %c0_16 = arith.constant 0 : index
    %13 = vector.load %arg2[%c2, %c0_15, %c0_16] : memref<5x28x256xbf16, #tpu.memory_space<vmem>>, vector<1x28x256xbf16>
    %14 = vector.shape_cast %13 : vector<1x28x256xbf16> to vector<28x256xbf16>
    %cst_17 = arith.constant dense<0.000000e+00> : vector<192x256xf32>
    %15 = tpu.matmul %12, %14, %cst_17 {dimension_numbers = #tpu.dot_dimension_numbers<[1], [0], [0], [1], [0, 0, 1, 1], [], []>} : vector<192x28xbf16>, vector<28x256xbf16>, vector<192x256xf32> -> vector<192x256xf32>
    %c0_18 = arith.constant 0 : index
    %c0_19 = arith.constant 0 : index
    %16 = vector.load %arg11[%c0_18, %c0_19] : memref<192x256xf32, #tpu.memory_space<vmem>>, vector<192x256xf32>
    %17 = arith.addf %16, %15 : vector<192x256xf32>
    %c0_20 = arith.constant 0 : index
    %c0_21 = arith.constant 0 : index
    %18 = vector.load %arg11[%c0_20, %c0_21] : memref<192x256xf32, #tpu.memory_space<vmem>>, vector<192x256xf32>
    tpu.vector_store %arg11[%c0_20, %c0_21], %17 {strides = array<i32>} : memref<192x256xf32, #tpu.memory_space<vmem>>, vector<192x256xf32>,
    %c24 = arith.constant 24 : index
    %c0_22 = arith.constant 0 : index
    %19 = vector.load %arg1[%c24, %c0_22] : memref<224x28xbf16, #tpu.memory_space<vmem>>, vector<192x28xbf16>
    %c3 = arith.constant 3 : index
    %c0_23 = arith.constant 0 : index
    %c0_24 = arith.constant 0 : index
    %20 = vector.load %arg2[%c3, %c0_23, %c0_24] : memref<5x28x256xbf16, #tpu.memory_space<vmem>>, vector<1x28x256xbf16>
    %21 = vector.shape_cast %20 : vector<1x28x256xbf16> to vector<28x256xbf16>
    %cst_25 = arith.constant dense<0.000000e+00> : vector<192x256xf32>
    %22 = tpu.matmul %19, %21, %cst_25 {dimension_numbers = #tpu.dot_dimension_numbers<[1], [0], [0], [1], [0, 0, 1, 1], [], []>} : vector<192x28xbf16>, vector<28x256xbf16>, vector<192x256xf32> -> vector<192x256xf32>
    %c0_26 = arith.constant 0 : index
    %c0_27 = arith.constant 0 : index
    %23 = vector.load %arg11[%c0_26, %c0_27] : memref<192x256xf32, #tpu.memory_space<vmem>>, vector<192x256xf32>
    %24 = arith.addf %23, %22 : vector<192x256xf32>
    %c0_28 = arith.constant 0 : index
    %c0_29 = arith.constant 0 : index
    %25 = vector.load %arg11[%c0_28, %c0_29] : memref<192x256xf32, #tpu.memory_space<vmem>>, vector<192x256xf32>
    tpu.vector_store %arg11[%c0_28, %c0_29], %24 {strides = array<i32>} : memref<192x256xf32, #tpu.memory_space<vmem>>, vector<192x256xf32>,
    %c32 = arith.constant 32 : index
    %c0_30 = arith.constant 0 : index
    %26 = vector.load %arg1[%c32, %c0_30] : memref<224x28xbf16, #tpu.memory_space<vmem>>, vector<192x28xbf16>
    %c4 = arith.constant 4 : index
    %c0_31 = arith.constant 0 : index
    %c0_32 = arith.constant 0 : index
    %27 = vector.load %arg2[%c4, %c0_31, %c0_32] : memref<5x28x256xbf16, #tpu.memory_space<vmem>>, vector<1x28x256xbf16>
    %28 = vector.shape_cast %27 : vector<1x28x256xbf16> to vector<28x256xbf16>
    %cst_33 = arith.constant dense<0.000000e+00> : vector<192x256xf32>
    %29 = tpu.matmul %26, %28, %cst_33 {dimension_numbers = #tpu.dot_dimension_numbers<[1], [0], [0], [1], [0, 0, 1, 1], [], []>} : vector<192x28xbf16>, vector<28x256xbf16>, vector<192x256xf32> -> vector<192x256xf32>
    %c0_34 = arith.constant 0 : index
    %c0_35 = arith.constant 0 : index
    %30 = vector.load %arg11[%c0_34, %c0_35] : memref<192x256xf32, #tpu.memory_space<vmem>>, vector<192x256xf32>
    %31 = arith.addf %30, %29 : vector<192x256xf32>
    %c0_36 = arith.constant 0 : index
    %c0_37 = arith.constant 0 : index
    %32 = vector.load %arg11[%c0_36, %c0_37] : memref<192x256xf32, #tpu.memory_space<vmem>>, vector<192x256xf32>
    tpu.vector_store %arg11[%c0_36, %c0_37], %31 {strides = array<i32>} : memref<192x256xf32, #tpu.memory_space<vmem>>, vector<192x256xf32>,
    %c0_38 = arith.constant 0 : index
    %c0_39 = arith.constant 0 : index
    %33 = vector.load %arg11[%c0_38, %c0_39] : memref<192x256xf32, #tpu.memory_space<vmem>>, vector<192x128xf32>
    %c0_40 = arith.constant 0 : index
    %c128 = arith.constant 128 : index
    %34 = vector.load %arg11[%c0_40, %c128] : memref<192x256xf32, #tpu.memory_space<vmem>>, vector<192x128xf32>
    %35 = arith.maximumf %33, %34 : vector<192x128xf32>
    %36 = vector.extract_strided_slice %35 {offsets = [0, 0], sizes = [8, 128], strides = [1, 1]} : vector<192x128xf32> to vector<8x128xf32>
    %37 = vector.extract_strided_slice %35 {offsets = [8, 0], sizes = [8, 128], strides = [1, 1]} : vector<192x128xf32> to vector<8x128xf32>
    %38 = arith.maximumf %36, %37 : vector<8x128xf32>
    %39 = vector.extract_strided_slice %35 {offsets = [16, 0], sizes = [8, 128], strides = [1, 1]} : vector<192x128xf32> to vector<8x128xf32>
    %40 = vector.extract_strided_slice %35 {offsets = [24, 0], sizes = [8, 128], strides = [1, 1]} : vector<192x128xf32> to vector<8x128xf32>
    %41 = arith.maximumf %39, %40 : vector<8x128xf32>
    %42 = vector.extract_strided_slice %35 {offsets = [32, 0], sizes = [8, 128], strides = [1, 1]} : vector<192x128xf32> to vector<8x128xf32>
    %43 = vector.extract_strided_slice %35 {offsets = [40, 0], sizes = [8, 128], strides = [1, 1]} : vector<192x128xf32> to vector<8x128xf32>
    %44 = arith.maximumf %42, %43 : vector<8x128xf32>
    %45 = vector.extract_strided_slice %35 {offsets = [48, 0], sizes = [8, 128], strides = [1, 1]} : vector<192x128xf32> to vector<8x128xf32>
    %46 = vector.extract_strided_slice %35 {offsets = [56, 0], sizes = [8, 128], strides = [1, 1]} : vector<192x128xf32> to vector<8x128xf32>
    %47 = arith.maximumf %45, %46 : vector<8x128xf32>
    %48 = vector.extract_strided_slice %35 {offsets = [64, 0], sizes = [8, 128], strides = [1, 1]} : vector<192x128xf32> to vector<8x128xf32>
    %49 = vector.extract_strided_slice %35 {offsets = [72, 0], sizes = [8, 128], strides = [1, 1]} : vector<192x128xf32> to vector<8x128xf32>
    %50 = arith.maximumf %48, %49 : vector<8x128xf32>
    %51 = vector.extract_strided_slice %35 {offsets = [80, 0], sizes = [8, 128], strides = [1, 1]} : vector<192x128xf32> to vector<8x128xf32>
    %52 = vector.extract_strided_slice %35 {offsets = [88, 0], sizes = [8, 128], strides = [1, 1]} : vector<192x128xf32> to vector<8x128xf32>
    %53 = arith.maximumf %51, %52 : vector<8x128xf32>
    %54 = vector.extract_strided_slice %35 {offsets = [96, 0], sizes = [8, 128], strides = [1, 1]} : vector<192x128xf32> to vector<8x128xf32>
    %55 = vector.extract_strided_slice %35 {offsets = [104, 0], sizes = [8, 128], strides = [1, 1]} : vector<192x128xf32> to vector<8x128xf32>
    %56 = arith.maximumf %54, %55 : vector<8x128xf32>
    %57 = vector.extract_strided_slice %35 {offsets = [112, 0], sizes = [8, 128], strides = [1, 1]} : vector<192x128xf32> to vector<8x128xf32>
    %58 = vector.extract_strided_slice %35 {offsets = [120, 0], sizes = [8, 128], strides = [1, 1]} : vector<192x128xf32> to vector<8x128xf32>
    %59 = arith.maximumf %57, %58 : vector<8x128xf32>
    %60 = vector.extract_strided_slice %35 {offsets = [128, 0], sizes = [8, 128], strides = [1, 1]} : vector<192x128xf32> to vector<8x128xf32>
    %61 = vector.extract_strided_slice %35 {offsets = [136, 0], sizes = [8, 128], strides = [1, 1]} : vector<192x128xf32> to vector<8x128xf32>
    %62 = arith.maximumf %60, %61 : vector<8x128xf32>
    %63 = vector.extract_strided_slice %35 {offsets = [144, 0], sizes = [8, 128], strides = [1, 1]} : vector<192x128xf32> to vector<8x128xf32>
    %64 = vector.extract_strided_slice %35 {offsets = [152, 0], sizes = [8, 128], strides = [1, 1]} : vector<192x128xf32> to vector<8x128xf32>
    %65 = arith.maximumf %63, %64 : vector<8x128xf32>
    %66 = vector.extract_strided_slice %35 {offsets = [160, 0], sizes = [8, 128], strides = [1, 1]} : vector<192x128xf32> to vector<8x128xf32>
    %67 = vector.extract_strided_slice %35 {offsets = [168, 0], sizes = [8, 128], strides = [1, 1]} : vector<192x128xf32> to vector<8x128xf32>
    %68 = arith.maximumf %66, %67 : vector<8x128xf32>
    %69 = vector.extract_strided_slice %35 {offsets = [176, 0], sizes = [8, 128], strides = [1, 1]} : vector<192x128xf32> to vector<8x128xf32>
    %70 = vector.extract_strided_slice %35 {offsets = [184, 0], sizes = [8, 128], strides = [1, 1]} : vector<192x128xf32> to vector<8x128xf32>
    %71 = arith.maximumf %69, %70 : vector<8x128xf32>
    %72 = tpu.concatenate %38, %41, %44, %47, %50, %53, %56, %59, %62, %65, %68, %71 in 0 : vector<8x128xf32>, vector<8x128xf32>, vector<8x128xf32>, vector<8x128xf32>, vector<8x128xf32>, vector<8x128xf32>, vector<8x128xf32>, vector<8x128xf32>, vector<8x128xf32>, vector<8x128xf32>, vector<8x128xf32>, vector<8x128xf32> -> vector<96x128xf32>
    %c0_41 = arith.constant 0 : index
    %c0_42 = arith.constant 0 : index
    %73 = vector.load %arg3[%c0_41, %c0_42] : memref<1x128xf32, #tpu.memory_space<vmem>>, vector<1x128xf32>
    %74 = vector.broadcast %73 : vector<1x128xf32> to vector<96x128xf32>
    %75 = arith.addf %72, %74 : vector<96x128xf32>
    %cst_43 = arith.constant 0.000000e+00 : f32
    %76 = vector.broadcast %cst_43 : f32 to vector<96x128xf32>
    %77 = arith.maximumf %75, %76 : vector<96x128xf32>
    %78 = arith.truncf %77 : vector<96x128xf32> to vector<96x128xbf16>
    %79 = vector.extract_strided_slice %78 {offsets = [0, 0], sizes = [64, 128], strides = [1, 1]} : vector<96x128xbf16> to vector<64x128xbf16>
    %c0_44 = arith.constant 0 : index
    %c0_45 = arith.constant 0 : index
    %c0_46 = arith.constant 0 : index
    %80 = vector.load %arg4[%c0_44, %c0_45, %c0_46] : memref<5x128x256xbf16, #tpu.memory_space<vmem>>, vector<1x128x256xbf16>
    %81 = vector.shape_cast %80 : vector<1x128x256xbf16> to vector<128x256xbf16>
    %cst_47 = arith.constant dense<0.000000e+00> : vector<64x256xf32>
    %82 = tpu.matmul %79, %81, %cst_47 {dimension_numbers = #tpu.dot_dimension_numbers<[1], [0], [0], [1], [0, 0, 1, 1], [], []>} : vector<64x128xbf16>, vector<128x256xbf16>, vector<64x256xf32> -> vector<64x256xf32>
    %c0_48 = arith.constant 0 : index
    %c0_49 = arith.constant 0 : index
    %83 = vector.load %arg12[%c0_48, %c0_49] : memref<64x256xf32, #tpu.memory_space<vmem>>, vector<64x256xf32>
    tpu.vector_store %arg12[%c0_48, %c0_49], %82 {strides = array<i32>} : memref<64x256xf32, #tpu.memory_space<vmem>>, vector<64x256xf32>,
    %84 = vector.extract_strided_slice %78 {offsets = [8, 0], sizes = [64, 128], strides = [1, 1]} : vector<96x128xbf16> to vector<64x128xbf16>
    %c1_50 = arith.constant 1 : index
    %c0_51 = arith.constant 0 : index
    %c0_52 = arith.constant 0 : index
    %85 = vector.load %arg4[%c1_50, %c0_51, %c0_52] : memref<5x128x256xbf16, #tpu.memory_space<vmem>>, vector<1x128x256xbf16>
    %86 = vector.shape_cast %85 : vector<1x128x256xbf16> to vector<128x256xbf16>
    %cst_53 = arith.constant dense<0.000000e+00> : vector<64x256xf32>
    %87 = tpu.matmul %84, %86, %cst_53 {dimension_numbers = #tpu.dot_dimension_numbers<[1], [0], [0], [1], [0, 0, 1, 1], [], []>} : vector<64x128xbf16>, vector<128x256xbf16>, vector<64x256xf32> -> vector<64x256xf32>
    %c0_54 = arith.constant 0 : index
    %c0_55 = arith.constant 0 : index
    %88 = vector.load %arg12[%c0_54, %c0_55] : memref<64x256xf32, #tpu.memory_space<vmem>>, vector<64x256xf32>
    %89 = arith.addf %88, %87 : vector<64x256xf32>
    %c0_56 = arith.constant 0 : index
    %c0_57 = arith.constant 0 : index
    %90 = vector.load %arg12[%c0_56, %c0_57] : memref<64x256xf32, #tpu.memory_space<vmem>>, vector<64x256xf32>
    tpu.vector_store %arg12[%c0_56, %c0_57], %89 {strides = array<i32>} : memref<64x256xf32, #tpu.memory_space<vmem>>, vector<64x256xf32>,
    %91 = vector.extract_strided_slice %78 {offsets = [16, 0], sizes = [64, 128], strides = [1, 1]} : vector<96x128xbf16> to vector<64x128xbf16>
    %c2_58 = arith.constant 2 : index
    %c0_59 = arith.constant 0 : index
    %c0_60 = arith.constant 0 : index
    %92 = vector.load %arg4[%c2_58, %c0_59, %c0_60] : memref<5x128x256xbf16, #tpu.memory_space<vmem>>, vector<1x128x256xbf16>
    %93 = vector.shape_cast %92 : vector<1x128x256xbf16> to vector<128x256xbf16>
    %cst_61 = arith.constant dense<0.000000e+00> : vector<64x256xf32>
    %94 = tpu.matmul %91, %93, %cst_61 {dimension_numbers = #tpu.dot_dimension_numbers<[1], [0], [0], [1], [0, 0, 1, 1], [], []>} : vector<64x128xbf16>, vector<128x256xbf16>, vector<64x256xf32> -> vector<64x256xf32>
    %c0_62 = arith.constant 0 : index
    %c0_63 = arith.constant 0 : index
    %95 = vector.load %arg12[%c0_62, %c0_63] : memref<64x256xf32, #tpu.memory_space<vmem>>, vector<64x256xf32>
    %96 = arith.addf %95, %94 : vector<64x256xf32>
    %c0_64 = arith.constant 0 : index
    %c0_65 = arith.constant 0 : index
    %97 = vector.load %arg12[%c0_64, %c0_65] : memref<64x256xf32, #tpu.memory_space<vmem>>, vector<64x256xf32>
    tpu.vector_store %arg12[%c0_64, %c0_65], %96 {strides = array<i32>} : memref<64x256xf32, #tpu.memory_space<vmem>>, vector<64x256xf32>,
    %98 = vector.extract_strided_slice %78 {offsets = [24, 0], sizes = [64, 128], strides = [1, 1]} : vector<96x128xbf16> to vector<64x128xbf16>
    %c3_66 = arith.constant 3 : index
    %c0_67 = arith.constant 0 : index
    %c0_68 = arith.constant 0 : index
    %99 = vector.load %arg4[%c3_66, %c0_67, %c0_68] : memref<5x128x256xbf16, #tpu.memory_space<vmem>>, vector<1x128x256xbf16>
    %100 = vector.shape_cast %99 : vector<1x128x256xbf16> to vector<128x256xbf16>
    %cst_69 = arith.constant dense<0.000000e+00> : vector<64x256xf32>
    %101 = tpu.matmul %98, %100, %cst_69 {dimension_numbers = #tpu.dot_dimension_numbers<[1], [0], [0], [1], [0, 0, 1, 1], [], []>} : vector<64x128xbf16>, vector<128x256xbf16>, vector<64x256xf32> -> vector<64x256xf32>
    %c0_70 = arith.constant 0 : index
    %c0_71 = arith.constant 0 : index
    %102 = vector.load %arg12[%c0_70, %c0_71] : memref<64x256xf32, #tpu.memory_space<vmem>>, vector<64x256xf32>
    %103 = arith.addf %102, %101 : vector<64x256xf32>
    %c0_72 = arith.constant 0 : index
    %c0_73 = arith.constant 0 : index
    %104 = vector.load %arg12[%c0_72, %c0_73] : memref<64x256xf32, #tpu.memory_space<vmem>>, vector<64x256xf32>
    tpu.vector_store %arg12[%c0_72, %c0_73], %103 {strides = array<i32>} : memref<64x256xf32, #tpu.memory_space<vmem>>, vector<64x256xf32>,
    %105 = vector.extract_strided_slice %78 {offsets = [32, 0], sizes = [64, 128], strides = [1, 1]} : vector<96x128xbf16> to vector<64x128xbf16>
    %c4_74 = arith.constant 4 : index
    %c0_75 = arith.constant 0 : index
    %c0_76 = arith.constant 0 : index
    %106 = vector.load %arg4[%c4_74, %c0_75, %c0_76] : memref<5x128x256xbf16, #tpu.memory_space<vmem>>, vector<1x128x256xbf16>
    %107 = vector.shape_cast %106 : vector<1x128x256xbf16> to vector<128x256xbf16>
    %cst_77 = arith.constant dense<0.000000e+00> : vector<64x256xf32>
    %108 = tpu.matmul %105, %107, %cst_77 {dimension_numbers = #tpu.dot_dimension_numbers<[1], [0], [0], [1], [0, 0, 1, 1], [], []>} : vector<64x128xbf16>, vector<128x256xbf16>, vector<64x256xf32> -> vector<64x256xf32>
    %c0_78 = arith.constant 0 : index
    %c0_79 = arith.constant 0 : index
    %109 = vector.load %arg12[%c0_78, %c0_79] : memref<64x256xf32, #tpu.memory_space<vmem>>, vector<64x256xf32>
    %110 = arith.addf %109, %108 : vector<64x256xf32>
    %c0_80 = arith.constant 0 : index
    %c0_81 = arith.constant 0 : index
    %111 = vector.load %arg12[%c0_80, %c0_81] : memref<64x256xf32, #tpu.memory_space<vmem>>, vector<64x256xf32>
    tpu.vector_store %arg12[%c0_80, %c0_81], %110 {strides = array<i32>} : memref<64x256xf32, #tpu.memory_space<vmem>>, vector<64x256xf32>,
    %c0_82 = arith.constant 0 : index
    %c0_83 = arith.constant 0 : index
    %112 = vector.load %arg12[%c0_82, %c0_83] : memref<64x256xf32, #tpu.memory_space<vmem>>, vector<64x128xf32>
    %c0_84 = arith.constant 0 : index
    %c128_85 = arith.constant 128 : index
    %113 = vector.load %arg12[%c0_84, %c128_85] : memref<64x256xf32, #tpu.memory_space<vmem>>, vector<64x128xf32>
    %114 = arith.maximumf %112, %113 : vector<64x128xf32>
    %115 = vector.extract_strided_slice %114 {offsets = [0, 0], sizes = [8, 128], strides = [1, 1]} : vector<64x128xf32> to vector<8x128xf32>
    %116 = vector.extract_strided_slice %114 {offsets = [8, 0], sizes = [8, 128], strides = [1, 1]} : vector<64x128xf32> to vector<8x128xf32>
    %117 = arith.maximumf %115, %116 : vector<8x128xf32>
    %c0_86 = arith.constant 0 : index
    %c0_87 = arith.constant 0 : index
    %118 = vector.load %arg5[%c0_86, %c0_87] : memref<1x128xf32, #tpu.memory_space<vmem>>, vector<1x128xf32>
    %119 = vector.broadcast %118 : vector<1x128xf32> to vector<8x128xf32>
    %120 = arith.addf %117, %119 : vector<8x128xf32>
    %cst_88 = arith.constant 0.000000e+00 : f32
    %121 = vector.broadcast %cst_88 : f32 to vector<8x128xf32>
    %122 = arith.maximumf %120, %121 : vector<8x128xf32>
    %123 = arith.truncf %122 : vector<8x128xf32> to vector<8x128xbf16>
    %124 = vector.extract_strided_slice %114 {offsets = [16, 0], sizes = [8, 128], strides = [1, 1]} : vector<64x128xf32> to vector<8x128xf32>
    %125 = vector.extract_strided_slice %114 {offsets = [24, 0], sizes = [8, 128], strides = [1, 1]} : vector<64x128xf32> to vector<8x128xf32>
    %126 = arith.maximumf %124, %125 : vector<8x128xf32>
    %c0_89 = arith.constant 0 : index
    %c0_90 = arith.constant 0 : index
    %127 = vector.load %arg5[%c0_89, %c0_90] : memref<1x128xf32, #tpu.memory_space<vmem>>, vector<1x128xf32>
    %128 = vector.broadcast %127 : vector<1x128xf32> to vector<8x128xf32>
    %129 = arith.addf %126, %128 : vector<8x128xf32>
    %cst_91 = arith.constant 0.000000e+00 : f32
    %130 = vector.broadcast %cst_91 : f32 to vector<8x128xf32>
    %131 = arith.maximumf %129, %130 : vector<8x128xf32>
    %132 = arith.truncf %131 : vector<8x128xf32> to vector<8x128xbf16>
    %133 = vector.extract_strided_slice %114 {offsets = [32, 0], sizes = [8, 128], strides = [1, 1]} : vector<64x128xf32> to vector<8x128xf32>
    %134 = vector.extract_strided_slice %114 {offsets = [40, 0], sizes = [8, 128], strides = [1, 1]} : vector<64x128xf32> to vector<8x128xf32>
    %135 = arith.maximumf %133, %134 : vector<8x128xf32>
    %c0_92 = arith.constant 0 : index
    %c0_93 = arith.constant 0 : index
    %136 = vector.load %arg5[%c0_92, %c0_93] : memref<1x128xf32, #tpu.memory_space<vmem>>, vector<1x128xf32>
    %137 = vector.broadcast %136 : vector<1x128xf32> to vector<8x128xf32>
    %138 = arith.addf %135, %137 : vector<8x128xf32>
    %cst_94 = arith.constant 0.000000e+00 : f32
    %139 = vector.broadcast %cst_94 : f32 to vector<8x128xf32>
    %140 = arith.maximumf %138, %139 : vector<8x128xf32>
    %141 = arith.truncf %140 : vector<8x128xf32> to vector<8x128xbf16>
    %142 = vector.extract_strided_slice %114 {offsets = [48, 0], sizes = [8, 128], strides = [1, 1]} : vector<64x128xf32> to vector<8x128xf32>
    %143 = vector.extract_strided_slice %114 {offsets = [56, 0], sizes = [8, 128], strides = [1, 1]} : vector<64x128xf32> to vector<8x128xf32>
    %144 = arith.maximumf %142, %143 : vector<8x128xf32>
    %c0_95 = arith.constant 0 : index
    %c0_96 = arith.constant 0 : index
    %145 = vector.load %arg5[%c0_95, %c0_96] : memref<1x128xf32, #tpu.memory_space<vmem>>, vector<1x128xf32>
    %146 = vector.broadcast %145 : vector<1x128xf32> to vector<8x128xf32>
    %147 = arith.addf %144, %146 : vector<8x128xf32>
    %cst_97 = arith.constant 0.000000e+00 : f32
    %148 = vector.broadcast %cst_97 : f32 to vector<8x128xf32>
    %149 = arith.maximumf %147, %148 : vector<8x128xf32>
    %150 = arith.truncf %149 : vector<8x128xf32> to vector<8x128xbf16>
    %151 = tpu.concatenate %123, %132, %141, %150 in 1 : vector<8x128xbf16>, vector<8x128xbf16>, vector<8x128xbf16>, vector<8x128xbf16> -> vector<8x512xbf16>
    %c0_98 = arith.constant 0 : index
    %c0_99 = arith.constant 0 : index
    %152 = vector.load %arg6[%c0_98, %c0_99] : memref<512x50xbf16, #tpu.memory_space<vmem>>, vector<512x50xbf16>
    %cst_100 = arith.constant dense<0.000000e+00> : vector<8x50xf32>
    %153 = tpu.matmul %151, %152, %cst_100 {dimension_numbers = #tpu.dot_dimension_numbers<[1], [0], [0], [1], [0, 0, 1, 1], [], []>} : vector<8x512xbf16>, vector<512x50xbf16>, vector<8x50xf32> -> vector<8x50xf32>
    %c0_101 = arith.constant 0 : index
    %c0_102 = arith.constant 0 : index
    %154 = vector.load %arg7[%c0_101, %c0_102] : memref<1x50xf32, #tpu.memory_space<vmem>>, vector<1x50xf32>
    %155 = vector.broadcast %154 : vector<1x50xf32> to vector<8x50xf32>
    %156 = arith.addf %153, %155 : vector<8x50xf32>
    %cst_103 = arith.constant 0.000000e+00 : f32
    %157 = vector.broadcast %cst_103 : f32 to vector<8x50xf32>
    %158 = arith.maximumf %156, %157 : vector<8x50xf32>
    %159 = arith.truncf %158 : vector<8x50xf32> to vector<8x50xbf16>
    %c0_104 = arith.constant 0 : index
    %c0_105 = arith.constant 0 : index
    %160 = vector.load %arg8[%c0_104, %c0_105] : memref<50x10xbf16, #tpu.memory_space<vmem>>, vector<50x10xbf16>
    %cst_106 = arith.constant dense<0.000000e+00> : vector<8x10xf32>
    %161 = tpu.matmul %159, %160, %cst_106 {dimension_numbers = #tpu.dot_dimension_numbers<[1], [0], [0], [1], [0, 0, 1, 1], [], []>} : vector<8x50xbf16>, vector<50x10xbf16>, vector<8x10xf32> -> vector<8x10xf32>
    %c0_107 = arith.constant 0 : index
    %c0_108 = arith.constant 0 : index
    %162 = vector.load %arg9[%c0_107, %c0_108] : memref<1x10xf32, #tpu.memory_space<vmem>>, vector<1x10xf32>
    %163 = vector.broadcast %162 : vector<1x10xf32> to vector<8x10xf32>
    %164 = arith.addf %161, %163 : vector<8x10xf32>
    %cst_109 = arith.constant dense<0xFF800000> : vector<8xf32>
    %165 = vector.multi_reduction <maximumf>, %164, %cst_109 [1] : vector<8x10xf32> to vector<8xf32>
    %166 = vector.shape_cast %165 : vector<8xf32> to vector<8x1xf32>
    %167 = vector.broadcast %166 : vector<8x1xf32> to vector<8x10xf32>
    %168 = arith.subf %164, %167 : vector<8x10xf32>
    %169 = math.exp %168 : vector<8x10xf32>
    %cst_110 = arith.constant dense<0.000000e+00> : vector<8xf32>
    %170 = vector.multi_reduction <add>, %169, %cst_110 [1] : vector<8x10xf32> to vector<8xf32>
    %171 = vector.shape_cast %170 : vector<8xf32> to vector<8x1xf32>
    %172 = vector.broadcast %171 : vector<8x1xf32> to vector<8x10xf32>
    %173 = arith.divf %169, %172 : vector<8x10xf32>
    %c0_111 = arith.constant 0 : index
    %c0_112 = arith.constant 0 : index
    %174 = vector.load %arg10[%c0_111, %c0_112] : memref<8x10xf32, #tpu.memory_space<vmem>>, vector<8x10xf32>
    tpu.vector_store %arg10[%c0_111, %c0_112], %173 {strides = array<i32>} : memref<8x10xf32, #tpu.memory_space<vmem>>, vector<8x10xf32>,
    return
  }
  func.func @transform_0(%arg0: i32) -> (i32, i32) {
    %c0_i32 = arith.constant 0 : i32
    %c0_i32_0 = arith.constant 0 : i32
    return %arg0, %c0_i32 : i32, i32
  }
  func.func @transform_1(%arg0: i32) -> (i32, i32, i32) {
    %c0_i32 = arith.constant 0 : i32
    %c0_i32_0 = arith.constant 0 : i32
    %c0_i32_1 = arith.constant 0 : i32
    %c0_i32_2 = arith.constant 0 : i32
    return %c0_i32, %c0_i32_0, %c0_i32_1 : i32, i32, i32
  }
  func.func @transform_2(%arg0: i32) -> (i32, i32) {
    %c0_i32 = arith.constant 0 : i32
    %c0_i32_0 = arith.constant 0 : i32
    %c0_i32_1 = arith.constant 0 : i32
    return %c0_i32, %c0_i32_0 : i32, i32
  }
  func.func @transform_3(%arg0: i32) -> (i32, i32, i32) {
    %c0_i32 = arith.constant 0 : i32
    %c0_i32_0 = arith.constant 0 : i32
    %c0_i32_1 = arith.constant 0 : i32
    %c0_i32_2 = arith.constant 0 : i32
    return %c0_i32, %c0_i32_0, %c0_i32_1 : i32, i32, i32
  }
  func.func @transform_4(%arg0: i32) -> (i32, i32) {
    %c0_i32 = arith.constant 0 : i32
    %c0_i32_0 = arith.constant 0 : i32
    %c0_i32_1 = arith.constant 0 : i32
    return %c0_i32, %c0_i32_0 : i32, i32
  }
  func.func @transform_5(%arg0: i32) -> (i32, i32) {
    %c0_i32 = arith.constant 0 : i32
    %c0_i32_0 = arith.constant 0 : i32
    %c0_i32_1 = arith.constant 0 : i32
    return %c0_i32, %c0_i32_0 : i32, i32
  }
  func.func @transform_6(%arg0: i32) -> (i32, i32) {
    %c0_i32 = arith.constant 0 : i32
    %c0_i32_0 = arith.constant 0 : i32
    %c0_i32_1 = arith.constant 0 : i32
    return %c0_i32, %c0_i32_0 : i32, i32
  }
  func.func @transform_7(%arg0: i32) -> (i32, i32) {
    %c0_i32 = arith.constant 0 : i32
    %c0_i32_0 = arith.constant 0 : i32
    %c0_i32_1 = arith.constant 0 : i32
    return %c0_i32, %c0_i32_0 : i32, i32
  }
  func.func @transform_8(%arg0: i32) -> (i32, i32) {
    %c0_i32 = arith.constant 0 : i32
    %c0_i32_0 = arith.constant 0 : i32
    %c0_i32_1 = arith.constant 0 : i32
    return %c0_i32, %c0_i32_0 : i32, i32
  }
  func.func @transform_9(%arg0: i32) -> (i32, i32) {
    %c0_i32 = arith.constant 0 : i32
    %c0_i32_0 = arith.constant 0 : i32
    return %arg0, %c0_i32 : i32, i32
  }
}

</mosaic_0001>

<llo_original>
// kernel: cnn_forward.1
$region0: #{cnn_forward.1}
  #allocation0 [shape = 'u32[]', space=smem, size = 0x4, offset = 0x4, fixed_abs, tag = 'smem constant byte address 0x4 - core index']
  #allocation1 [shape = 'u32[72,128]{1,0:T(1,128)}', space=vmem, size = 0x9000, scoped, tag = 'internal scratch']
  #allocation2 [shape = 'f32[192,256]{1,0:T(8,128)}', space=vmem, size = 0x30000, scoped, tag = 'scratch operand']
  #allocation3 [shape = 'f32[64,256]{1,0:T(8,128)}', space=vmem, size = 0x10000, scoped, tag = 'scratch operand']
  %s0 = inlined_call_operand.vmem [shape: bf16[224,28], index: 0, kind: input, shape index: {}]
  %s1 = inlined_call_operand.vmem [shape: bf16[5,28,256], index: 1, kind: input, shape index: {}]
  %s2 = inlined_call_operand.vmem [shape: f32[1,128], index: 2, kind: input, shape index: {}]
  %s3 = inlined_call_operand.hbm [shape: bf16[5,128,256], index: 3, kind: input, shape index: {}]
  %s4 = inlined_call_operand.vmem [shape: f32[1,128], index: 4, kind: input, shape index: {}]
  %s5 = inlined_call_operand.vmem [shape: bf16[512,50], index: 5, kind: input, shape index: {}]
  %s6 = inlined_call_operand.vmem [shape: f32[1,50], index: 6, kind: input, shape index: {}]
  %s7 = inlined_call_operand.vmem [shape: bf16[50,10], index: 7, kind: input, shape index: {}]
  %s8 = inlined_call_operand.vmem [shape: f32[1,10], index: 8, kind: input, shape index: {}]
  %s9 = inlined_call_operand.vmem [shape: f32[8,10], index: 9, kind: output, shape index: {}]
  %s10 = sld [smem:[#allocation0]]
  $region50: #{cnn_forward.1} parent=0
    _
  %s12 = ssub.s32 1, %s10
  %s13 = scalar_select 0, %s12, %s10
  $region1: #{cnn_forward.1} parent=0
    #allocation4 [shape = 'u8[327680]{0}', space=vmem, size = 0x50000, scoped, tag = 'input window, operand 3, single buffered']
    #allocation5 [shape = 's32[1]{0}', space=sflag, size = 0x4, scoped, tag = 'scoped memory for cnn_forward.1']
    %14 = vsyncpa [#allocation5], 0
    // Predicated region
    $region2: #{cnn_forward.1} parent=1 // pred_check
      _
    $region3: #{cnn_forward.1} parent=1 // pred_check_branch
      %16 = sbr.rel (0) target = $region5
    $region4: #{cnn_forward.1} parent=1 // pred_region
      _
    $region5: #{cnn_forward.1} parent=1 // pred_fallthru
      _
    // Predicated region
    $region6: #{cnn_forward.1} parent=1 // pred_check
      _
    $region7: #{cnn_forward.1} parent=1 // pred_check_branch
      %18 = sbr.rel (0) target = $region9
    $region8: #{cnn_forward.1} parent=1 // pred_region
      _
    $region9: #{cnn_forward.1} parent=1 // pred_fallthru
      _
    // Predicated region
    $region10: #{cnn_forward.1} parent=1 // pred_check
      _
    $region11: #{cnn_forward.1} parent=1 // pred_check_branch
      %20 = sbr.rel (0) target = $region13
    $region12: #{cnn_forward.1} parent=1 // pred_region
      _
    $region13: #{cnn_forward.1} parent=1 // pred_fallthru
      _
    // Predicated region
    $region14: #{cnn_forward.1} parent=1 // pred_check
      _
    $region15: #{cnn_forward.1} parent=1 // pred_check_branch
      %22 = sbr.rel (0) target = $region17
    $region16: #{cnn_forward.1} parent=1 // pred_region
      %24 = vsyncadd [#allocation5], 0
      %s25 = sshll.u32 %s3, 4
      %s26 = int_to_ptr.hbm [resolvable:$true] %s25
      %s27 = sshll.u32 [#allocation4], 4
      %s28 = int_to_ptr.vmem [resolvable:$true] %s27
      %33 = dma.hbm_to_vmem [thread:$0]  %s26, 10240, %s28, [#allocation5], 128, 128, 8
    $region17: #{cnn_forward.1} parent=1 // pred_fallthru
      _
    // Predicated region
    $region18: #{cnn_forward.1} parent=1 // pred_check
      _
    $region19: #{cnn_forward.1} parent=1 // pred_check_branch
      %35 = sbr.rel (0) target = $region21
    $region20: #{cnn_forward.1} parent=1 // pred_region
      _
    $region21: #{cnn_forward.1} parent=1 // pred_fallthru
      _
    // Predicated region
    $region22: #{cnn_forward.1} parent=1 // pred_check
      _
    $region23: #{cnn_forward.1} parent=1 // pred_check_branch
      %37 = sbr.rel (0) target = $region25
    $region24: #{cnn_forward.1} parent=1 // pred_region
      _
    $region25: #{cnn_forward.1} parent=1 // pred_fallthru
      _
    // Predicated region
    $region26: #{cnn_forward.1} parent=1 // pred_check
      _
    $region27: #{cnn_forward.1} parent=1 // pred_check_branch
      %39 = sbr.rel (0) target = $region29
    $region28: #{cnn_forward.1} parent=1 // pred_region
      _
    $region29: #{cnn_forward.1} parent=1 // pred_fallthru
      _
    // Predicated region
    $region30: #{cnn_forward.1} parent=1 // pred_check
      _
    $region31: #{cnn_forward.1} parent=1 // pred_check_branch
      %41 = sbr.rel (0) target = $region33
    $region32: #{cnn_forward.1} parent=1 // pred_region
      _
    $region33: #{cnn_forward.1} parent=1 // pred_fallthru
      _
    // Predicated region
    $region34: #{cnn_forward.1} parent=1 // pred_check
      _
    $region35: #{cnn_forward.1} parent=1 // pred_check_branch
      %43 = sbr.rel (0) target = $region37
    $region36: #{cnn_forward.1} parent=1 // pred_region
      _
    $region37: #{cnn_forward.1} parent=1 // pred_fallthru
      _
    // Predicated region
    $region38: #{cnn_forward.1} parent=1 // pred_check
      _
    $region39: #{cnn_forward.1} parent=1 // pred_check_branch
      %45 = sbr.rel (0) target = $region41
    $region40: #{cnn_forward.1} parent=1 // pred_region
      %47 = dma.done [#allocation5], 10240
    $region41: #{cnn_forward.1} parent=1 // pred_fallthru
      _
    %v49 = vld [vmem:[%s0] sm:$0xf]
    %v50 = vld [vmem:[%s0 + $0x4] sm:$0xf]
    %v51 = vld [vmem:[%s0 + $0x8] sm:$0xf]
    %v52 = vld [vmem:[%s0 + $0xc] sm:$0xf]
    %v53 = vld [vmem:[%s0 + $0x10] sm:$0xf]
    %v54 = vld [vmem:[%s0 + $0x14] sm:$0xf]
    %v55 = vld [vmem:[%s0 + $0x18] sm:$0xf]
    %v56 = vld [vmem:[%s0 + $0x1c] sm:$0xf]
    %v57 = vld [vmem:[%s0 + $0x20] sm:$0xf]
    %v58 = vld [vmem:[%s0 + $0x24] sm:$0xf]
    %v59 = vld [vmem:[%s0 + $0x28] sm:$0xf]
    %v60 = vld [vmem:[%s0 + $0x2c] sm:$0xf]
    %v61 = vld [vmem:[%s0 + $0x30] sm:$0xf]
    %v62 = vld [vmem:[%s0 + $0x34] sm:$0xf]
    %v63 = vld [vmem:[%s0 + $0x38] sm:$0xf]
    %v64 = vld [vmem:[%s0 + $0x3c] sm:$0xf]
    %v65 = vld [vmem:[%s0 + $0x40] sm:$0xf]
    %v66 = vld [vmem:[%s0 + $0x44] sm:$0xf]
    %v67 = vld [vmem:[%s0 + $0x48] sm:$0xf]
    %v68 = vld [vmem:[%s0 + $0x4c] sm:$0xf]
    %v69 = vld [vmem:[%s0 + $0x50] sm:$0xf]
    %v70 = vld [vmem:[%s0 + $0x54] sm:$0xf]
    %v71 = vld [vmem:[%s0 + $0x58] sm:$0xf]
    %v72 = vld [vmem:[%s0 + $0x5c] sm:$0xf]
    %v73 = vld [vmem:[%s1] sm:$0xff]
    %v74 = vld [vmem:[%s1 + $0x8] sm:$0xff]
    %v75 = vld [vmem:[%s1 + $0x10] sm:$0xff]
    %v76 = vld [vmem:[%s1 + $0x18] sm:$0x33]
    %v101 = vunpack.c.l.b16 %v49
    %v102 = vunpack.c.l.b16 %v50
    %v103 = vunpack.c.l.b16 %v51
    %v104 = vunpack.c.l.b16 %v52
    %v105 = vunpack.c.l.b16 %v53
    %v106 = vunpack.c.l.b16 %v54
    %v107 = vunpack.c.l.b16 %v55
    %v108 = vunpack.c.l.b16 %v56
    %v109 = vunpack.c.l.b16 %v57
    %v110 = vunpack.c.l.b16 %v58
    %v111 = vunpack.c.l.b16 %v59
    %v112 = vunpack.c.l.b16 %v60
    %v113 = vunpack.c.l.b16 %v61
    %v114 = vunpack.c.l.b16 %v62
    %v115 = vunpack.c.l.b16 %v63
    %v116 = vunpack.c.l.b16 %v64
    %v117 = vunpack.c.l.b16 %v65
    %v118 = vunpack.c.l.b16 %v66
    %v119 = vunpack.c.l.b16 %v67
    %v120 = vunpack.c.l.b16 %v68
    %v121 = vunpack.c.l.b16 %v69
    %v122 = vunpack.c.l.b16 %v70
    %v123 = vunpack.c.l.b16 %v71
    %v124 = vunpack.c.l.b16 %v72
    %v125 = vpack.c.b16 %v102, %v101
    %v126 = vpack.c.b16 %v104, %v103
    %v127 = vpack.c.b16 %v106, %v105
    %v128 = vpack.c.b16 %v108, %v107
    %v129 = vpack.c.b16 %v110, %v109
    %v130 = vpack.c.b16 %v112, %v111
    %v131 = vpack.c.b16 %v114, %v113
    %v132 = vpack.c.b16 %v116, %v115
    %v133 = vpack.c.b16 %v118, %v117
    %v134 = vpack.c.b16 %v120, %v119
    %v135 = vpack.c.b16 %v122, %v121
    %v136 = vpack.c.b16 %v124, %v123
    %v141 = vunpack.c.l.b16 %v73
    %v142 = vunpack.c.h.b16 %v73
    %v143 = vunpack.c.l.b16 %v74
    %v144 = vunpack.c.h.b16 %v74
    %v145 = vunpack.c.l.b16 %v75
    %v146 = vunpack.c.h.b16 %v75
    %v147 = vunpack.c.l.b16 %v76
    %v148 = vunpack.c.h.b16 %v76
    %v149 = vpack.c.b16 %v143, %v141
    %v150 = vpack.c.b16 %v144, %v142
    %v151 = vpack.c.b16 %v147, %v145
    %v152 = vpack.c.b16 %v148, %v146
    %vm155 = vcmask 228352
    %v157 = vsel %vm155, %v125, 0
    %v160 = vsel %vm155, %v126, 0
    %v163 = vsel %vm155, %v127, 0
    %v166 = vsel %vm155, %v128, 0
    %v169 = vsel %vm155, %v129, 0
    %v172 = vsel %vm155, %v130, 0
    %v175 = vsel %vm155, %v131, 0
    %v178 = vsel %vm155, %v132, 0
    %v181 = vsel %vm155, %v133, 0
    %v184 = vsel %vm155, %v134, 0
    %v187 = vsel %vm155, %v135, 0
    %v190 = vsel %vm155, %v136, 0
    %vm192 = vcmask 1045504
    %v194 = vsel %vm192, %v151, 0
    %v197 = vsel %vm192, %v152, 0
    %199 = vmatpush.bf16.msra.mxu0 0
    %200 = vmatpush.bf16.msra.mxu0 0
    %201 = vmatpush.bf16.msra.mxu0 0
    %202 = vmatpush.bf16.msra.mxu0 0
    %203 = vmatpush.bf16.msra.mxu0 0
    %204 = vmatpush.bf16.msra.mxu0 0
    %205 = vmatpush.bf16.msra.mxu0 %v194
    %206 = vmatpush.bf16.msra.mxu0 %v149
    %207 = vmatmul.bf16.gmra.mxu0 %v157
    %v208 = vpop.f32.mrf.mxu0
    %v209 = vadd.f32 0.0, %v208
    %v210 = vpop.f32.mrf.mxu0
    %v211 = vadd.f32 0.0, %v210
    %212 = vmatmul.bf16.gmra.mxu0 %v160
    %v213 = vpop.f32.mrf.mxu0
    %v214 = vadd.f32 0.0, %v213
    %v215 = vpop.f32.mrf.mxu0
    %v216 = vadd.f32 0.0, %v215
    %217 = vmatmul.bf16.gmra.mxu0 %v163
    %v218 = vpop.f32.mrf.mxu0
    %v219 = vadd.f32 0.0, %v218
    %v220 = vpop.f32.mrf.mxu0
    %v221 = vadd.f32 0.0, %v220
    %222 = vmatmul.bf16.gmra.mxu0 %v166
    %v223 = vpop.f32.mrf.mxu0
    %v224 = vadd.f32 0.0, %v223
    %v225 = vpop.f32.mrf.mxu0
    %v226 = vadd.f32 0.0, %v225
    %227 = vmatmul.bf16.gmra.mxu0 %v169
    %v228 = vpop.f32.mrf.mxu0
    %v229 = vadd.f32 0.0, %v228
    %v230 = vpop.f32.mrf.mxu0
    %v231 = vadd.f32 0.0, %v230
    %232 = vmatmul.bf16.gmra.mxu0 %v172
    %v233 = vpop.f32.mrf.mxu0
    %v234 = vadd.f32 0.0, %v233
    %v235 = vpop.f32.mrf.mxu0
    %v236 = vadd.f32 0.0, %v235
    %237 = vmatmul.bf16.gmra.mxu0 %v175
    %v238 = vpop.f32.mrf.mxu0
    %v239 = vadd.f32 0.0, %v238
    %v240 = vpop.f32.mrf.mxu0
    %v241 = vadd.f32 0.0, %v240
    %242 = vmatmul.bf16.gmra.mxu0 %v178
    %v243 = vpop.f32.mrf.mxu0
    %v244 = vadd.f32 0.0, %v243
    %v245 = vpop.f32.mrf.mxu0
    %v246 = vadd.f32 0.0, %v245
    %247 = vmatmul.bf16.gmra.mxu0 %v181
    %v248 = vpop.f32.mrf.mxu0
    %v249 = vadd.f32 0.0, %v248
    %v250 = vpop.f32.mrf.mxu0
    %v251 = vadd.f32 0.0, %v250
    %252 = vmatmul.bf16.gmra.mxu0 %v184
    %v253 = vpop.f32.mrf.mxu0
    %v254 = vadd.f32 0.0, %v253
    %v255 = vpop.f32.mrf.mxu0
    %v256 = vadd.f32 0.0, %v255
    %257 = vmatmul.bf16.gmra.mxu0 %v187
    %v258 = vpop.f32.mrf.mxu0
    %v259 = vadd.f32 0.0, %v258
    %v260 = vpop.f32.mrf.mxu0
    %v261 = vadd.f32 0.0, %v260
    %262 = vmatmul.bf16.gmra.mxu0 %v190
    %v263 = vpop.f32.mrf.mxu0
    %v264 = vadd.f32 0.0, %v263
    %v265 = vpop.f32.mrf.mxu0
    %v266 = vadd.f32 0.0, %v265
    %267 = vdwg.mxu0
    %268 = vmatpush.bf16.msra.mxu0 0
    %269 = vmatpush.bf16.msra.mxu0 0
    %270 = vmatpush.bf16.msra.mxu0 0
    %271 = vmatpush.bf16.msra.mxu0 0
    %272 = vmatpush.bf16.msra.mxu0 0
    %273 = vmatpush.bf16.msra.mxu0 0
    %274 = vmatpush.bf16.msra.mxu0 %v197
    %275 = vmatpush.bf16.msra.mxu0 %v150
    %276 = vmatmul.bf16.gmra.mxu0 %v157
    %v277 = vpop.f32.mrf.mxu0
    %v278 = vadd.f32 0.0, %v277
    %v279 = vpop.f32.mrf.mxu0
    %v280 = vadd.f32 0.0, %v279
    %281 = vmatmul.bf16.gmra.mxu0 %v160
    %v282 = vpop.f32.mrf.mxu0
    %v283 = vadd.f32 0.0, %v282
    %v284 = vpop.f32.mrf.mxu0
    %v285 = vadd.f32 0.0, %v284
    %286 = vmatmul.bf16.gmra.mxu0 %v163
    %v287 = vpop.f32.mrf.mxu0
    %v288 = vadd.f32 0.0, %v287
    %v289 = vpop.f32.mrf.mxu0
    %v290 = vadd.f32 0.0, %v289
    %291 = vmatmul.bf16.gmra.mxu0 %v166
    %v292 = vpop.f32.mrf.mxu0
    %v293 = vadd.f32 0.0, %v292
    %v294 = vpop.f32.mrf.mxu0
    %v295 = vadd.f32 0.0, %v294
    %296 = vmatmul.bf16.gmra.mxu0 %v169
    %v297 = vpop.f32.mrf.mxu0
    %v298 = vadd.f32 0.0, %v297
    %v299 = vpop.f32.mrf.mxu0
    %v300 = vadd.f32 0.0, %v299
    %301 = vmatmul.bf16.gmra.mxu0 %v172
    %v302 = vpop.f32.mrf.mxu0
    %v303 = vadd.f32 0.0, %v302
    %v304 = vpop.f32.mrf.mxu0
    %v305 = vadd.f32 0.0, %v304
    %306 = vmatmul.bf16.gmra.mxu0 %v175
    %v307 = vpop.f32.mrf.mxu0
    %v308 = vadd.f32 0.0, %v307
    %v309 = vpop.f32.mrf.mxu0
    %v310 = vadd.f32 0.0, %v309
    %311 = vmatmul.bf16.gmra.mxu0 %v178
    %v312 = vpop.f32.mrf.mxu0
    %v313 = vadd.f32 0.0, %v312
    %v314 = vpop.f32.mrf.mxu0
    %v315 = vadd.f32 0.0, %v314
    %316 = vmatmul.bf16.gmra.mxu0 %v181
    %v317 = vpop.f32.mrf.mxu0
    %v318 = vadd.f32 0.0, %v317
    %v319 = vpop.f32.mrf.mxu0
    %v320 = vadd.f32 0.0, %v319
    %321 = vmatmul.bf16.gmra.mxu0 %v184
    %v322 = vpop.f32.mrf.mxu0
    %v323 = vadd.f32 0.0, %v322
    %v324 = vpop.f32.mrf.mxu0
    %v325 = vadd.f32 0.0, %v324
    %326 = vmatmul.bf16.gmra.mxu0 %v187
    %v327 = vpop.f32.mrf.mxu0
    %v328 = vadd.f32 0.0, %v327
    %v329 = vpop.f32.mrf.mxu0
    %v330 = vadd.f32 0.0, %v329
    %331 = vmatmul.bf16.gmra.mxu0 %v190
    %v332 = vpop.f32.mrf.mxu0
    %v333 = vadd.f32 0.0, %v332
    %v334 = vpop.f32.mrf.mxu0
    %v335 = vadd.f32 0.0, %v334
    %336 = vdwg.mxu0
    %337 = vst [vmem:[#allocation2] sm:$0xff] %v209
    %338 = vst [vmem:[#allocation2 + $0x8] sm:$0xff] %v278
    %339 = vst [vmem:[#allocation2 + $0x10] sm:$0xff] %v211
    %340 = vst [vmem:[#allocation2 + $0x18] sm:$0xff] %v280
    %341 = vst [vmem:[#allocation2 + $0x20] sm:$0xff] %v214
    %342 = vst [vmem:[#allocation2 + $0x28] sm:$0xff] %v283
    %343 = vst [vmem:[#allocation2 + $0x30] sm:$0xff] %v216
    %344 = vst [vmem:[#allocation2 + $0x38] sm:$0xff] %v285
    %345 = vst [vmem:[#allocation2 + $0x40] sm:$0xff] %v219
    %346 = vst [vmem:[#allocation2 + $0x48] sm:$0xff] %v288
    %347 = vst [vmem:[#allocation2 + $0x50] sm:$0xff] %v221
    %348 = vst [vmem:[#allocation2 + $0x58] sm:$0xff] %v290
    %349 = vst [vmem:[#allocation2 + $0x60] sm:$0xff] %v224
    %350 = vst [vmem:[#allocation2 + $0x68] sm:$0xff] %v293
    %351 = vst [vmem:[#allocation2 + $0x70] sm:$0xff] %v226
    %352 = vst [vmem:[#allocation2 + $0x78] sm:$0xff] %v295
    %353 = vst [vmem:[#allocation2 + $0x80] sm:$0xff] %v229
    %354 = vst [vmem:[#allocation2 + $0x88] sm:$0xff] %v298
    %355 = vst [vmem:[#allocation2 + $0x90] sm:$0xff] %v231
    %356 = vst [vmem:[#allocation2 + $0x98] sm:$0xff] %v300
    %357 = vst [vmem:[#allocation2 + $0xa0] sm:$0xff] %v234
    %358 = vst [vmem:[#allocation2 + $0xa8] sm:$0xff] %v303
    %359 = vst [vmem:[#allocation2 + $0xb0] sm:$0xff] %v236
    %360 = vst [vmem:[#allocation2 + $0xb8] sm:$0xff] %v305
    %361 = vst [vmem:[#allocation2 + $0xc0] sm:$0xff] %v239
    %362 = vst [vmem:[#allocation2 + $0xc8] sm:$0xff] %v308
    %363 = vst [vmem:[#allocation2 + $0xd0] sm:$0xff] %v241
    %364 = vst [vmem:[#allocation2 + $0xd8] sm:$0xff] %v310
    %365 = vst [vmem:[#allocation2 + $0xe0] sm:$0xff] %v244
    %366 = vst [vmem:[#allocation2 + $0xe8] sm:$0xff] %v313
    %367 = vst [vmem:[#allocation2 + $0xf0] sm:$0xff] %v246
    %368 = vst [vmem:[#allocation2 + $0xf8] sm:$0xff] %v315
    %369 = vst [vmem:[#allocation2 + $0x100] sm:$0xff] %v249
    %370 = vst [vmem:[#allocation2 + $0x108] sm:$0xff] %v318
    %371 = vst [vmem:[#allocation2 + $0x110] sm:$0xff] %v251
    %372 = vst [vmem:[#allocation2 + $0x118] sm:$0xff] %v320
    %373 = vst [vmem:[#allocation2 + $0x120] sm:$0xff] %v254
    %374 = vst [vmem:[#allocation2 + $0x128] sm:$0xff] %v323
    %375 = vst [vmem:[#allocation2 + $0x130] sm:$0xff] %v256
    %376 = vst [vmem:[#allocation2 + $0x138] sm:$0xff] %v325
    %377 = vst [vmem:[#allocation2 + $0x140] sm:$0xff] %v259
    %378 = vst [vmem:[#allocation2 + $0x148] sm:$0xff] %v328
    %379 = vst [vmem:[#allocation2 + $0x150] sm:$0xff] %v261
    %380 = vst [vmem:[#allocation2 + $0x158] sm:$0xff] %v330
    %381 = vst [vmem:[#allocation2 + $0x160] sm:$0xff] %v264
    %382 = vst [vmem:[#allocation2 + $0x168] sm:$0xff] %v333
    %383 = vst [vmem:[#allocation2 + $0x170] sm:$0xff] %v266
    %384 = vst [vmem:[#allocation2 + $0x178] sm:$0xff] %v335
    %v385 = vld [vmem:[%s0 + $0x4] sm:$0xf]
    %v386 = vld [vmem:[%s0 + $0x8] sm:$0xf]
    %v387 = vld [vmem:[%s0 + $0xc] sm:$0xf]
    %v388 = vld [vmem:[%s0 + $0x10] sm:$0xf]
    %v389 = vld [vmem:[%s0 + $0x14] sm:$0xf]
    %v390 = vld [vmem:[%s0 + $0x18] sm:$0xf]
    %v391 = vld [vmem:[%s0 + $0x1c] sm:$0xf]
    %v392 = vld [vmem:[%s0 + $0x20] sm:$0xf]
    %v393 = vld [vmem:[%s0 + $0x24] sm:$0xf]
    %v394 = vld [vmem:[%s0 + $0x28] sm:$0xf]
    %v395 = vld [vmem:[%s0 + $0x2c] sm:$0xf]
    %v396 = vld [vmem:[%s0 + $0x30] sm:$0xf]
    %v397 = vld [vmem:[%s0 + $0x34] sm:$0xf]
    %v398 = vld [vmem:[%s0 + $0x38] sm:$0xf]
    %v399 = vld [vmem:[%s0 + $0x3c] sm:$0xf]
    %v400 = vld [vmem:[%s0 + $0x40] sm:$0xf]
    %v401 = vld [vmem:[%s0 + $0x44] sm:$0xf]
    %v402 = vld [vmem:[%s0 + $0x48] sm:$0xf]
    %v403 = vld [vmem:[%s0 + $0x4c] sm:$0xf]
    %v404 = vld [vmem:[%s0 + $0x50] sm:$0xf]
    %v405 = vld [vmem:[%s0 + $0x54] sm:$0xf]
    %v406 = vld [vmem:[%s0 + $0x58] sm:$0xf]
    %v407 = vld [vmem:[%s0 + $0x5c] sm:$0xf]
    %v408 = vld [vmem:[%s0 + $0x60] sm:$0xf]
    %s409 = scalar_lea.vmem %s1, 32
    %v410 = vld [vmem:[%s409] sm:$0xff]
    %v411 = vld [vmem:[%s409 + $0x8] sm:$0xff]
    %v412 = vld [vmem:[%s409 + $0x10] sm:$0xff]
    %v413 = vld [vmem:[%s409 + $0x18] sm:$0x33]
    %v438 = vunpack.c.l.b16 %v385
    %v439 = vunpack.c.l.b16 %v386
    %v440 = vunpack.c.l.b16 %v387
    %v441 = vunpack.c.l.b16 %v388
    %v442 = vunpack.c.l.b16 %v389
    %v443 = vunpack.c.l.b16 %v390
    %v444 = vunpack.c.l.b16 %v391
    %v445 = vunpack.c.l.b16 %v392
    %v446 = vunpack.c.l.b16 %v393
    %v447 = vunpack.c.l.b16 %v394
    %v448 = vunpack.c.l.b16 %v395
    %v449 = vunpack.c.l.b16 %v396
    %v450 = vunpack.c.l.b16 %v397
    %v451 = vunpack.c.l.b16 %v398
    %v452 = vunpack.c.l.b16 %v399
    %v453 = vunpack.c.l.b16 %v400
    %v454 = vunpack.c.l.b16 %v401
    %v455 = vunpack.c.l.b16 %v402
    %v456 = vunpack.c.l.b16 %v403
    %v457 = vunpack.c.l.b16 %v404
    %v458 = vunpack.c.l.b16 %v405
    %v459 = vunpack.c.l.b16 %v406
    %v460 = vunpack.c.l.b16 %v407
    %v461 = vunpack.c.l.b16 %v408
    %v462 = vpack.c.b16 %v439, %v438
    %v463 = vpack.c.b16 %v441, %v440
    %v464 = vpack.c.b16 %v443, %v442
    %v465 = vpack.c.b16 %v445, %v444
    %v466 = vpack.c.b16 %v447, %v446
    %v467 = vpack.c.b16 %v449, %v448
    %v468 = vpack.c.b16 %v451, %v450
    %v469 = vpack.c.b16 %v453, %v452
    %v470 = vpack.c.b16 %v455, %v454
    %v471 = vpack.c.b16 %v457, %v456
    %v472 = vpack.c.b16 %v459, %v458
    %v473 = vpack.c.b16 %v461, %v460
    %v478 = vunpack.c.l.b16 %v410
    %v479 = vunpack.c.h.b16 %v410
    %v480 = vunpack.c.l.b16 %v411
    %v481 = vunpack.c.h.b16 %v411
    %v482 = vunpack.c.l.b16 %v412
    %v483 = vunpack.c.h.b16 %v412
    %v484 = vunpack.c.l.b16 %v413
    %v485 = vunpack.c.h.b16 %v413
    %v486 = vpack.c.b16 %v480, %v478
    %v487 = vpack.c.b16 %v481, %v479
    %v488 = vpack.c.b16 %v484, %v482
    %v489 = vpack.c.b16 %v485, %v483
    %v493 = vsel %vm155, %v462, 0
    %v496 = vsel %vm155, %v463, 0
    %v499 = vsel %vm155, %v464, 0
    %v502 = vsel %vm155, %v465, 0
    %v505 = vsel %vm155, %v466, 0
    %v508 = vsel %vm155, %v467, 0
    %v511 = vsel %vm155, %v468, 0
    %v514 = vsel %vm155, %v469, 0
    %v517 = vsel %vm155, %v470, 0
    %v520 = vsel %vm155, %v471, 0
    %v523 = vsel %vm155, %v472, 0
    %v526 = vsel %vm155, %v473, 0
    %v529 = vsel %vm192, %v488, 0
    %v532 = vsel %vm192, %v489, 0
    %534 = vmatpush.bf16.msra.mxu0 0
    %535 = vmatpush.bf16.msra.mxu0 0
    %536 = vmatpush.bf16.msra.mxu0 0
    %537 = vmatpush.bf16.msra.mxu0 0
    %538 = vmatpush.bf16.msra.mxu0 0
    %539 = vmatpush.bf16.msra.mxu0 0
    %540 = vmatpush.bf16.msra.mxu0 %v529
    %541 = vmatpush.bf16.msra.mxu0 %v486
    %542 = vmatmul.bf16.gmra.mxu0 %v493
    %v543 = vpop.f32.mrf.mxu0
    %v544 = vadd.f32 0.0, %v543
    %v545 = vpop.f32.mrf.mxu0
    %v546 = vadd.f32 0.0, %v545
    %547 = vmatmul.bf16.gmra.mxu0 %v496
    %v548 = vpop.f32.mrf.mxu0
    %v549 = vadd.f32 0.0, %v548
    %v550 = vpop.f32.mrf.mxu0
    %v551 = vadd.f32 0.0, %v550
    %552 = vmatmul.bf16.gmra.mxu0 %v499
    %v553 = vpop.f32.mrf.mxu0
    %v554 = vadd.f32 0.0, %v553
    %v555 = vpop.f32.mrf.mxu0
    %v556 = vadd.f32 0.0, %v555
    %557 = vmatmul.bf16.gmra.mxu0 %v502
    %v558 = vpop.f32.mrf.mxu0
    %v559 = vadd.f32 0.0, %v558
    %v560 = vpop.f32.mrf.mxu0
    %v561 = vadd.f32 0.0, %v560
    %562 = vmatmul.bf16.gmra.mxu0 %v505
    %v563 = vpop.f32.mrf.mxu0
    %v564 = vadd.f32 0.0, %v563
    %v565 = vpop.f32.mrf.mxu0
    %v566 = vadd.f32 0.0, %v565
    %567 = vmatmul.bf16.gmra.mxu0 %v508
    %v568 = vpop.f32.mrf.mxu0
    %v569 = vadd.f32 0.0, %v568
    %v570 = vpop.f32.mrf.mxu0
    %v571 = vadd.f32 0.0, %v570
    %572 = vmatmul.bf16.gmra.mxu0 %v511
    %v573 = vpop.f32.mrf.mxu0
    %v574 = vadd.f32 0.0, %v573
    %v575 = vpop.f32.mrf.mxu0
    %v576 = vadd.f32 0.0, %v575
    %577 = vmatmul.bf16.gmra.mxu0 %v514
    %v578 = vpop.f32.mrf.mxu0
    %v579 = vadd.f32 0.0, %v578
    %v580 = vpop.f32.mrf.mxu0
    %v581 = vadd.f32 0.0, %v580
    %582 = vmatmul.bf16.gmra.mxu0 %v517
    %v583 = vpop.f32.mrf.mxu0
    %v584 = vadd.f32 0.0, %v583
    %v585 = vpop.f32.mrf.mxu0
    %v586 = vadd.f32 0.0, %v585
    %587 = vmatmul.bf16.gmra.mxu0 %v520
    %v588 = vpop.f32.mrf.mxu0
    %v589 = vadd.f32 0.0, %v588
    %v590 = vpop.f32.mrf.mxu0
    %v591 = vadd.f32 0.0, %v590
    %592 = vmatmul.bf16.gmra.mxu0 %v523
    %v593 = vpop.f32.mrf.mxu0
    %v594 = vadd.f32 0.0, %v593
    %v595 = vpop.f32.mrf.mxu0
    %v596 = vadd.f32 0.0, %v595
    %597 = vmatmul.bf16.gmra.mxu0 %v526
    %v598 = vpop.f32.mrf.mxu0
    %v599 = vadd.f32 0.0, %v598
    %v600 = vpop.f32.mrf.mxu0
    %v601 = vadd.f32 0.0, %v600
    %602 = vdwg.mxu0
    %603 = vmatpush.bf16.msra.mxu0 0
    %604 = vmatpush.bf16.msra.mxu0 0
    %605 = vmatpush.bf16.msra.mxu0 0
    %606 = vmatpush.bf16.msra.mxu0 0
    %607 = vmatpush.bf16.msra.mxu0 0
    %608 = vmatpush.bf16.msra.mxu0 0
    %609 = vmatpush.bf16.msra.mxu0 %v532
    %610 = vmatpush.bf16.msra.mxu0 %v487
    %611 = vmatmul.bf16.gmra.mxu0 %v493
    %v612 = vpop.f32.mrf.mxu0
    %v613 = vadd.f32 0.0, %v612
    %v614 = vpop.f32.mrf.mxu0
    %v615 = vadd.f32 0.0, %v614
    %616 = vmatmul.bf16.gmra.mxu0 %v496
    %v617 = vpop.f32.mrf.mxu0
    %v618 = vadd.f32 0.0, %v617
    %v619 = vpop.f32.mrf.mxu0
    %v620 = vadd.f32 0.0, %v619
    %621 = vmatmul.bf16.gmra.mxu0 %v499
    %v622 = vpop.f32.mrf.mxu0
    %v623 = vadd.f32 0.0, %v622
    %v624 = vpop.f32.mrf.mxu0
    %v625 = vadd.f32 0.0, %v624
    %626 = vmatmul.bf16.gmra.mxu0 %v502
    %v627 = vpop.f32.mrf.mxu0
    %v628 = vadd.f32 0.0, %v627
    %v629 = vpop.f32.mrf.mxu0
    %v630 = vadd.f32 0.0, %v629
    %631 = vmatmul.bf16.gmra.mxu0 %v505
    %v632 = vpop.f32.mrf.mxu0
    %v633 = vadd.f32 0.0, %v632
    %v634 = vpop.f32.mrf.mxu0
    %v635 = vadd.f32 0.0, %v634
    %636 = vmatmul.bf16.gmra.mxu0 %v508
    %v637 = vpop.f32.mrf.mxu0
    %v638 = vadd.f32 0.0, %v637
    %v639 = vpop.f32.mrf.mxu0
    %v640 = vadd.f32 0.0, %v639
    %641 = vmatmul.bf16.gmra.mxu0 %v511
    %v642 = vpop.f32.mrf.mxu0
    %v643 = vadd.f32 0.0, %v642
    %v644 = vpop.f32.mrf.mxu0
    %v645 = vadd.f32 0.0, %v644
    %646 = vmatmul.bf16.gmra.mxu0 %v514
    %v647 = vpop.f32.mrf.mxu0
    %v648 = vadd.f32 0.0, %v647
    %v649 = vpop.f32.mrf.mxu0
    %v650 = vadd.f32 0.0, %v649
    %651 = vmatmul.bf16.gmra.mxu0 %v517
    %v652 = vpop.f32.mrf.mxu0
    %v653 = vadd.f32 0.0, %v652
    %v654 = vpop.f32.mrf.mxu0
    %v655 = vadd.f32 0.0, %v654
    %656 = vmatmul.bf16.gmra.mxu0 %v520
    %v657 = vpop.f32.mrf.mxu0
    %v658 = vadd.f32 0.0, %v657
    %v659 = vpop.f32.mrf.mxu0
    %v660 = vadd.f32 0.0, %v659
    %661 = vmatmul.bf16.gmra.mxu0 %v523
    %v662 = vpop.f32.mrf.mxu0
    %v663 = vadd.f32 0.0, %v662
    %v664 = vpop.f32.mrf.mxu0
    %v665 = vadd.f32 0.0, %v664
    %666 = vmatmul.bf16.gmra.mxu0 %v526
    %v667 = vpop.f32.mrf.mxu0
    %v668 = vadd.f32 0.0, %v667
    %v669 = vpop.f32.mrf.mxu0
    %v670 = vadd.f32 0.0, %v669
    %671 = vdwg.mxu0
    %v672 = vld [vmem:[#allocation2] sm:$0xff]
    %v673 = vld [vmem:[#allocation2 + $0x8] sm:$0xff]
    %v674 = vld [vmem:[#allocation2 + $0x10] sm:$0xff]
    %v675 = vld [vmem:[#allocation2 + $0x18] sm:$0xff]
    %v676 = vld [vmem:[#allocation2 + $0x20] sm:$0xff]
    %v677 = vld [vmem:[#allocation2 + $0x28] sm:$0xff]
    %v678 = vld [vmem:[#allocation2 + $0x30] sm:$0xff]
    %v679 = vld [vmem:[#allocation2 + $0x38] sm:$0xff]
    %v680 = vld [vmem:[#allocation2 + $0x40] sm:$0xff]
    %v681 = vld [vmem:[#allocation2 + $0x48] sm:$0xff]
    %v682 = vld [vmem:[#allocation2 + $0x50] sm:$0xff]
    %v683 = vld [vmem:[#allocation2 + $0x58] sm:$0xff]
    %v684 = vld [vmem:[#allocation2 + $0x60] sm:$0xff]
    %v685 = vld [vmem:[#allocation2 + $0x68] sm:$0xff]
    %v686 = vld [vmem:[#allocation2 + $0x70] sm:$0xff]
    %v687 = vld [vmem:[#allocation2 + $0x78] sm:$0xff]
    %v688 = vld [vmem:[#allocation2 + $0x80] sm:$0xff]
    %v689 = vld [vmem:[#allocation2 + $0x88] sm:$0xff]
    %v690 = vld [vmem:[#allocation2 + $0x90] sm:$0xff]
    %v691 = vld [vmem:[#allocation2 + $0x98] sm:$0xff]
    %v692 = vld [vmem:[#allocation2 + $0xa0] sm:$0xff]
    %v693 = vld [vmem:[#allocation2 + $0xa8] sm:$0xff]
    %v694 = vld [vmem:[#allocation2 + $0xb0] sm:$0xff]
    %v695 = vld [vmem:[#allocation2 + $0xb8] sm:$0xff]
    %v696 = vld [vmem:[#allocation2 + $0xc0] sm:$0xff]
    %v697 = vld [vmem:[#allocation2 + $0xc8] sm:$0xff]
    %v698 = vld [vmem:[#allocation2 + $0xd0] sm:$0xff]
    %v699 = vld [vmem:[#allocation2 + $0xd8] sm:$0xff]
    %v700 = vld [vmem:[#allocation2 + $0xe0] sm:$0xff]
    %v701 = vld [vmem:[#allocation2 + $0xe8] sm:$0xff]
    %v702 = vld [vmem:[#allocation2 + $0xf0] sm:$0xff]
    %v703 = vld [vmem:[#allocation2 + $0xf8] sm:$0xff]
    %v704 = vld [vmem:[#allocation2 + $0x100] sm:$0xff]
    %v705 = vld [vmem:[#allocation2 + $0x108] sm:$0xff]
    %v706 = vld [vmem:[#allocation2 + $0x110] sm:$0xff]
    %v707 = vld [vmem:[#allocation2 + $0x118] sm:$0xff]
    %v708 = vld [vmem:[#allocation2 + $0x120] sm:$0xff]
    %v709 = vld [vmem:[#allocation2 + $0x128] sm:$0xff]
    %v710 = vld [vmem:[#allocation2 + $0x130] sm:$0xff]
    %v711 = vld [vmem:[#allocation2 + $0x138] sm:$0xff]
    %v712 = vld [vmem:[#allocation2 + $0x140] sm:$0xff]
    %v713 = vld [vmem:[#allocation2 + $0x148] sm:$0xff]
    %v714 = vld [vmem:[#allocation2 + $0x150] sm:$0xff]
    %v715 = vld [vmem:[#allocation2 + $0x158] sm:$0xff]
    %v716 = vld [vmem:[#allocation2 + $0x160] sm:$0xff]
    %v717 = vld [vmem:[#allocation2 + $0x168] sm:$0xff]
    %v718 = vld [vmem:[#allocation2 + $0x170] sm:$0xff]
    %v719 = vld [vmem:[#allocation2 + $0x178] sm:$0xff]
    %v720 = vadd.f32 %v672, %v544
    %v721 = vadd.f32 %v673, %v613
    %v722 = vadd.f32 %v674, %v546
    %v723 = vadd.f32 %v675, %v615
    %v724 = vadd.f32 %v676, %v549
    %v725 = vadd.f32 %v677, %v618
    %v726 = vadd.f32 %v678, %v551
    %v727 = vadd.f32 %v679, %v620
    %v728 = vadd.f32 %v680, %v554
    %v729 = vadd.f32 %v681, %v623
    %v730 = vadd.f32 %v682, %v556
    %v731 = vadd.f32 %v683, %v625
    %v732 = vadd.f32 %v684, %v559
    %v733 = vadd.f32 %v685, %v628
    %v734 = vadd.f32 %v686, %v561
    %v735 = vadd.f32 %v687, %v630
    %v736 = vadd.f32 %v688, %v564
    %v737 = vadd.f32 %v689, %v633
    %v738 = vadd.f32 %v690, %v566
    %v739 = vadd.f32 %v691, %v635
    %v740 = vadd.f32 %v692, %v569
    %v741 = vadd.f32 %v693, %v638
    %v742 = vadd.f32 %v694, %v571
    %v743 = vadd.f32 %v695, %v640
    %v744 = vadd.f32 %v696, %v574
    %v745 = vadd.f32 %v697, %v643
    %v746 = vadd.f32 %v698, %v576
    %v747 = vadd.f32 %v699, %v645
    %v748 = vadd.f32 %v700, %v579
    %v749 = vadd.f32 %v701, %v648
    %v750 = vadd.f32 %v702, %v581
    %v751 = vadd.f32 %v703, %v650
    %v752 = vadd.f32 %v704, %v584
    %v753 = vadd.f32 %v705, %v653
    %v754 = vadd.f32 %v706, %v586
    %v755 = vadd.f32 %v707, %v655
    %v756 = vadd.f32 %v708, %v589
    %v757 = vadd.f32 %v709, %v658
    %v758 = vadd.f32 %v710, %v591
    %v759 = vadd.f32 %v711, %v660
    %v760 = vadd.f32 %v712, %v594
    %v761 = vadd.f32 %v713, %v663
    %v762 = vadd.f32 %v714, %v596
    %v763 = vadd.f32 %v715, %v665
    %v764 = vadd.f32 %v716, %v599
    %v765 = vadd.f32 %v717, %v668
    %v766 = vadd.f32 %v718, %v601
    %v767 = vadd.f32 %v719, %v670
    %768 = vst [vmem:[#allocation2] sm:$0xff] %v720
    %769 = vst [vmem:[#allocation2 + $0x8] sm:$0xff] %v721
    %770 = vst [vmem:[#allocation2 + $0x10] sm:$0xff] %v722
    %771 = vst [vmem:[#allocation2 + $0x18] sm:$0xff] %v723
    %772 = vst [vmem:[#allocation2 + $0x20] sm:$0xff] %v724
    %773 = vst [vmem:[#allocation2 + $0x28] sm:$0xff] %v725
    %774 = vst [vmem:[#allocation2 + $0x30] sm:$0xff] %v726
    %775 = vst [vmem:[#allocation2 + $0x38] sm:$0xff] %v727
    %776 = vst [vmem:[#allocation2 + $0x40] sm:$0xff] %v728
    %777 = vst [vmem:[#allocation2 + $0x48] sm:$0xff] %v729
    %778 = vst [vmem:[#allocation2 + $0x50] sm:$0xff] %v730
    %779 = vst [vmem:[#allocation2 + $0x58] sm:$0xff] %v731
    %780 = vst [vmem:[#allocation2 + $0x60] sm:$0xff] %v732
    %781 = vst [vmem:[#allocation2 + $0x68] sm:$0xff] %v733
    %782 = vst [vmem:[#allocation2 + $0x70] sm:$0xff] %v734
    %783 = vst [vmem:[#allocation2 + $0x78] sm:$0xff] %v735
    %784 = vst [vmem:[#allocation2 + $0x80] sm:$0xff] %v736
    %785 = vst [vmem:[#allocation2 + $0x88] sm:$0xff] %v737
    %786 = vst [vmem:[#allocation2 + $0x90] sm:$0xff] %v738
    %787 = vst [vmem:[#allocation2 + $0x98] sm:$0xff] %v739
    %788 = vst [vmem:[#allocation2 + $0xa0] sm:$0xff] %v740
    %789 = vst [vmem:[#allocation2 + $0xa8] sm:$0xff] %v741
    %790 = vst [vmem:[#allocation2 + $0xb0] sm:$0xff] %v742
    %791 = vst [vmem:[#allocation2 + $0xb8] sm:$0xff] %v743
    %792 = vst [vmem:[#allocation2 + $0xc0] sm:$0xff] %v744
    %793 = vst [vmem:[#allocation2 + $0xc8] sm:$0xff] %v745
    %794 = vst [vmem:[#allocation2 + $0xd0] sm:$0xff] %v746
    %795 = vst [vmem:[#allocation2 + $0xd8] sm:$0xff] %v747
    %796 = vst [vmem:[#allocation2 + $0xe0] sm:$0xff] %v748
    %797 = vst [vmem:[#allocation2 + $0xe8] sm:$0xff] %v749
    %798 = vst [vmem:[#allocation2 + $0xf0] sm:$0xff] %v750
    %799 = vst [vmem:[#allocation2 + $0xf8] sm:$0xff] %v751
    %800 = vst [vmem:[#allocation2 + $0x100] sm:$0xff] %v752
    %801 = vst [vmem:[#allocation2 + $0x108] sm:$0xff] %v753
    %802 = vst [vmem:[#allocation2 + $0x110] sm:$0xff] %v754
    %803 = vst [vmem:[#allocation2 + $0x118] sm:$0xff] %v755
    %804 = vst [vmem:[#allocation2 + $0x120] sm:$0xff] %v756
    %805 = vst [vmem:[#allocation2 + $0x128] sm:$0xff] %v757
    %806 = vst [vmem:[#allocation2 + $0x130] sm:$0xff] %v758
    %807 = vst [vmem:[#allocation2 + $0x138] sm:$0xff] %v759
    %808 = vst [vmem:[#allocation2 + $0x140] sm:$0xff] %v760
    %809 = vst [vmem:[#allocation2 + $0x148] sm:$0xff] %v761
    %810 = vst [vmem:[#allocation2 + $0x150] sm:$0xff] %v762
    %811 = vst [vmem:[#allocation2 + $0x158] sm:$0xff] %v763
    %812 = vst [vmem:[#allocation2 + $0x160] sm:$0xff] %v764
    %813 = vst [vmem:[#allocation2 + $0x168] sm:$0xff] %v765
    %814 = vst [vmem:[#allocation2 + $0x170] sm:$0xff] %v766
    %815 = vst [vmem:[#allocation2 + $0x178] sm:$0xff] %v767
    %v816 = vld [vmem:[%s0 + $0x8] sm:$0xf]
    %v817 = vld [vmem:[%s0 + $0xc] sm:$0xf]
    %v818 = vld [vmem:[%s0 + $0x10] sm:$0xf]
    %v819 = vld [vmem:[%s0 + $0x14] sm:$0xf]
    %v820 = vld [vmem:[%s0 + $0x18] sm:$0xf]
    %v821 = vld [vmem:[%s0 + $0x1c] sm:$0xf]
    %v822 = vld [vmem:[%s0 + $0x20] sm:$0xf]
    %v823 = vld [vmem:[%s0 + $0x24] sm:$0xf]
    %v824 = vld [vmem:[%s0 + $0x28] sm:$0xf]
    %v825 = vld [vmem:[%s0 + $0x2c] sm:$0xf]
    %v826 = vld [vmem:[%s0 + $0x30] sm:$0xf]
    %v827 = vld [vmem:[%s0 + $0x34] sm:$0xf]
    %v828 = vld [vmem:[%s0 + $0x38] sm:$0xf]
    %v829 = vld [vmem:[%s0 + $0x3c] sm:$0xf]
    %v830 = vld [vmem:[%s0 + $0x40] sm:$0xf]
    %v831 = vld [vmem:[%s0 + $0x44] sm:$0xf]
    %v832 = vld [vmem:[%s0 + $0x48] sm:$0xf]
    %v833 = vld [vmem:[%s0 + $0x4c] sm:$0xf]
    %v834 = vld [vmem:[%s0 + $0x50] sm:$0xf]
    %v835 = vld [vmem:[%s0 + $0x54] sm:$0xf]
    %v836 = vld [vmem:[%s0 + $0x58] sm:$0xf]
    %v837 = vld [vmem:[%s0 + $0x5c] sm:$0xf]
    %v838 = vld [vmem:[%s0 + $0x60] sm:$0xf]
    %v839 = vld [vmem:[%s0 + $0x64] sm:$0xf]
    %s840 = scalar_lea.vmem %s1, 64
    %v841 = vld [vmem:[%s840] sm:$0xff]
    %v842 = vld [vmem:[%s840 + $0x8] sm:$0xff]
    %v843 = vld [vmem:[%s840 + $0x10] sm:$0xff]
    %v844 = vld [vmem:[%s840 + $0x18] sm:$0x33]
    %v869 = vunpack.c.l.b16 %v816
    %v870 = vunpack.c.l.b16 %v817
    %v871 = vunpack.c.l.b16 %v818
    %v872 = vunpack.c.l.b16 %v819
    %v873 = vunpack.c.l.b16 %v820
    %v874 = vunpack.c.l.b16 %v821
    %v875 = vunpack.c.l.b16 %v822
    %v876 = vunpack.c.l.b16 %v823
    %v877 = vunpack.c.l.b16 %v824
    %v878 = vunpack.c.l.b16 %v825
    %v879 = vunpack.c.l.b16 %v826
    %v880 = vunpack.c.l.b16 %v827
    %v881 = vunpack.c.l.b16 %v828
    %v882 = vunpack.c.l.b16 %v829
    %v883 = vunpack.c.l.b16 %v830
    %v884 = vunpack.c.l.b16 %v831
    %v885 = vunpack.c.l.b16 %v832
    %v886 = vunpack.c.l.b16 %v833
    %v887 = vunpack.c.l.b16 %v834
    %v888 = vunpack.c.l.b16 %v835
    %v889 = vunpack.c.l.b16 %v836
    %v890 = vunpack.c.l.b16 %v837
    %v891 = vunpack.c.l.b16 %v838
    %v892 = vunpack.c.l.b16 %v839
    %v893 = vpack.c.b16 %v870, %v869
    %v894 = vpack.c.b16 %v872, %v871
    %v895 = vpack.c.b16 %v874, %v873
    %v896 = vpack.c.b16 %v876, %v875
    %v897 = vpack.c.b16 %v878, %v877
    %v898 = vpack.c.b16 %v880, %v879
    %v899 = vpack.c.b16 %v882, %v881
    %v900 = vpack.c.b16 %v884, %v883
    %v901 = vpack.c.b16 %v886, %v885
    %v902 = vpack.c.b16 %v888, %v887
    %v903 = vpack.c.b16 %v890, %v889
    %v904 = vpack.c.b16 %v892, %v891
    %v909 = vunpack.c.l.b16 %v841
    %v910 = vunpack.c.h.b16 %v841
    %v911 = vunpack.c.l.b16 %v842
    %v912 = vunpack.c.h.b16 %v842
    %v913 = vunpack.c.l.b16 %v843
    %v914 = vunpack.c.h.b16 %v843
    %v915 = vunpack.c.l.b16 %v844
    %v916 = vunpack.c.h.b16 %v844
    %v917 = vpack.c.b16 %v911, %v909
    %v918 = vpack.c.b16 %v912, %v910
    %v919 = vpack.c.b16 %v915, %v913
    %v920 = vpack.c.b16 %v916, %v914
    %v924 = vsel %vm155, %v893, 0
    %v927 = vsel %vm155, %v894, 0
    %v930 = vsel %vm155, %v895, 0
    %v933 = vsel %vm155, %v896, 0
    %v936 = vsel %vm155, %v897, 0
    %v939 = vsel %vm155, %v898, 0
    %v942 = vsel %vm155, %v899, 0
    %v945 = vsel %vm155, %v900, 0
    %v948 = vsel %vm155, %v901, 0
    %v951 = vsel %vm155, %v902, 0
    %v954 = vsel %vm155, %v903, 0
    %v957 = vsel %vm155, %v904, 0
    %v960 = vsel %vm192, %v919, 0
    %v963 = vsel %vm192, %v920, 0
    %965 = vmatpush.bf16.msra.mxu0 0
    %966 = vmatpush.bf16.msra.mxu0 0
    %967 = vmatpush.bf16.msra.mxu0 0
    %968 = vmatpush.bf16.msra.mxu0 0
    %969 = vmatpush.bf16.msra.mxu0 0
    %970 = vmatpush.bf16.msra.mxu0 0
    %971 = vmatpush.bf16.msra.mxu0 %v960
    %972 = vmatpush.bf16.msra.mxu0 %v917
    %973 = vmatmul.bf16.gmra.mxu0 %v924
    %v974 = vpop.f32.mrf.mxu0
    %v975 = vadd.f32 0.0, %v974
    %v976 = vpop.f32.mrf.mxu0
    %v977 = vadd.f32 0.0, %v976
    %978 = vmatmul.bf16.gmra.mxu0 %v927
    %v979 = vpop.f32.mrf.mxu0
    %v980 = vadd.f32 0.0, %v979
    %v981 = vpop.f32.mrf.mxu0
    %v982 = vadd.f32 0.0, %v981
    %983 = vmatmul.bf16.gmra.mxu0 %v930
    %v984 = vpop.f32.mrf.mxu0
    %v985 = vadd.f32 0.0, %v984
    %v986 = vpop.f32.mrf.mxu0
    %v987 = vadd.f32 0.0, %v986
    %988 = vmatmul.bf16.gmra.mxu0 %v933
    %v989 = vpop.f32.mrf.mxu0
    %v990 = vadd.f32 0.0, %v989
    %v991 = vpop.f32.mrf.mxu0
    %v992 = vadd.f32 0.0, %v991
    %993 = vmatmul.bf16.gmra.mxu0 %v936
    %v994 = vpop.f32.mrf.mxu0
    %v995 = vadd.f32 0.0, %v994
    %v996 = vpop.f32.mrf.mxu0
    %v997 = vadd.f32 0.0, %v996
    %998 = vmatmul.bf16.gmra.mxu0 %v939
    %v999 = vpop.f32.mrf.mxu0
    %v1000 = vadd.f32 0.0, %v999
    %v1001 = vpop.f32.mrf.mxu0
    %v1002 = vadd.f32 0.0, %v1001
    %1003 = vmatmul.bf16.gmra.mxu0 %v942
    %v1004 = vpop.f32.mrf.mxu0
    %v1005 = vadd.f32 0.0, %v1004
    %v1006 = vpop.f32.mrf.mxu0
    %v1007 = vadd.f32 0.0, %v1006
    %1008 = vmatmul.bf16.gmra.mxu0 %v945
    %v1009 = vpop.f32.mrf.mxu0
    %v1010 = vadd.f32 0.0, %v1009
    %v1011 = vpop.f32.mrf.mxu0
    %v1012 = vadd.f32 0.0, %v1011
    %1013 = vmatmul.bf16.gmra.mxu0 %v948
    %v1014 = vpop.f32.mrf.mxu0
    %v1015 = vadd.f32 0.0, %v1014
    %v1016 = vpop.f32.mrf.mxu0
    %v1017 = vadd.f32 0.0, %v1016
    %1018 = vmatmul.bf16.gmra.mxu0 %v951
    %v1019 = vpop.f32.mrf.mxu0
    %v1020 = vadd.f32 0.0, %v1019
    %v1021 = vpop.f32.mrf.mxu0
    %v1022 = vadd.f32 0.0, %v1021
    %1023 = vmatmul.bf16.gmra.mxu0 %v954
    %v1024 = vpop.f32.mrf.mxu0
    %v1025 = vadd.f32 0.0, %v1024
    %v1026 = vpop.f32.mrf.mxu0
    %v1027 = vadd.f32 0.0, %v1026
    %1028 = vmatmul.bf16.gmra.mxu0 %v957
    %v1029 = vpop.f32.mrf.mxu0
    %v1030 = vadd.f32 0.0, %v1029
    %v1031 = vpop.f32.mrf.mxu0
    %v1032 = vadd.f32 0.0, %v1031
    %1033 = vdwg.mxu0
    %1034 = vmatpush.bf16.msra.mxu0 0
    %1035 = vmatpush.bf16.msra.mxu0 0
    %1036 = vmatpush.bf16.msra.mxu0 0
    %1037 = vmatpush.bf16.msra.mxu0 0
    %1038 = vmatpush.bf16.msra.mxu0 0
    %1039 = vmatpush.bf16.msra.mxu0 0
    %1040 = vmatpush.bf16.msra.mxu0 %v963
    %1041 = vmatpush.bf16.msra.mxu0 %v918
    %1042 = vmatmul.bf16.gmra.mxu0 %v924
    %v1043 = vpop.f32.mrf.mxu0
    %v1044 = vadd.f32 0.0, %v1043
    %v1045 = vpop.f32.mrf.mxu0
    %v1046 = vadd.f32 0.0, %v1045
    %1047 = vmatmul.bf16.gmra.mxu0 %v927
    %v1048 = vpop.f32.mrf.mxu0
    %v1049 = vadd.f32 0.0, %v1048
    %v1050 = vpop.f32.mrf.mxu0
    %v1051 = vadd.f32 0.0, %v1050
    %1052 = vmatmul.bf16.gmra.mxu0 %v930
    %v1053 = vpop.f32.mrf.mxu0
    %v1054 = vadd.f32 0.0, %v1053
    %v1055 = vpop.f32.mrf.mxu0
    %v1056 = vadd.f32 0.0, %v1055
    %1057 = vmatmul.bf16.gmra.mxu0 %v933
    %v1058 = vpop.f32.mrf.mxu0
    %v1059 = vadd.f32 0.0, %v1058
    %v1060 = vpop.f32.mrf.mxu0
    %v1061 = vadd.f32 0.0, %v1060
    %1062 = vmatmul.bf16.gmra.mxu0 %v936
    %v1063 = vpop.f32.mrf.mxu0
    %v1064 = vadd.f32 0.0, %v1063
    %v1065 = vpop.f32.mrf.mxu0
    %v1066 = vadd.f32 0.0, %v1065
    %1067 = vmatmul.bf16.gmra.mxu0 %v939
    %v1068 = vpop.f32.mrf.mxu0
    %v1069 = vadd.f32 0.0, %v1068
    %v1070 = vpop.f32.mrf.mxu0
    %v1071 = vadd.f32 0.0, %v1070
    %1072 = vmatmul.bf16.gmra.mxu0 %v942
    %v1073 = vpop.f32.mrf.mxu0
    %v1074 = vadd.f32 0.0, %v1073
    %v1075 = vpop.f32.mrf.mxu0
    %v1076 = vadd.f32 0.0, %v1075
    %1077 = vmatmul.bf16.gmra.mxu0 %v945
    %v1078 = vpop.f32.mrf.mxu0
    %v1079 = vadd.f32 0.0, %v1078
    %v1080 = vpop.f32.mrf.mxu0
    %v1081 = vadd.f32 0.0, %v1080
    %1082 = vmatmul.bf16.gmra.mxu0 %v948
    %v1083 = vpop.f32.mrf.mxu0
    %v1084 = vadd.f32 0.0, %v1083
    %v1085 = vpop.f32.mrf.mxu0
    %v1086 = vadd.f32 0.0, %v1085
    %1087 = vmatmul.bf16.gmra.mxu0 %v951
    %v1088 = vpop.f32.mrf.mxu0
    %v1089 = vadd.f32 0.0, %v1088
    %v1090 = vpop.f32.mrf.mxu0
    %v1091 = vadd.f32 0.0, %v1090
    %1092 = vmatmul.bf16.gmra.mxu0 %v954
    %v1093 = vpop.f32.mrf.mxu0
    %v1094 = vadd.f32 0.0, %v1093
    %v1095 = vpop.f32.mrf.mxu0
    %v1096 = vadd.f32 0.0, %v1095
    %1097 = vmatmul.bf16.gmra.mxu0 %v957
    %v1098 = vpop.f32.mrf.mxu0
    %v1099 = vadd.f32 0.0, %v1098
    %v1100 = vpop.f32.mrf.mxu0
    %v1101 = vadd.f32 0.0, %v1100
    %1102 = vdwg.mxu0
    %v1103 = vld [vmem:[#allocation2] sm:$0xff]
    %v1104 = vld [vmem:[#allocation2 + $0x8] sm:$0xff]
    %v1105 = vld [vmem:[#allocation2 + $0x10] sm:$0xff]
    %v1106 = vld [vmem:[#allocation2 + $0x18] sm:$0xff]
    %v1107 = vld [vmem:[#allocation2 + $0x20] sm:$0xff]
    %v1108 = vld [vmem:[#allocation2 + $0x28] sm:$0xff]
    %v1109 = vld [vmem:[#allocation2 + $0x30] sm:$0xff]
    %v1110 = vld [vmem:[#allocation2 + $0x38] sm:$0xff]
    %v1111 = vld [vmem:[#allocation2 + $0x40] sm:$0xff]
    %v1112 = vld [vmem:[#allocation2 + $0x48] sm:$0xff]
    %v1113 = vld [vmem:[#allocation2 + $0x50] sm:$0xff]
    %v1114 = vld [vmem:[#allocation2 + $0x58] sm:$0xff]
    %v1115 = vld [vmem:[#allocation2 + $0x60] sm:$0xff]
    %v1116 = vld [vmem:[#allocation2 + $0x68] sm:$0xff]
    %v1117 = vld [vmem:[#allocation2 + $0x70] sm:$0xff]
    %v1118 = vld [vmem:[#allocation2 + $0x78] sm:$0xff]
    %v1119 = vld [vmem:[#allocation2 + $0x80] sm:$0xff]
    %v1120 = vld [vmem:[#allocation2 + $0x88] sm:$0xff]
    %v1121 = vld [vmem:[#allocation2 + $0x90] sm:$0xff]
    %v1122 = vld [vmem:[#allocation2 + $0x98] sm:$0xff]
    %v1123 = vld [vmem:[#allocation2 + $0xa0] sm:$0xff]
    %v1124 = vld [vmem:[#allocation2 + $0xa8] sm:$0xff]
    %v1125 = vld [vmem:[#allocation2 + $0xb0] sm:$0xff]
    %v1126 = vld [vmem:[#allocation2 + $0xb8] sm:$0xff]
    %v1127 = vld [vmem:[#allocation2 + $0xc0] sm:$0xff]
    %v1128 = vld [vmem:[#allocation2 + $0xc8] sm:$0xff]
    %v1129 = vld [vmem:[#allocation2 + $0xd0] sm:$0xff]
    %v1130 = vld [vmem:[#allocation2 + $0xd8] sm:$0xff]
    %v1131 = vld [vmem:[#allocation2 + $0xe0] sm:$0xff]
    %v1132 = vld [vmem:[#allocation2 + $0xe8] sm:$0xff]
    %v1133 = vld [vmem:[#allocation2 + $0xf0] sm:$0xff]
    %v1134 = vld [vmem:[#allocation2 + $0xf8] sm:$0xff]
    %v1135 = vld [vmem:[#allocation2 + $0x100] sm:$0xff]
    %v1136 = vld [vmem:[#allocation2 + $0x108] sm:$0xff]
    %v1137 = vld [vmem:[#allocation2 + $0x110] sm:$0xff]
    %v1138 = vld [vmem:[#allocation2 + $0x118] sm:$0xff]
    %v1139 = vld [vmem:[#allocation2 + $0x120] sm:$0xff]
    %v1140 = vld [vmem:[#allocation2 + $0x128] sm:$0xff]
    %v1141 = vld [vmem:[#allocation2 + $0x130] sm:$0xff]
    %v1142 = vld [vmem:[#allocation2 + $0x138] sm:$0xff]
    %v1143 = vld [vmem:[#allocation2 + $0x140] sm:$0xff]
    %v1144 = vld [vmem:[#allocation2 + $0x148] sm:$0xff]
    %v1145 = vld [vmem:[#allocation2 + $0x150] sm:$0xff]
    %v1146 = vld [vmem:[#allocation2 + $0x158] sm:$0xff]
    %v1147 = vld [vmem:[#allocation2 + $0x160] sm:$0xff]
    %v1148 = vld [vmem:[#allocation2 + $0x168] sm:$0xff]
    %v1149 = vld [vmem:[#allocation2 + $0x170] sm:$0xff]
    %v1150 = vld [vmem:[#allocation2 + $0x178] sm:$0xff]
    %v1151 = vadd.f32 %v1103, %v975
    %v1152 = vadd.f32 %v1104, %v1044
    %v1153 = vadd.f32 %v1105, %v977
    %v1154 = vadd.f32 %v1106, %v1046
    %v1155 = vadd.f32 %v1107, %v980
    %v1156 = vadd.f32 %v1108, %v1049
    %v1157 = vadd.f32 %v1109, %v982
    %v1158 = vadd.f32 %v1110, %v1051
    %v1159 = vadd.f32 %v1111, %v985
    %v1160 = vadd.f32 %v1112, %v1054
    %v1161 = vadd.f32 %v1113, %v987
    %v1162 = vadd.f32 %v1114, %v1056
    %v1163 = vadd.f32 %v1115, %v990
    %v1164 = vadd.f32 %v1116, %v1059
    %v1165 = vadd.f32 %v1117, %v992
    %v1166 = vadd.f32 %v1118, %v1061
    %v1167 = vadd.f32 %v1119, %v995
    %v1168 = vadd.f32 %v1120, %v1064
    %v1169 = vadd.f32 %v1121, %v997
    %v1170 = vadd.f32 %v1122, %v1066
    %v1171 = vadd.f32 %v1123, %v1000
    %v1172 = vadd.f32 %v1124, %v1069
    %v1173 = vadd.f32 %v1125, %v1002
    %v1174 = vadd.f32 %v1126, %v1071
    %v1175 = vadd.f32 %v1127, %v1005
    %v1176 = vadd.f32 %v1128, %v1074
    %v1177 = vadd.f32 %v1129, %v1007
    %v1178 = vadd.f32 %v1130, %v1076
    %v1179 = vadd.f32 %v1131, %v1010
    %v1180 = vadd.f32 %v1132, %v1079
    %v1181 = vadd.f32 %v1133, %v1012
    %v1182 = vadd.f32 %v1134, %v1081
    %v1183 = vadd.f32 %v1135, %v1015
    %v1184 = vadd.f32 %v1136, %v1084
    %v1185 = vadd.f32 %v1137, %v1017
    %v1186 = vadd.f32 %v1138, %v1086
    %v1187 = vadd.f32 %v1139, %v1020
    %v1188 = vadd.f32 %v1140, %v1089
    %v1189 = vadd.f32 %v1141, %v1022
    %v1190 = vadd.f32 %v1142, %v1091
    %v1191 = vadd.f32 %v1143, %v1025
    %v1192 = vadd.f32 %v1144, %v1094
    %v1193 = vadd.f32 %v1145, %v1027
    %v1194 = vadd.f32 %v1146, %v1096
    %v1195 = vadd.f32 %v1147, %v1030
    %v1196 = vadd.f32 %v1148, %v1099
    %v1197 = vadd.f32 %v1149, %v1032
    %v1198 = vadd.f32 %v1150, %v1101
    %1199 = vst [vmem:[#allocation2] sm:$0xff] %v1151
    %1200 = vst [vmem:[#allocation2 + $0x8] sm:$0xff] %v1152
    %1201 = vst [vmem:[#allocation2 + $0x10] sm:$0xff] %v1153
    %1202 = vst [vmem:[#allocation2 + $0x18] sm:$0xff] %v1154
    %1203 = vst [vmem:[#allocation2 + $0x20] sm:$0xff] %v1155
    %1204 = vst [vmem:[#allocation2 + $0x28] sm:$0xff] %v1156
    %1205 = vst [vmem:[#allocation2 + $0x30] sm:$0xff] %v1157
    %1206 = vst [vmem:[#allocation2 + $0x38] sm:$0xff] %v1158
    %1207 = vst [vmem:[#allocation2 + $0x40] sm:$0xff] %v1159
    %1208 = vst [vmem:[#allocation2 + $0x48] sm:$0xff] %v1160
    %1209 = vst [vmem:[#allocation2 + $0x50] sm:$0xff] %v1161
    %1210 = vst [vmem:[#allocation2 + $0x58] sm:$0xff] %v1162
    %1211 = vst [vmem:[#allocation2 + $0x60] sm:$0xff] %v1163
    %1212 = vst [vmem:[#allocation2 + $0x68] sm:$0xff] %v1164
    %1213 = vst [vmem:[#allocation2 + $0x70] sm:$0xff] %v1165
    %1214 = vst [vmem:[#allocation2 + $0x78] sm:$0xff] %v1166
    %1215 = vst [vmem:[#allocation2 + $0x80] sm:$0xff] %v1167
    %1216 = vst [vmem:[#allocation2 + $0x88] sm:$0xff] %v1168
    %1217 = vst [vmem:[#allocation2 + $0x90] sm:$0xff] %v1169
    %1218 = vst [vmem:[#allocation2 + $0x98] sm:$0xff] %v1170
    %1219 = vst [vmem:[#allocation2 + $0xa0] sm:$0xff] %v1171
    %1220 = vst [vmem:[#allocation2 + $0xa8] sm:$0xff] %v1172
    %1221 = vst [vmem:[#allocation2 + $0xb0] sm:$0xff] %v1173
    %1222 = vst [vmem:[#allocation2 + $0xb8] sm:$0xff] %v1174
    %1223 = vst [vmem:[#allocation2 + $0xc0] sm:$0xff] %v1175
    %1224 = vst [vmem:[#allocation2 + $0xc8] sm:$0xff] %v1176
    %1225 = vst [vmem:[#allocation2 + $0xd0] sm:$0xff] %v1177
    %1226 = vst [vmem:[#allocation2 + $0xd8] sm:$0xff] %v1178
    %1227 = vst [vmem:[#allocation2 + $0xe0] sm:$0xff] %v1179
    %1228 = vst [vmem:[#allocation2 + $0xe8] sm:$0xff] %v1180
    %1229 = vst [vmem:[#allocation2 + $0xf0] sm:$0xff] %v1181
    %1230 = vst [vmem:[#allocation2 + $0xf8] sm:$0xff] %v1182
    %1231 = vst [vmem:[#allocation2 + $0x100] sm:$0xff] %v1183
    %1232 = vst [vmem:[#allocation2 + $0x108] sm:$0xff] %v1184
    %1233 = vst [vmem:[#allocation2 + $0x110] sm:$0xff] %v1185
    %1234 = vst [vmem:[#allocation2 + $0x118] sm:$0xff] %v1186
    %1235 = vst [vmem:[#allocation2 + $0x120] sm:$0xff] %v1187
    %1236 = vst [vmem:[#allocation2 + $0x128] sm:$0xff] %v1188
    %1237 = vst [vmem:[#allocation2 + $0x130] sm:$0xff] %v1189
    %1238 = vst [vmem:[#allocation2 + $0x138] sm:$0xff] %v1190
    %1239 = vst [vmem:[#allocation2 + $0x140] sm:$0xff] %v1191
    %1240 = vst [vmem:[#allocation2 + $0x148] sm:$0xff] %v1192
    %1241 = vst [vmem:[#allocation2 + $0x150] sm:$0xff] %v1193
    %1242 = vst [vmem:[#allocation2 + $0x158] sm:$0xff] %v1194
    %1243 = vst [vmem:[#allocation2 + $0x160] sm:$0xff] %v1195
    %1244 = vst [vmem:[#allocation2 + $0x168] sm:$0xff] %v1196
    %1245 = vst [vmem:[#allocation2 + $0x170] sm:$0xff] %v1197
    %1246 = vst [vmem:[#allocation2 + $0x178] sm:$0xff] %v1198
    %v1247 = vld [vmem:[%s0 + $0xc] sm:$0xf]
    %v1248 = vld [vmem:[%s0 + $0x10] sm:$0xf]
    %v1249 = vld [vmem:[%s0 + $0x14] sm:$0xf]
    %v1250 = vld [vmem:[%s0 + $0x18] sm:$0xf]
    %v1251 = vld [vmem:[%s0 + $0x1c] sm:$0xf]
    %v1252 = vld [vmem:[%s0 + $0x20] sm:$0xf]
    %v1253 = vld [vmem:[%s0 + $0x24] sm:$0xf]
    %v1254 = vld [vmem:[%s0 + $0x28] sm:$0xf]
    %v1255 = vld [vmem:[%s0 + $0x2c] sm:$0xf]
    %v1256 = vld [vmem:[%s0 + $0x30] sm:$0xf]
    %v1257 = vld [vmem:[%s0 + $0x34] sm:$0xf]
    %v1258 = vld [vmem:[%s0 + $0x38] sm:$0xf]
    %v1259 = vld [vmem:[%s0 + $0x3c] sm:$0xf]
    %v1260 = vld [vmem:[%s0 + $0x40] sm:$0xf]
    %v1261 = vld [vmem:[%s0 + $0x44] sm:$0xf]
    %v1262 = vld [vmem:[%s0 + $0x48] sm:$0xf]
    %v1263 = vld [vmem:[%s0 + $0x4c] sm:$0xf]
    %v1264 = vld [vmem:[%s0 + $0x50] sm:$0xf]
    %v1265 = vld [vmem:[%s0 + $0x54] sm:$0xf]
    %v1266 = vld [vmem:[%s0 + $0x58] sm:$0xf]
    %v1267 = vld [vmem:[%s0 + $0x5c] sm:$0xf]
    %v1268 = vld [vmem:[%s0 + $0x60] sm:$0xf]
    %v1269 = vld [vmem:[%s0 + $0x64] sm:$0xf]
    %v1270 = vld [vmem:[%s0 + $0x68] sm:$0xf]
    %s1271 = scalar_lea.vmem %s1, 96
    %v1272 = vld [vmem:[%s1271] sm:$0xff]
    %v1273 = vld [vmem:[%s1271 + $0x8] sm:$0xff]
    %v1274 = vld [vmem:[%s1271 + $0x10] sm:$0xff]
    %v1275 = vld [vmem:[%s1271 + $0x18] sm:$0x33]
    %v1300 = vunpack.c.l.b16 %v1247
    %v1301 = vunpack.c.l.b16 %v1248
    %v1302 = vunpack.c.l.b16 %v1249
    %v1303 = vunpack.c.l.b16 %v1250
    %v1304 = vunpack.c.l.b16 %v1251
    %v1305 = vunpack.c.l.b16 %v1252
    %v1306 = vunpack.c.l.b16 %v1253
    %v1307 = vunpack.c.l.b16 %v1254
    %v1308 = vunpack.c.l.b16 %v1255
    %v1309 = vunpack.c.l.b16 %v1256
    %v1310 = vunpack.c.l.b16 %v1257
    %v1311 = vunpack.c.l.b16 %v1258
    %v1312 = vunpack.c.l.b16 %v1259
    %v1313 = vunpack.c.l.b16 %v1260
    %v1314 = vunpack.c.l.b16 %v1261
    %v1315 = vunpack.c.l.b16 %v1262
    %v1316 = vunpack.c.l.b16 %v1263
    %v1317 = vunpack.c.l.b16 %v1264
    %v1318 = vunpack.c.l.b16 %v1265
    %v1319 = vunpack.c.l.b16 %v1266
    %v1320 = vunpack.c.l.b16 %v1267
    %v1321 = vunpack.c.l.b16 %v1268
    %v1322 = vunpack.c.l.b16 %v1269
    %v1323 = vunpack.c.l.b16 %v1270
    %v1324 = vpack.c.b16 %v1301, %v1300
    %v1325 = vpack.c.b16 %v1303, %v1302
    %v1326 = vpack.c.b16 %v1305, %v1304
    %v1327 = vpack.c.b16 %v1307, %v1306
    %v1328 = vpack.c.b16 %v1309, %v1308
    %v1329 = vpack.c.b16 %v1311, %v1310
    %v1330 = vpack.c.b16 %v1313, %v1312
    %v1331 = vpack.c.b16 %v1315, %v1314
    %v1332 = vpack.c.b16 %v1317, %v1316
    %v1333 = vpack.c.b16 %v1319, %v1318
    %v1334 = vpack.c.b16 %v1321, %v1320
    %v1335 = vpack.c.b16 %v1323, %v1322
    %v1340 = vunpack.c.l.b16 %v1272
    %v1341 = vunpack.c.h.b16 %v1272
    %v1342 = vunpack.c.l.b16 %v1273
    %v1343 = vunpack.c.h.b16 %v1273
    %v1344 = vunpack.c.l.b16 %v1274
    %v1345 = vunpack.c.h.b16 %v1274
    %v1346 = vunpack.c.l.b16 %v1275
    %v1347 = vunpack.c.h.b16 %v1275
    %v1348 = vpack.c.b16 %v1342, %v1340
    %v1349 = vpack.c.b16 %v1343, %v1341
    %v1350 = vpack.c.b16 %v1346, %v1344
    %v1351 = vpack.c.b16 %v1347, %v1345
    %v1355 = vsel %vm155, %v1324, 0
    %v1358 = vsel %vm155, %v1325, 0
    %v1361 = vsel %vm155, %v1326, 0
    %v1364 = vsel %vm155, %v1327, 0
    %v1367 = vsel %vm155, %v1328, 0
    %v1370 = vsel %vm155, %v1329, 0
    %v1373 = vsel %vm155, %v1330, 0
    %v1376 = vsel %vm155, %v1331, 0
    %v1379 = vsel %vm155, %v1332, 0
    %v1382 = vsel %vm155, %v1333, 0
    %v1385 = vsel %vm155, %v1334, 0
    %v1388 = vsel %vm155, %v1335, 0
    %v1391 = vsel %vm192, %v1350, 0
    %v1394 = vsel %vm192, %v1351, 0
    %1396 = vmatpush.bf16.msra.mxu0 0
    %1397 = vmatpush.bf16.msra.mxu0 0
    %1398 = vmatpush.bf16.msra.mxu0 0
    %1399 = vmatpush.bf16.msra.mxu0 0
    %1400 = vmatpush.bf16.msra.mxu0 0
    %1401 = vmatpush.bf16.msra.mxu0 0
    %1402 = vmatpush.bf16.msra.mxu0 %v1391
    %1403 = vmatpush.bf16.msra.mxu0 %v1348
    %1404 = vmatmul.bf16.gmra.mxu0 %v1355
    %v1405 = vpop.f32.mrf.mxu0
    %v1406 = vadd.f32 0.0, %v1405
    %v1407 = vpop.f32.mrf.mxu0
    %v1408 = vadd.f32 0.0, %v1407
    %1409 = vmatmul.bf16.gmra.mxu0 %v1358
    %v1410 = vpop.f32.mrf.mxu0
    %v1411 = vadd.f32 0.0, %v1410
    %v1412 = vpop.f32.mrf.mxu0
    %v1413 = vadd.f32 0.0, %v1412
    %1414 = vmatmul.bf16.gmra.mxu0 %v1361
    %v1415 = vpop.f32.mrf.mxu0
    %v1416 = vadd.f32 0.0, %v1415
    %v1417 = vpop.f32.mrf.mxu0
    %v1418 = vadd.f32 0.0, %v1417
    %1419 = vmatmul.bf16.gmra.mxu0 %v1364
    %v1420 = vpop.f32.mrf.mxu0
    %v1421 = vadd.f32 0.0, %v1420
    %v1422 = vpop.f32.mrf.mxu0
    %v1423 = vadd.f32 0.0, %v1422
    %1424 = vmatmul.bf16.gmra.mxu0 %v1367
    %v1425 = vpop.f32.mrf.mxu0
    %v1426 = vadd.f32 0.0, %v1425
    %v1427 = vpop.f32.mrf.mxu0
    %v1428 = vadd.f32 0.0, %v1427
    %1429 = vmatmul.bf16.gmra.mxu0 %v1370
    %v1430 = vpop.f32.mrf.mxu0
    %v1431 = vadd.f32 0.0, %v1430
    %v1432 = vpop.f32.mrf.mxu0
    %v1433 = vadd.f32 0.0, %v1432
    %1434 = vmatmul.bf16.gmra.mxu0 %v1373
    %v1435 = vpop.f32.mrf.mxu0
    %v1436 = vadd.f32 0.0, %v1435
    %v1437 = vpop.f32.mrf.mxu0
    %v1438 = vadd.f32 0.0, %v1437
    %1439 = vmatmul.bf16.gmra.mxu0 %v1376
    %v1440 = vpop.f32.mrf.mxu0
    %v1441 = vadd.f32 0.0, %v1440
    %v1442 = vpop.f32.mrf.mxu0
    %v1443 = vadd.f32 0.0, %v1442
    %1444 = vmatmul.bf16.gmra.mxu0 %v1379
    %v1445 = vpop.f32.mrf.mxu0
    %v1446 = vadd.f32 0.0, %v1445
    %v1447 = vpop.f32.mrf.mxu0
    %v1448 = vadd.f32 0.0, %v1447
    %1449 = vmatmul.bf16.gmra.mxu0 %v1382
    %v1450 = vpop.f32.mrf.mxu0
    %v1451 = vadd.f32 0.0, %v1450
    %v1452 = vpop.f32.mrf.mxu0
    %v1453 = vadd.f32 0.0, %v1452
    %1454 = vmatmul.bf16.gmra.mxu0 %v1385
    %v1455 = vpop.f32.mrf.mxu0
    %v1456 = vadd.f32 0.0, %v1455
    %v1457 = vpop.f32.mrf.mxu0
    %v1458 = vadd.f32 0.0, %v1457
    %1459 = vmatmul.bf16.gmra.mxu0 %v1388
    %v1460 = vpop.f32.mrf.mxu0
    %v1461 = vadd.f32 0.0, %v1460
    %v1462 = vpop.f32.mrf.mxu0
    %v1463 = vadd.f32 0.0, %v1462
    %1464 = vdwg.mxu0
    %1465 = vmatpush.bf16.msra.mxu0 0
    %1466 = vmatpush.bf16.msra.mxu0 0
    %1467 = vmatpush.bf16.msra.mxu0 0
    %1468 = vmatpush.bf16.msra.mxu0 0
    %1469 = vmatpush.bf16.msra.mxu0 0
    %1470 = vmatpush.bf16.msra.mxu0 0
    %1471 = vmatpush.bf16.msra.mxu0 %v1394
    %1472 = vmatpush.bf16.msra.mxu0 %v1349
    %1473 = vmatmul.bf16.gmra.mxu0 %v1355
    %v1474 = vpop.f32.mrf.mxu0
    %v1475 = vadd.f32 0.0, %v1474
    %v1476 = vpop.f32.mrf.mxu0
    %v1477 = vadd.f32 0.0, %v1476
    %1478 = vmatmul.bf16.gmra.mxu0 %v1358
    %v1479 = vpop.f32.mrf.mxu0
    %v1480 = vadd.f32 0.0, %v1479
    %v1481 = vpop.f32.mrf.mxu0
    %v1482 = vadd.f32 0.0, %v1481
    %1483 = vmatmul.bf16.gmra.mxu0 %v1361
    %v1484 = vpop.f32.mrf.mxu0
    %v1485 = vadd.f32 0.0, %v1484
    %v1486 = vpop.f32.mrf.mxu0
    %v1487 = vadd.f32 0.0, %v1486
    %1488 = vmatmul.bf16.gmra.mxu0 %v1364
    %v1489 = vpop.f32.mrf.mxu0
    %v1490 = vadd.f32 0.0, %v1489
    %v1491 = vpop.f32.mrf.mxu0
    %v1492 = vadd.f32 0.0, %v1491
    %1493 = vmatmul.bf16.gmra.mxu0 %v1367
    %v1494 = vpop.f32.mrf.mxu0
    %v1495 = vadd.f32 0.0, %v1494
    %v1496 = vpop.f32.mrf.mxu0
    %v1497 = vadd.f32 0.0, %v1496
    %1498 = vmatmul.bf16.gmra.mxu0 %v1370
    %v1499 = vpop.f32.mrf.mxu0
    %v1500 = vadd.f32 0.0, %v1499
    %v1501 = vpop.f32.mrf.mxu0
    %v1502 = vadd.f32 0.0, %v1501
    %1503 = vmatmul.bf16.gmra.mxu0 %v1373
    %v1504 = vpop.f32.mrf.mxu0
    %v1505 = vadd.f32 0.0, %v1504
    %v1506 = vpop.f32.mrf.mxu0
    %v1507 = vadd.f32 0.0, %v1506
    %1508 = vmatmul.bf16.gmra.mxu0 %v1376
    %v1509 = vpop.f32.mrf.mxu0
    %v1510 = vadd.f32 0.0, %v1509
    %v1511 = vpop.f32.mrf.mxu0
    %v1512 = vadd.f32 0.0, %v1511
    %1513 = vmatmul.bf16.gmra.mxu0 %v1379
    %v1514 = vpop.f32.mrf.mxu0
    %v1515 = vadd.f32 0.0, %v1514
    %v1516 = vpop.f32.mrf.mxu0
    %v1517 = vadd.f32 0.0, %v1516
    %1518 = vmatmul.bf16.gmra.mxu0 %v1382
    %v1519 = vpop.f32.mrf.mxu0
    %v1520 = vadd.f32 0.0, %v1519
    %v1521 = vpop.f32.mrf.mxu0
    %v1522 = vadd.f32 0.0, %v1521
    %1523 = vmatmul.bf16.gmra.mxu0 %v1385
    %v1524 = vpop.f32.mrf.mxu0
    %v1525 = vadd.f32 0.0, %v1524
    %v1526 = vpop.f32.mrf.mxu0
    %v1527 = vadd.f32 0.0, %v1526
    %1528 = vmatmul.bf16.gmra.mxu0 %v1388
    %v1529 = vpop.f32.mrf.mxu0
    %v1530 = vadd.f32 0.0, %v1529
    %v1531 = vpop.f32.mrf.mxu0
    %v1532 = vadd.f32 0.0, %v1531
    %1533 = vdwg.mxu0
    %v1534 = vld [vmem:[#allocation2] sm:$0xff]
    %v1535 = vld [vmem:[#allocation2 + $0x8] sm:$0xff]
    %v1536 = vld [vmem:[#allocation2 + $0x10] sm:$0xff]
    %v1537 = vld [vmem:[#allocation2 + $0x18] sm:$0xff]
    %v1538 = vld [vmem:[#allocation2 + $0x20] sm:$0xff]
    %v1539 = vld [vmem:[#allocation2 + $0x28] sm:$0xff]
    %v1540 = vld [vmem:[#allocation2 + $0x30] sm:$0xff]
    %v1541 = vld [vmem:[#allocation2 + $0x38] sm:$0xff]
    %v1542 = vld [vmem:[#allocation2 + $0x40] sm:$0xff]
    %v1543 = vld [vmem:[#allocation2 + $0x48] sm:$0xff]
    %v1544 = vld [vmem:[#allocation2 + $0x50] sm:$0xff]
    %v1545 = vld [vmem:[#allocation2 + $0x58] sm:$0xff]
    %v1546 = vld [vmem:[#allocation2 + $0x60] sm:$0xff]
    %v1547 = vld [vmem:[#allocation2 + $0x68] sm:$0xff]
    %v1548 = vld [vmem:[#allocation2 + $0x70] sm:$0xff]
    %v1549 = vld [vmem:[#allocation2 + $0x78] sm:$0xff]
    %v1550 = vld [vmem:[#allocation2 + $0x80] sm:$0xff]
    %v1551 = vld [vmem:[#allocation2 + $0x88] sm:$0xff]
    %v1552 = vld [vmem:[#allocation2 + $0x90] sm:$0xff]
    %v1553 = vld [vmem:[#allocation2 + $0x98] sm:$0xff]
    %v1554 = vld [vmem:[#allocation2 + $0xa0] sm:$0xff]
    %v1555 = vld [vmem:[#allocation2 + $0xa8] sm:$0xff]
    %v1556 = vld [vmem:[#allocation2 + $0xb0] sm:$0xff]
    %v1557 = vld [vmem:[#allocation2 + $0xb8] sm:$0xff]
    %v1558 = vld [vmem:[#allocation2 + $0xc0] sm:$0xff]
    %v1559 = vld [vmem:[#allocation2 + $0xc8] sm:$0xff]
    %v1560 = vld [vmem:[#allocation2 + $0xd0] sm:$0xff]
    %v1561 = vld [vmem:[#allocation2 + $0xd8] sm:$0xff]
    %v1562 = vld [vmem:[#allocation2 + $0xe0] sm:$0xff]
    %v1563 = vld [vmem:[#allocation2 + $0xe8] sm:$0xff]
    %v1564 = vld [vmem:[#allocation2 + $0xf0] sm:$0xff]
    %v1565 = vld [vmem:[#allocation2 + $0xf8] sm:$0xff]
    %v1566 = vld [vmem:[#allocation2 + $0x100] sm:$0xff]
    %v1567 = vld [vmem:[#allocation2 + $0x108] sm:$0xff]
    %v1568 = vld [vmem:[#allocation2 + $0x110] sm:$0xff]
    %v1569 = vld [vmem:[#allocation2 + $0x118] sm:$0xff]
    %v1570 = vld [vmem:[#allocation2 + $0x120] sm:$0xff]
    %v1571 = vld [vmem:[#allocation2 + $0x128] sm:$0xff]
    %v1572 = vld [vmem:[#allocation2 + $0x130] sm:$0xff]
    %v1573 = vld [vmem:[#allocation2 + $0x138] sm:$0xff]
    %v1574 = vld [vmem:[#allocation2 + $0x140] sm:$0xff]
    %v1575 = vld [vmem:[#allocation2 + $0x148] sm:$0xff]
    %v1576 = vld [vmem:[#allocation2 + $0x150] sm:$0xff]
    %v1577 = vld [vmem:[#allocation2 + $0x158] sm:$0xff]
    %v1578 = vld [vmem:[#allocation2 + $0x160] sm:$0xff]
    %v1579 = vld [vmem:[#allocation2 + $0x168] sm:$0xff]
    %v1580 = vld [vmem:[#allocation2 + $0x170] sm:$0xff]
    %v1581 = vld [vmem:[#allocation2 + $0x178] sm:$0xff]
    %v1582 = vadd.f32 %v1534, %v1406
    %v1583 = vadd.f32 %v1535, %v1475
    %v1584 = vadd.f32 %v1536, %v1408
    %v1585 = vadd.f32 %v1537, %v1477
    %v1586 = vadd.f32 %v1538, %v1411
    %v1587 = vadd.f32 %v1539, %v1480
    %v1588 = vadd.f32 %v1540, %v1413
    %v1589 = vadd.f32 %v1541, %v1482
    %v1590 = vadd.f32 %v1542, %v1416
    %v1591 = vadd.f32 %v1543, %v1485
    %v1592 = vadd.f32 %v1544, %v1418
    %v1593 = vadd.f32 %v1545, %v1487
    %v1594 = vadd.f32 %v1546, %v1421
    %v1595 = vadd.f32 %v1547, %v1490
    %v1596 = vadd.f32 %v1548, %v1423
    %v1597 = vadd.f32 %v1549, %v1492
    %v1598 = vadd.f32 %v1550, %v1426
    %v1599 = vadd.f32 %v1551, %v1495
    %v1600 = vadd.f32 %v1552, %v1428
    %v1601 = vadd.f32 %v1553, %v1497
    %v1602 = vadd.f32 %v1554, %v1431
    %v1603 = vadd.f32 %v1555, %v1500
    %v1604 = vadd.f32 %v1556, %v1433
    %v1605 = vadd.f32 %v1557, %v1502
    %v1606 = vadd.f32 %v1558, %v1436
    %v1607 = vadd.f32 %v1559, %v1505
    %v1608 = vadd.f32 %v1560, %v1438
    %v1609 = vadd.f32 %v1561, %v1507
    %v1610 = vadd.f32 %v1562, %v1441
    %v1611 = vadd.f32 %v1563, %v1510
    %v1612 = vadd.f32 %v1564, %v1443
    %v1613 = vadd.f32 %v1565, %v1512
    %v1614 = vadd.f32 %v1566, %v1446
    %v1615 = vadd.f32 %v1567, %v1515
    %v1616 = vadd.f32 %v1568, %v1448
    %v1617 = vadd.f32 %v1569, %v1517
    %v1618 = vadd.f32 %v1570, %v1451
    %v1619 = vadd.f32 %v1571, %v1520
    %v1620 = vadd.f32 %v1572, %v1453
    %v1621 = vadd.f32 %v1573, %v1522
    %v1622 = vadd.f32 %v1574, %v1456
    %v1623 = vadd.f32 %v1575, %v1525
    %v1624 = vadd.f32 %v1576, %v1458
    %v1625 = vadd.f32 %v1577, %v1527
    %v1626 = vadd.f32 %v1578, %v1461
    %v1627 = vadd.f32 %v1579, %v1530
    %v1628 = vadd.f32 %v1580, %v1463
    %v1629 = vadd.f32 %v1581, %v1532
    %1630 = vst [vmem:[#allocation2] sm:$0xff] %v1582
    %1631 = vst [vmem:[#allocation2 + $0x8] sm:$0xff] %v1583
    %1632 = vst [vmem:[#allocation2 + $0x10] sm:$0xff] %v1584
    %1633 = vst [vmem:[#allocation2 + $0x18] sm:$0xff] %v1585
    %1634 = vst [vmem:[#allocation2 + $0x20] sm:$0xff] %v1586
    %1635 = vst [vmem:[#allocation2 + $0x28] sm:$0xff] %v1587
    %1636 = vst [vmem:[#allocation2 + $0x30] sm:$0xff] %v1588
    %1637 = vst [vmem:[#allocation2 + $0x38] sm:$0xff] %v1589
    %1638 = vst [vmem:[#allocation2 + $0x40] sm:$0xff] %v1590
    %1639 = vst [vmem:[#allocation2 + $0x48] sm:$0xff] %v1591
    %1640 = vst [vmem:[#allocation2 + $0x50] sm:$0xff] %v1592
    %1641 = vst [vmem:[#allocation2 + $0x58] sm:$0xff] %v1593
    %1642 = vst [vmem:[#allocation2 + $0x60] sm:$0xff] %v1594
    %1643 = vst [vmem:[#allocation2 + $0x68] sm:$0xff] %v1595
    %1644 = vst [vmem:[#allocation2 + $0x70] sm:$0xff] %v1596
    %1645 = vst [vmem:[#allocation2 + $0x78] sm:$0xff] %v1597
    %1646 = vst [vmem:[#allocation2 + $0x80] sm:$0xff] %v1598
    %1647 = vst [vmem:[#allocation2 + $0x88] sm:$0xff] %v1599
    %1648 = vst [vmem:[#allocation2 + $0x90] sm:$0xff] %v1600
    %1649 = vst [vmem:[#allocation2 + $0x98] sm:$0xff] %v1601
    %1650 = vst [vmem:[#allocation2 + $0xa0] sm:$0xff] %v1602
    %1651 = vst [vmem:[#allocation2 + $0xa8] sm:$0xff] %v1603
    %1652 = vst [vmem:[#allocation2 + $0xb0] sm:$0xff] %v1604
    %1653 = vst [vmem:[#allocation2 + $0xb8] sm:$0xff] %v1605
    %1654 = vst [vmem:[#allocation2 + $0xc0] sm:$0xff] %v1606
    %1655 = vst [vmem:[#allocation2 + $0xc8] sm:$0xff] %v1607
    %1656 = vst [vmem:[#allocation2 + $0xd0] sm:$0xff] %v1608
    %1657 = vst [vmem:[#allocation2 + $0xd8] sm:$0xff] %v1609
    %1658 = vst [vmem:[#allocation2 + $0xe0] sm:$0xff] %v1610
    %1659 = vst [vmem:[#allocation2 + $0xe8] sm:$0xff] %v1611
    %1660 = vst [vmem:[#allocation2 + $0xf0] sm:$0xff] %v1612
    %1661 = vst [vmem:[#allocation2 + $0xf8] sm:$0xff] %v1613
    %1662 = vst [vmem:[#allocation2 + $0x100] sm:$0xff] %v1614
    %1663 = vst [vmem:[#allocation2 + $0x108] sm:$0xff] %v1615
    %1664 = vst [vmem:[#allocation2 + $0x110] sm:$0xff] %v1616
    %1665 = vst [vmem:[#allocation2 + $0x118] sm:$0xff] %v1617
    %1666 = vst [vmem:[#allocation2 + $0x120] sm:$0xff] %v1618
    %1667 = vst [vmem:[#allocation2 + $0x128] sm:$0xff] %v1619
    %1668 = vst [vmem:[#allocation2 + $0x130] sm:$0xff] %v1620
    %1669 = vst [vmem:[#allocation2 + $0x138] sm:$0xff] %v1621
    %1670 = vst [vmem:[#allocation2 + $0x140] sm:$0xff] %v1622
    %1671 = vst [vmem:[#allocation2 + $0x148] sm:$0xff] %v1623
    %1672 = vst [vmem:[#allocation2 + $0x150] sm:$0xff] %v1624
    %1673 = vst [vmem:[#allocation2 + $0x158] sm:$0xff] %v1625
    %1674 = vst [vmem:[#allocation2 + $0x160] sm:$0xff] %v1626
    %1675 = vst [vmem:[#allocation2 + $0x168] sm:$0xff] %v1627
    %1676 = vst [vmem:[#allocation2 + $0x170] sm:$0xff] %v1628
    %1677 = vst [vmem:[#allocation2 + $0x178] sm:$0xff] %v1629
    %v1678 = vld [vmem:[%s0 + $0x10] sm:$0xf]
    %v1679 = vld [vmem:[%s0 + $0x14] sm:$0xf]
    %v1680 = vld [vmem:[%s0 + $0x18] sm:$0xf]
    %v1681 = vld [vmem:[%s0 + $0x1c] sm:$0xf]
    %v1682 = vld [vmem:[%s0 + $0x20] sm:$0xf]
    %v1683 = vld [vmem:[%s0 + $0x24] sm:$0xf]
    %v1684 = vld [vmem:[%s0 + $0x28] sm:$0xf]
    %v1685 = vld [vmem:[%s0 + $0x2c] sm:$0xf]
    %v1686 = vld [vmem:[%s0 + $0x30] sm:$0xf]
    %v1687 = vld [vmem:[%s0 + $0x34] sm:$0xf]
    %v1688 = vld [vmem:[%s0 + $0x38] sm:$0xf]
    %v1689 = vld [vmem:[%s0 + $0x3c] sm:$0xf]
    %v1690 = vld [vmem:[%s0 + $0x40] sm:$0xf]
    %v1691 = vld [vmem:[%s0 + $0x44] sm:$0xf]
    %v1692 = vld [vmem:[%s0 + $0x48] sm:$0xf]
    %v1693 = vld [vmem:[%s0 + $0x4c] sm:$0xf]
    %v1694 = vld [vmem:[%s0 + $0x50] sm:$0xf]
    %v1695 = vld [vmem:[%s0 + $0x54] sm:$0xf]
    %v1696 = vld [vmem:[%s0 + $0x58] sm:$0xf]
    %v1697 = vld [vmem:[%s0 + $0x5c] sm:$0xf]
    %v1698 = vld [vmem:[%s0 + $0x60] sm:$0xf]
    %v1699 = vld [vmem:[%s0 + $0x64] sm:$0xf]
    %v1700 = vld [vmem:[%s0 + $0x68] sm:$0xf]
    %v1701 = vld [vmem:[%s0 + $0x6c] sm:$0xf]
    %s1702 = scalar_lea.vmem %s1, 128
    %v1703 = vld [vmem:[%s1702] sm:$0xff]
    %v1704 = vld [vmem:[%s1702 + $0x8] sm:$0xff]
    %v1705 = vld [vmem:[%s1702 + $0x10] sm:$0xff]
    %v1706 = vld [vmem:[%s1702 + $0x18] sm:$0x33]
    %v1731 = vunpack.c.l.b16 %v1678
    %v1732 = vunpack.c.l.b16 %v1679
    %v1733 = vunpack.c.l.b16 %v1680
    %v1734 = vunpack.c.l.b16 %v1681
    %v1735 = vunpack.c.l.b16 %v1682
    %v1736 = vunpack.c.l.b16 %v1683
    %v1737 = vunpack.c.l.b16 %v1684
    %v1738 = vunpack.c.l.b16 %v1685
    %v1739 = vunpack.c.l.b16 %v1686
    %v1740 = vunpack.c.l.b16 %v1687
    %v1741 = vunpack.c.l.b16 %v1688
    %v1742 = vunpack.c.l.b16 %v1689
    %v1743 = vunpack.c.l.b16 %v1690
    %v1744 = vunpack.c.l.b16 %v1691
    %v1745 = vunpack.c.l.b16 %v1692
    %v1746 = vunpack.c.l.b16 %v1693
    %v1747 = vunpack.c.l.b16 %v1694
    %v1748 = vunpack.c.l.b16 %v1695
    %v1749 = vunpack.c.l.b16 %v1696
    %v1750 = vunpack.c.l.b16 %v1697
    %v1751 = vunpack.c.l.b16 %v1698
    %v1752 = vunpack.c.l.b16 %v1699
    %v1753 = vunpack.c.l.b16 %v1700
    %v1754 = vunpack.c.l.b16 %v1701
    %v1755 = vpack.c.b16 %v1732, %v1731
    %v1756 = vpack.c.b16 %v1734, %v1733
    %v1757 = vpack.c.b16 %v1736, %v1735
    %v1758 = vpack.c.b16 %v1738, %v1737
    %v1759 = vpack.c.b16 %v1740, %v1739
    %v1760 = vpack.c.b16 %v1742, %v1741
    %v1761 = vpack.c.b16 %v1744, %v1743
    %v1762 = vpack.c.b16 %v1746, %v1745
    %v1763 = vpack.c.b16 %v1748, %v1747
    %v1764 = vpack.c.b16 %v1750, %v1749
    %v1765 = vpack.c.b16 %v1752, %v1751
    %v1766 = vpack.c.b16 %v1754, %v1753
    %v1771 = vunpack.c.l.b16 %v1703
    %v1772 = vunpack.c.h.b16 %v1703
    %v1773 = vunpack.c.l.b16 %v1704
    %v1774 = vunpack.c.h.b16 %v1704
    %v1775 = vunpack.c.l.b16 %v1705
    %v1776 = vunpack.c.h.b16 %v1705
    %v1777 = vunpack.c.l.b16 %v1706
    %v1778 = vunpack.c.h.b16 %v1706
    %v1779 = vpack.c.b16 %v1773, %v1771
    %v1780 = vpack.c.b16 %v1774, %v1772
    %v1781 = vpack.c.b16 %v1777, %v1775
    %v1782 = vpack.c.b16 %v1778, %v1776
    %v1786 = vsel %vm155, %v1755, 0
    %v1789 = vsel %vm155, %v1756, 0
    %v1792 = vsel %vm155, %v1757, 0
    %v1795 = vsel %vm155, %v1758, 0
    %v1798 = vsel %vm155, %v1759, 0
    %v1801 = vsel %vm155, %v1760, 0
    %v1804 = vsel %vm155, %v1761, 0
    %v1807 = vsel %vm155, %v1762, 0
    %v1810 = vsel %vm155, %v1763, 0
    %v1813 = vsel %vm155, %v1764, 0
    %v1816 = vsel %vm155, %v1765, 0
    %v1819 = vsel %vm155, %v1766, 0
    %v1822 = vsel %vm192, %v1781, 0
    %v1825 = vsel %vm192, %v1782, 0
    %1827 = vmatpush.bf16.msra.mxu0 0
    %1828 = vmatpush.bf16.msra.mxu0 0
    %1829 = vmatpush.bf16.msra.mxu0 0
    %1830 = vmatpush.bf16.msra.mxu0 0
    %1831 = vmatpush.bf16.msra.mxu0 0
    %1832 = vmatpush.bf16.msra.mxu0 0
    %1833 = vmatpush.bf16.msra.mxu0 %v1822
    %1834 = vmatpush.bf16.msra.mxu0 %v1779
    %1835 = vmatmul.bf16.gmra.mxu0 %v1786
    %v1836 = vpop.f32.mrf.mxu0
    %v1837 = vadd.f32 0.0, %v1836
    %v1838 = vpop.f32.mrf.mxu0
    %v1839 = vadd.f32 0.0, %v1838
    %1840 = vmatmul.bf16.gmra.mxu0 %v1789
    %v1841 = vpop.f32.mrf.mxu0
    %v1842 = vadd.f32 0.0, %v1841
    %v1843 = vpop.f32.mrf.mxu0
    %v1844 = vadd.f32 0.0, %v1843
    %1845 = vmatmul.bf16.gmra.mxu0 %v1792
    %v1846 = vpop.f32.mrf.mxu0
    %v1847 = vadd.f32 0.0, %v1846
    %v1848 = vpop.f32.mrf.mxu0
    %v1849 = vadd.f32 0.0, %v1848
    %1850 = vmatmul.bf16.gmra.mxu0 %v1795
    %v1851 = vpop.f32.mrf.mxu0
    %v1852 = vadd.f32 0.0, %v1851
    %v1853 = vpop.f32.mrf.mxu0
    %v1854 = vadd.f32 0.0, %v1853
    %1855 = vmatmul.bf16.gmra.mxu0 %v1798
    %v1856 = vpop.f32.mrf.mxu0
    %v1857 = vadd.f32 0.0, %v1856
    %v1858 = vpop.f32.mrf.mxu0
    %v1859 = vadd.f32 0.0, %v1858
    %1860 = vmatmul.bf16.gmra.mxu0 %v1801
    %v1861 = vpop.f32.mrf.mxu0
    %v1862 = vadd.f32 0.0, %v1861
    %v1863 = vpop.f32.mrf.mxu0
    %v1864 = vadd.f32 0.0, %v1863
    %1865 = vmatmul.bf16.gmra.mxu0 %v1804
    %v1866 = vpop.f32.mrf.mxu0
    %v1867 = vadd.f32 0.0, %v1866
    %v1868 = vpop.f32.mrf.mxu0
    %v1869 = vadd.f32 0.0, %v1868
    %1870 = vmatmul.bf16.gmra.mxu0 %v1807
    %v1871 = vpop.f32.mrf.mxu0
    %v1872 = vadd.f32 0.0, %v1871
    %v1873 = vpop.f32.mrf.mxu0
    %v1874 = vadd.f32 0.0, %v1873
    %1875 = vmatmul.bf16.gmra.mxu0 %v1810
    %v1876 = vpop.f32.mrf.mxu0
    %v1877 = vadd.f32 0.0, %v1876
    %v1878 = vpop.f32.mrf.mxu0
    %v1879 = vadd.f32 0.0, %v1878
    %1880 = vmatmul.bf16.gmra.mxu0 %v1813
    %v1881 = vpop.f32.mrf.mxu0
    %v1882 = vadd.f32 0.0, %v1881
    %v1883 = vpop.f32.mrf.mxu0
    %v1884 = vadd.f32 0.0, %v1883
    %1885 = vmatmul.bf16.gmra.mxu0 %v1816
    %v1886 = vpop.f32.mrf.mxu0
    %v1887 = vadd.f32 0.0, %v1886
    %v1888 = vpop.f32.mrf.mxu0
    %v1889 = vadd.f32 0.0, %v1888
    %1890 = vmatmul.bf16.gmra.mxu0 %v1819
    %v1891 = vpop.f32.mrf.mxu0
    %v1892 = vadd.f32 0.0, %v1891
    %v1893 = vpop.f32.mrf.mxu0
    %v1894 = vadd.f32 0.0, %v1893
    %1895 = vdwg.mxu0
    %1896 = vmatpush.bf16.msra.mxu0 0
    %1897 = vmatpush.bf16.msra.mxu0 0
    %1898 = vmatpush.bf16.msra.mxu0 0
    %1899 = vmatpush.bf16.msra.mxu0 0
    %1900 = vmatpush.bf16.msra.mxu0 0
    %1901 = vmatpush.bf16.msra.mxu0 0
    %1902 = vmatpush.bf16.msra.mxu0 %v1825
    %1903 = vmatpush.bf16.msra.mxu0 %v1780
    %1904 = vmatmul.bf16.gmra.mxu0 %v1786
    %v1905 = vpop.f32.mrf.mxu0
    %v1906 = vadd.f32 0.0, %v1905
    %v1907 = vpop.f32.mrf.mxu0
    %v1908 = vadd.f32 0.0, %v1907
    %1909 = vmatmul.bf16.gmra.mxu0 %v1789
    %v1910 = vpop.f32.mrf.mxu0
    %v1911 = vadd.f32 0.0, %v1910
    %v1912 = vpop.f32.mrf.mxu0
    %v1913 = vadd.f32 0.0, %v1912
    %1914 = vmatmul.bf16.gmra.mxu0 %v1792
    %v1915 = vpop.f32.mrf.mxu0
    %v1916 = vadd.f32 0.0, %v1915
    %v1917 = vpop.f32.mrf.mxu0
    %v1918 = vadd.f32 0.0, %v1917
    %1919 = vmatmul.bf16.gmra.mxu0 %v1795
    %v1920 = vpop.f32.mrf.mxu0
    %v1921 = vadd.f32 0.0, %v1920
    %v1922 = vpop.f32.mrf.mxu0
    %v1923 = vadd.f32 0.0, %v1922
    %1924 = vmatmul.bf16.gmra.mxu0 %v1798
    %v1925 = vpop.f32.mrf.mxu0
    %v1926 = vadd.f32 0.0, %v1925
    %v1927 = vpop.f32.mrf.mxu0
    %v1928 = vadd.f32 0.0, %v1927
    %1929 = vmatmul.bf16.gmra.mxu0 %v1801
    %v1930 = vpop.f32.mrf.mxu0
    %v1931 = vadd.f32 0.0, %v1930
    %v1932 = vpop.f32.mrf.mxu0
    %v1933 = vadd.f32 0.0, %v1932
    %1934 = vmatmul.bf16.gmra.mxu0 %v1804
    %v1935 = vpop.f32.mrf.mxu0
    %v1936 = vadd.f32 0.0, %v1935
    %v1937 = vpop.f32.mrf.mxu0
    %v1938 = vadd.f32 0.0, %v1937
    %1939 = vmatmul.bf16.gmra.mxu0 %v1807
    %v1940 = vpop.f32.mrf.mxu0
    %v1941 = vadd.f32 0.0, %v1940
    %v1942 = vpop.f32.mrf.mxu0
    %v1943 = vadd.f32 0.0, %v1942
    %1944 = vmatmul.bf16.gmra.mxu0 %v1810
    %v1945 = vpop.f32.mrf.mxu0
    %v1946 = vadd.f32 0.0, %v1945
    %v1947 = vpop.f32.mrf.mxu0
    %v1948 = vadd.f32 0.0, %v1947
    %1949 = vmatmul.bf16.gmra.mxu0 %v1813
    %v1950 = vpop.f32.mrf.mxu0
    %v1951 = vadd.f32 0.0, %v1950
    %v1952 = vpop.f32.mrf.mxu0
    %v1953 = vadd.f32 0.0, %v1952
    %1954 = vmatmul.bf16.gmra.mxu0 %v1816
    %v1955 = vpop.f32.mrf.mxu0
    %v1956 = vadd.f32 0.0, %v1955
    %v1957 = vpop.f32.mrf.mxu0
    %v1958 = vadd.f32 0.0, %v1957
    %1959 = vmatmul.bf16.gmra.mxu0 %v1819
    %v1960 = vpop.f32.mrf.mxu0
    %v1961 = vadd.f32 0.0, %v1960
    %v1962 = vpop.f32.mrf.mxu0
    %v1963 = vadd.f32 0.0, %v1962
    %1964 = vdwg.mxu0
    %v1965 = vld [vmem:[#allocation2] sm:$0xff]
    %v1966 = vld [vmem:[#allocation2 + $0x8] sm:$0xff]
    %v1967 = vld [vmem:[#allocation2 + $0x10] sm:$0xff]
    %v1968 = vld [vmem:[#allocation2 + $0x18] sm:$0xff]
    %v1969 = vld [vmem:[#allocation2 + $0x20] sm:$0xff]
    %v1970 = vld [vmem:[#allocation2 + $0x28] sm:$0xff]
    %v1971 = vld [vmem:[#allocation2 + $0x30] sm:$0xff]
    %v1972 = vld [vmem:[#allocation2 + $0x38] sm:$0xff]
    %v1973 = vld [vmem:[#allocation2 + $0x40] sm:$0xff]
    %v1974 = vld [vmem:[#allocation2 + $0x48] sm:$0xff]
    %v1975 = vld [vmem:[#allocation2 + $0x50] sm:$0xff]
    %v1976 = vld [vmem:[#allocation2 + $0x58] sm:$0xff]
    %v1977 = vld [vmem:[#allocation2 + $0x60] sm:$0xff]
    %v1978 = vld [vmem:[#allocation2 + $0x68] sm:$0xff]
    %v1979 = vld [vmem:[#allocation2 + $0x70] sm:$0xff]
    %v1980 = vld [vmem:[#allocation2 + $0x78] sm:$0xff]
    %v1981 = vld [vmem:[#allocation2 + $0x80] sm:$0xff]
    %v1982 = vld [vmem:[#allocation2 + $0x88] sm:$0xff]
    %v1983 = vld [vmem:[#allocation2 + $0x90] sm:$0xff]
    %v1984 = vld [vmem:[#allocation2 + $0x98] sm:$0xff]
    %v1985 = vld [vmem:[#allocation2 + $0xa0] sm:$0xff]
    %v1986 = vld [vmem:[#allocation2 + $0xa8] sm:$0xff]
    %v1987 = vld [vmem:[#allocation2 + $0xb0] sm:$0xff]
    %v1988 = vld [vmem:[#allocation2 + $0xb8] sm:$0xff]
    %v1989 = vld [vmem:[#allocation2 + $0xc0] sm:$0xff]
    %v1990 = vld [vmem:[#allocation2 + $0xc8] sm:$0xff]
    %v1991 = vld [vmem:[#allocation2 + $0xd0] sm:$0xff]
    %v1992 = vld [vmem:[#allocation2 + $0xd8] sm:$0xff]
    %v1993 = vld [vmem:[#allocation2 + $0xe0] sm:$0xff]
    %v1994 = vld [vmem:[#allocation2 + $0xe8] sm:$0xff]
    %v1995 = vld [vmem:[#allocation2 + $0xf0] sm:$0xff]
    %v1996 = vld [vmem:[#allocation2 + $0xf8] sm:$0xff]
    %v1997 = vld [vmem:[#allocation2 + $0x100] sm:$0xff]
    %v1998 = vld [vmem:[#allocation2 + $0x108] sm:$0xff]
    %v1999 = vld [vmem:[#allocation2 + $0x110] sm:$0xff]
    %v2000 = vld [vmem:[#allocation2 + $0x118] sm:$0xff]
    %v2001 = vld [vmem:[#allocation2 + $0x120] sm:$0xff]
    %v2002 = vld [vmem:[#allocation2 + $0x128] sm:$0xff]
    %v2003 = vld [vmem:[#allocation2 + $0x130] sm:$0xff]
    %v2004 = vld [vmem:[#allocation2 + $0x138] sm:$0xff]
    %v2005 = vld [vmem:[#allocation2 + $0x140] sm:$0xff]
    %v2006 = vld [vmem:[#allocation2 + $0x148] sm:$0xff]
    %v2007 = vld [vmem:[#allocation2 + $0x150] sm:$0xff]
    %v2008 = vld [vmem:[#allocation2 + $0x158] sm:$0xff]
    %v2009 = vld [vmem:[#allocation2 + $0x160] sm:$0xff]
    %v2010 = vld [vmem:[#allocation2 + $0x168] sm:$0xff]
    %v2011 = vld [vmem:[#allocation2 + $0x170] sm:$0xff]
    %v2012 = vld [vmem:[#allocation2 + $0x178] sm:$0xff]
    %v2013 = vadd.f32 %v1965, %v1837
    %v2014 = vadd.f32 %v1966, %v1906
    %v2015 = vadd.f32 %v1967, %v1839
    %v2016 = vadd.f32 %v1968, %v1908
    %v2017 = vadd.f32 %v1969, %v1842
    %v2018 = vadd.f32 %v1970, %v1911
    %v2019 = vadd.f32 %v1971, %v1844
    %v2020 = vadd.f32 %v1972, %v1913
    %v2021 = vadd.f32 %v1973, %v1847
    %v2022 = vadd.f32 %v1974, %v1916
    %v2023 = vadd.f32 %v1975, %v1849
    %v2024 = vadd.f32 %v1976, %v1918
    %v2025 = vadd.f32 %v1977, %v1852
    %v2026 = vadd.f32 %v1978, %v1921
    %v2027 = vadd.f32 %v1979, %v1854
    %v2028 = vadd.f32 %v1980, %v1923
    %v2029 = vadd.f32 %v1981, %v1857
    %v2030 = vadd.f32 %v1982, %v1926
    %v2031 = vadd.f32 %v1983, %v1859
    %v2032 = vadd.f32 %v1984, %v1928
    %v2033 = vadd.f32 %v1985, %v1862
    %v2034 = vadd.f32 %v1986, %v1931
    %v2035 = vadd.f32 %v1987, %v1864
    %v2036 = vadd.f32 %v1988, %v1933
    %v2037 = vadd.f32 %v1989, %v1867
    %v2038 = vadd.f32 %v1990, %v1936
    %v2039 = vadd.f32 %v1991, %v1869
    %v2040 = vadd.f32 %v1992, %v1938
    %v2041 = vadd.f32 %v1993, %v1872
    %v2042 = vadd.f32 %v1994, %v1941
    %v2043 = vadd.f32 %v1995, %v1874
    %v2044 = vadd.f32 %v1996, %v1943
    %v2045 = vadd.f32 %v1997, %v1877
    %v2046 = vadd.f32 %v1998, %v1946
    %v2047 = vadd.f32 %v1999, %v1879
    %v2048 = vadd.f32 %v2000, %v1948
    %v2049 = vadd.f32 %v2001, %v1882
    %v2050 = vadd.f32 %v2002, %v1951
    %v2051 = vadd.f32 %v2003, %v1884
    %v2052 = vadd.f32 %v2004, %v1953
    %v2053 = vadd.f32 %v2005, %v1887
    %v2054 = vadd.f32 %v2006, %v1956
    %v2055 = vadd.f32 %v2007, %v1889
    %v2056 = vadd.f32 %v2008, %v1958
    %v2057 = vadd.f32 %v2009, %v1892
    %v2058 = vadd.f32 %v2010, %v1961
    %v2059 = vadd.f32 %v2011, %v1894
    %v2060 = vadd.f32 %v2012, %v1963
    %2061 = vst [vmem:[#allocation2] sm:$0xff] %v2013
    %2062 = vst [vmem:[#allocation2 + $0x8] sm:$0xff] %v2014
    %2063 = vst [vmem:[#allocation2 + $0x10] sm:$0xff] %v2015
    %2064 = vst [vmem:[#allocation2 + $0x18] sm:$0xff] %v2016
    %2065 = vst [vmem:[#allocation2 + $0x20] sm:$0xff] %v2017
    %2066 = vst [vmem:[#allocation2 + $0x28] sm:$0xff] %v2018
    %2067 = vst [vmem:[#allocation2 + $0x30] sm:$0xff] %v2019
    %2068 = vst [vmem:[#allocation2 + $0x38] sm:$0xff] %v2020
    %2069 = vst [vmem:[#allocation2 + $0x40] sm:$0xff] %v2021
    %2070 = vst [vmem:[#allocation2 + $0x48] sm:$0xff] %v2022
    %2071 = vst [vmem:[#allocation2 + $0x50] sm:$0xff] %v2023
    %2072 = vst [vmem:[#allocation2 + $0x58] sm:$0xff] %v2024
    %2073 = vst [vmem:[#allocation2 + $0x60] sm:$0xff] %v2025
    %2074 = vst [vmem:[#allocation2 + $0x68] sm:$0xff] %v2026
    %2075 = vst [vmem:[#allocation2 + $0x70] sm:$0xff] %v2027
    %2076 = vst [vmem:[#allocation2 + $0x78] sm:$0xff] %v2028
    %2077 = vst [vmem:[#allocation2 + $0x80] sm:$0xff] %v2029
    %2078 = vst [vmem:[#allocation2 + $0x88] sm:$0xff] %v2030
    %2079 = vst [vmem:[#allocation2 + $0x90] sm:$0xff] %v2031
    %2080 = vst [vmem:[#allocation2 + $0x98] sm:$0xff] %v2032
    %2081 = vst [vmem:[#allocation2 + $0xa0] sm:$0xff] %v2033
    %2082 = vst [vmem:[#allocation2 + $0xa8] sm:$0xff] %v2034
    %2083 = vst [vmem:[#allocation2 + $0xb0] sm:$0xff] %v2035
    %2084 = vst [vmem:[#allocation2 + $0xb8] sm:$0xff] %v2036
    %2085 = vst [vmem:[#allocation2 + $0xc0] sm:$0xff] %v2037
    %2086 = vst [vmem:[#allocation2 + $0xc8] sm:$0xff] %v2038
    %2087 = vst [vmem:[#allocation2 + $0xd0] sm:$0xff] %v2039
    %2088 = vst [vmem:[#allocation2 + $0xd8] sm:$0xff] %v2040
    %2089 = vst [vmem:[#allocation2 + $0xe0] sm:$0xff] %v2041
    %2090 = vst [vmem:[#allocation2 + $0xe8] sm:$0xff] %v2042
    %2091 = vst [vmem:[#allocation2 + $0xf0] sm:$0xff] %v2043
    %2092 = vst [vmem:[#allocation2 + $0xf8] sm:$0xff] %v2044
    %2093 = vst [vmem:[#allocation2 + $0x100] sm:$0xff] %v2045
    %2094 = vst [vmem:[#allocation2 + $0x108] sm:$0xff] %v2046
    %2095 = vst [vmem:[#allocation2 + $0x110] sm:$0xff] %v2047
    %2096 = vst [vmem:[#allocation2 + $0x118] sm:$0xff] %v2048
    %2097 = vst [vmem:[#allocation2 + $0x120] sm:$0xff] %v2049
    %2098 = vst [vmem:[#allocation2 + $0x128] sm:$0xff] %v2050
    %2099 = vst [vmem:[#allocation2 + $0x130] sm:$0xff] %v2051
    %2100 = vst [vmem:[#allocation2 + $0x138] sm:$0xff] %v2052
    %2101 = vst [vmem:[#allocation2 + $0x140] sm:$0xff] %v2053
    %2102 = vst [vmem:[#allocation2 + $0x148] sm:$0xff] %v2054
    %2103 = vst [vmem:[#allocation2 + $0x150] sm:$0xff] %v2055
    %2104 = vst [vmem:[#allocation2 + $0x158] sm:$0xff] %v2056
    %2105 = vst [vmem:[#allocation2 + $0x160] sm:$0xff] %v2057
    %2106 = vst [vmem:[#allocation2 + $0x168] sm:$0xff] %v2058
    %2107 = vst [vmem:[#allocation2 + $0x170] sm:$0xff] %v2059
    %2108 = vst [vmem:[#allocation2 + $0x178] sm:$0xff] %v2060
    %v2109 = vld [vmem:[#allocation2] sm:$0xff]
    %v2110 = vld [vmem:[#allocation2 + $0x10] sm:$0xff]
    %v2111 = vld [vmem:[#allocation2 + $0x20] sm:$0xff]
    %v2112 = vld [vmem:[#allocation2 + $0x30] sm:$0xff]
    %v2113 = vld [vmem:[#allocation2 + $0x40] sm:$0xff]
    %v2114 = vld [vmem:[#allocation2 + $0x50] sm:$0xff]
    %v2115 = vld [vmem:[#allocation2 + $0x60] sm:$0xff]
    %v2116 = vld [vmem:[#allocation2 + $0x70] sm:$0xff]
    %v2117 = vld [vmem:[#allocation2 + $0x80] sm:$0xff]
    %v2118 = vld [vmem:[#allocation2 + $0x90] sm:$0xff]
    %v2119 = vld [vmem:[#allocation2 + $0xa0] sm:$0xff]
    %v2120 = vld [vmem:[#allocation2 + $0xb0] sm:$0xff]
    %v2121 = vld [vmem:[#allocation2 + $0xc0] sm:$0xff]
    %v2122 = vld [vmem:[#allocation2 + $0xd0] sm:$0xff]
    %v2123 = vld [vmem:[#allocation2 + $0xe0] sm:$0xff]
    %v2124 = vld [vmem:[#allocation2 + $0xf0] sm:$0xff]
    %v2125 = vld [vmem:[#allocation2 + $0x100] sm:$0xff]
    %v2126 = vld [vmem:[#allocation2 + $0x110] sm:$0xff]
    %v2127 = vld [vmem:[#allocation2 + $0x120] sm:$0xff]
    %v2128 = vld [vmem:[#allocation2 + $0x130] sm:$0xff]
    %v2129 = vld [vmem:[#allocation2 + $0x140] sm:$0xff]
    %v2130 = vld [vmem:[#allocation2 + $0x150] sm:$0xff]
    %v2131 = vld [vmem:[#allocation2 + $0x160] sm:$0xff]
    %v2132 = vld [vmem:[#allocation2 + $0x170] sm:$0xff]
    %v2133 = vld [vmem:[#allocation2 + $0x8] sm:$0xff]
    %v2134 = vld [vmem:[#allocation2 + $0x18] sm:$0xff]
    %v2135 = vld [vmem:[#allocation2 + $0x28] sm:$0xff]
    %v2136 = vld [vmem:[#allocation2 + $0x38] sm:$0xff]
    %v2137 = vld [vmem:[#allocation2 + $0x48] sm:$0xff]
    %v2138 = vld [vmem:[#allocation2 + $0x58] sm:$0xff]
    %v2139 = vld [vmem:[#allocation2 + $0x68] sm:$0xff]
    %v2140 = vld [vmem:[#allocation2 + $0x78] sm:$0xff]
    %v2141 = vld [vmem:[#allocation2 + $0x88] sm:$0xff]
    %v2142 = vld [vmem:[#allocation2 + $0x98] sm:$0xff]
    %v2143 = vld [vmem:[#allocation2 + $0xa8] sm:$0xff]
    %v2144 = vld [vmem:[#allocation2 + $0xb8] sm:$0xff]
    %v2145 = vld [vmem:[#allocation2 + $0xc8] sm:$0xff]
    %v2146 = vld [vmem:[#allocation2 + $0xd8] sm:$0xff]
    %v2147 = vld [vmem:[#allocation2 + $0xe8] sm:$0xff]
    %v2148 = vld [vmem:[#allocation2 + $0xf8] sm:$0xff]
    %v2149 = vld [vmem:[#allocation2 + $0x108] sm:$0xff]
    %v2150 = vld [vmem:[#allocation2 + $0x118] sm:$0xff]
    %v2151 = vld [vmem:[#allocation2 + $0x128] sm:$0xff]
    %v2152 = vld [vmem:[#allocation2 + $0x138] sm:$0xff]
    %v2153 = vld [vmem:[#allocation2 + $0x148] sm:$0xff]
    %v2154 = vld [vmem:[#allocation2 + $0x158] sm:$0xff]
    %v2155 = vld [vmem:[#allocation2 + $0x168] sm:$0xff]
    %v2156 = vld [vmem:[#allocation2 + $0x178] sm:$0xff]
    %v2157 = vmax.f32 %v2109, %v2133
    %v2158 = vmax.f32 %v2110, %v2134
    %v2159 = vmax.f32 %v2111, %v2135
    %v2160 = vmax.f32 %v2112, %v2136
    %v2161 = vmax.f32 %v2113, %v2137
    %v2162 = vmax.f32 %v2114, %v2138
    %v2163 = vmax.f32 %v2115, %v2139
    %v2164 = vmax.f32 %v2116, %v2140
    %v2165 = vmax.f32 %v2117, %v2141
    %v2166 = vmax.f32 %v2118, %v2142
    %v2167 = vmax.f32 %v2119, %v2143
    %v2168 = vmax.f32 %v2120, %v2144
    %v2169 = vmax.f32 %v2121, %v2145
    %v2170 = vmax.f32 %v2122, %v2146
    %v2171 = vmax.f32 %v2123, %v2147
    %v2172 = vmax.f32 %v2124, %v2148
    %v2173 = vmax.f32 %v2125, %v2149
    %v2174 = vmax.f32 %v2126, %v2150
    %v2175 = vmax.f32 %v2127, %v2151
    %v2176 = vmax.f32 %v2128, %v2152
    %v2177 = vmax.f32 %v2129, %v2153
    %v2178 = vmax.f32 %v2130, %v2154
    %v2179 = vmax.f32 %v2131, %v2155
    %v2180 = vmax.f32 %v2132, %v2156
    %v2181 = vmax.f32 %v2157, %v2158
    %v2182 = vmax.f32 %v2159, %v2160
    %v2183 = vmax.f32 %v2161, %v2162
    %v2184 = vmax.f32 %v2163, %v2164
    %v2185 = vmax.f32 %v2165, %v2166
    %v2186 = vmax.f32 %v2167, %v2168
    %v2187 = vmax.f32 %v2169, %v2170
    %v2188 = vmax.f32 %v2171, %v2172
    %v2189 = vmax.f32 %v2173, %v2174
    %v2190 = vmax.f32 %v2175, %v2176
    %v2191 = vmax.f32 %v2177, %v2178
    %v2192 = vmax.f32 %v2179, %v2180
    %v2193 = vld [vmem:[%s2] sm:$0x1]
    %v2195 = vperm.slane %v2193, 0
    %v2197 = vadd.f32 %v2181, %v2195
    %v2198 = vadd.f32 %v2182, %v2195
    %v2199 = vadd.f32 %v2183, %v2195
    %v2200 = vadd.f32 %v2184, %v2195
    %v2201 = vadd.f32 %v2185, %v2195
    %v2202 = vadd.f32 %v2186, %v2195
    %v2203 = vadd.f32 %v2187, %v2195
    %v2204 = vadd.f32 %v2188, %v2195
    %v2205 = vadd.f32 %v2189, %v2195
    %v2206 = vadd.f32 %v2190, %v2195
    %v2207 = vadd.f32 %v2191, %v2195
    %v2208 = vadd.f32 %v2192, %v2195
    %v2209 = vmax.f32 %v2197, 0.0
    %v2210 = vmax.f32 %v2198, 0.0
    %v2211 = vmax.f32 %v2199, 0.0
    %v2212 = vmax.f32 %v2200, 0.0
    %v2213 = vmax.f32 %v2201, 0.0
    %v2214 = vmax.f32 %v2202, 0.0
    %v2215 = vmax.f32 %v2203, 0.0
    %v2216 = vmax.f32 %v2204, 0.0
    %v2217 = vmax.f32 %v2205, 0.0
    %v2218 = vmax.f32 %v2206, 0.0
    %v2219 = vmax.f32 %v2207, 0.0
    %v2220 = vmax.f32 %v2208, 0.0
    %v2221 = vpack.c.bf16 %v2209, %v2209
    %v2222 = vpack.c.bf16 %v2210, %v2210
    %v2223 = vpack.c.bf16 %v2211, %v2211
    %v2224 = vpack.c.bf16 %v2212, %v2212
    %v2225 = vpack.c.bf16 %v2213, %v2213
    %v2226 = vpack.c.bf16 %v2214, %v2214
    %v2227 = vpack.c.bf16 %v2215, %v2215
    %v2228 = vpack.c.bf16 %v2216, %v2216
    %v2229 = vpack.c.bf16 %v2217, %v2217
    %v2230 = vpack.c.bf16 %v2218, %v2218
    %v2231 = vpack.c.bf16 %v2219, %v2219
    %v2232 = vpack.c.bf16 %v2220, %v2220
    %v2233 = vld [vmem:[#allocation4] sm:$0xff]
    %v2234 = vld [vmem:[#allocation4 + $0x8] sm:$0xff]
    %v2235 = vld [vmem:[#allocation4 + $0x10] sm:$0xff]
    %v2236 = vld [vmem:[#allocation4 + $0x18] sm:$0xff]
    %v2237 = vld [vmem:[#allocation4 + $0x20] sm:$0xff]
    %v2238 = vld [vmem:[#allocation4 + $0x28] sm:$0xff]
    %v2239 = vld [vmem:[#allocation4 + $0x30] sm:$0xff]
    %v2240 = vld [vmem:[#allocation4 + $0x38] sm:$0xff]
    %v2241 = vld [vmem:[#allocation4 + $0x40] sm:$0xff]
    %v2242 = vld [vmem:[#allocation4 + $0x48] sm:$0xff]
    %v2243 = vld [vmem:[#allocation4 + $0x50] sm:$0xff]
    %v2244 = vld [vmem:[#allocation4 + $0x58] sm:$0xff]
    %v2245 = vld [vmem:[#allocation4 + $0x60] sm:$0xff]
    %v2246 = vld [vmem:[#allocation4 + $0x68] sm:$0xff]
    %v2247 = vld [vmem:[#allocation4 + $0x70] sm:$0xff]
    %v2248 = vld [vmem:[#allocation4 + $0x78] sm:$0xff]
    %v2257 = vunpack.c.l.b16 %v2221
    %v2258 = vunpack.c.l.b16 %v2222
    %v2259 = vunpack.c.l.b16 %v2223
    %v2260 = vunpack.c.l.b16 %v2224
    %v2261 = vunpack.c.l.b16 %v2225
    %v2262 = vunpack.c.l.b16 %v2226
    %v2263 = vunpack.c.l.b16 %v2227
    %v2264 = vunpack.c.l.b16 %v2228
    %v2265 = vpack.c.b16 %v2258, %v2257
    %v2266 = vpack.c.b16 %v2260, %v2259
    %v2267 = vpack.c.b16 %v2262, %v2261
    %v2268 = vpack.c.b16 %v2264, %v2263
    %v2289 = vunpack.c.l.b16 %v2233
    %v2290 = vunpack.c.h.b16 %v2233
    %v2291 = vunpack.c.l.b16 %v2234
    %v2292 = vunpack.c.h.b16 %v2234
    %v2293 = vunpack.c.l.b16 %v2235
    %v2294 = vunpack.c.h.b16 %v2235
    %v2295 = vunpack.c.l.b16 %v2236
    %v2296 = vunpack.c.h.b16 %v2236
    %v2297 = vunpack.c.l.b16 %v2237
    %v2298 = vunpack.c.h.b16 %v2237
    %v2299 = vunpack.c.l.b16 %v2238
    %v2300 = vunpack.c.h.b16 %v2238
    %v2301 = vunpack.c.l.b16 %v2239
    %v2302 = vunpack.c.h.b16 %v2239
    %v2303 = vunpack.c.l.b16 %v2240
    %v2304 = vunpack.c.h.b16 %v2240
    %v2305 = vunpack.c.l.b16 %v2241
    %v2306 = vunpack.c.h.b16 %v2241
    %v2307 = vunpack.c.l.b16 %v2242
    %v2308 = vunpack.c.h.b16 %v2242
    %v2309 = vunpack.c.l.b16 %v2243
    %v2310 = vunpack.c.h.b16 %v2243
    %v2311 = vunpack.c.l.b16 %v2244
    %v2312 = vunpack.c.h.b16 %v2244
    %v2313 = vunpack.c.l.b16 %v2245
    %v2314 = vunpack.c.h.b16 %v2245
    %v2315 = vunpack.c.l.b16 %v2246
    %v2316 = vunpack.c.h.b16 %v2246
    %v2317 = vunpack.c.l.b16 %v2247
    %v2318 = vunpack.c.h.b16 %v2247
    %v2319 = vunpack.c.l.b16 %v2248
    %v2320 = vunpack.c.h.b16 %v2248
    %v2321 = vpack.c.b16 %v2291, %v2289
    %v2322 = vpack.c.b16 %v2292, %v2290
    %v2323 = vpack.c.b16 %v2295, %v2293
    %v2324 = vpack.c.b16 %v2296, %v2294
    %v2325 = vpack.c.b16 %v2299, %v2297
    %v2326 = vpack.c.b16 %v2300, %v2298
    %v2327 = vpack.c.b16 %v2303, %v2301
    %v2328 = vpack.c.b16 %v2304, %v2302
    %v2329 = vpack.c.b16 %v2307, %v2305
    %v2330 = vpack.c.b16 %v2308, %v2306
    %v2331 = vpack.c.b16 %v2311, %v2309
    %v2332 = vpack.c.b16 %v2312, %v2310
    %v2333 = vpack.c.b16 %v2315, %v2313
    %v2334 = vpack.c.b16 %v2316, %v2314
    %v2335 = vpack.c.b16 %v2319, %v2317
    %v2336 = vpack.c.b16 %v2320, %v2318
    %2353 = vmatpush.bf16.msra.mxu0 %v2335
    %2354 = vmatpush.bf16.msra.mxu0 %v2333
    %2355 = vmatpush.bf16.msra.mxu0 %v2331
    %2356 = vmatpush.bf16.msra.mxu0 %v2329
    %2357 = vmatpush.bf16.msra.mxu0 %v2327
    %2358 = vmatpush.bf16.msra.mxu0 %v2325
    %2359 = vmatpush.bf16.msra.mxu0 %v2323
    %2360 = vmatpush.bf16.msra.mxu0 %v2321
    %2361 = vmatmul.bf16.gmra.mxu0 %v2265
    %v2362 = vpop.f32.mrf.mxu0
    %v2363 = vadd.f32 0.0, %v2362
    %v2364 = vpop.f32.mrf.mxu0
    %v2365 = vadd.f32 0.0, %v2364
    %2366 = vmatmul.bf16.gmra.mxu0 %v2266
    %v2367 = vpop.f32.mrf.mxu0
    %v2368 = vadd.f32 0.0, %v2367
    %v2369 = vpop.f32.mrf.mxu0
    %v2370 = vadd.f32 0.0, %v2369
    %2371 = vmatmul.bf16.gmra.mxu0 %v2267
    %v2372 = vpop.f32.mrf.mxu0
    %v2373 = vadd.f32 0.0, %v2372
    %v2374 = vpop.f32.mrf.mxu0
    %v2375 = vadd.f32 0.0, %v2374
    %2376 = vmatmul.bf16.gmra.mxu0 %v2268
    %v2377 = vpop.f32.mrf.mxu0
    %v2378 = vadd.f32 0.0, %v2377
    %v2379 = vpop.f32.mrf.mxu0
    %v2380 = vadd.f32 0.0, %v2379
    %2381 = vdwg.mxu0
    %2382 = vmatpush.bf16.msra.mxu0 %v2336
    %2383 = vmatpush.bf16.msra.mxu0 %v2334
    %2384 = vmatpush.bf16.msra.mxu0 %v2332
    %2385 = vmatpush.bf16.msra.mxu0 %v2330
    %2386 = vmatpush.bf16.msra.mxu0 %v2328
    %2387 = vmatpush.bf16.msra.mxu0 %v2326
    %2388 = vmatpush.bf16.msra.mxu0 %v2324
    %2389 = vmatpush.bf16.msra.mxu0 %v2322
    %2390 = vmatmul.bf16.gmra.mxu0 %v2265
    %v2391 = vpop.f32.mrf.mxu0
    %v2392 = vadd.f32 0.0, %v2391
    %v2393 = vpop.f32.mrf.mxu0
    %v2394 = vadd.f32 0.0, %v2393
    %2395 = vmatmul.bf16.gmra.mxu0 %v2266
    %v2396 = vpop.f32.mrf.mxu0
    %v2397 = vadd.f32 0.0, %v2396
    %v2398 = vpop.f32.mrf.mxu0
    %v2399 = vadd.f32 0.0, %v2398
    %2400 = vmatmul.bf16.gmra.mxu0 %v2267
    %v2401 = vpop.f32.mrf.mxu0
    %v2402 = vadd.f32 0.0, %v2401
    %v2403 = vpop.f32.mrf.mxu0
    %v2404 = vadd.f32 0.0, %v2403
    %2405 = vmatmul.bf16.gmra.mxu0 %v2268
    %v2406 = vpop.f32.mrf.mxu0
    %v2407 = vadd.f32 0.0, %v2406
    %v2408 = vpop.f32.mrf.mxu0
    %v2409 = vadd.f32 0.0, %v2408
    %2410 = vdwg.mxu0
    %2411 = vst [vmem:[#allocation3] sm:$0xff] %v2363
    %2412 = vst [vmem:[#allocation3 + $0x8] sm:$0xff] %v2392
    %2413 = vst [vmem:[#allocation3 + $0x10] sm:$0xff] %v2365
    %2414 = vst [vmem:[#allocation3 + $0x18] sm:$0xff] %v2394
    %2415 = vst [vmem:[#allocation3 + $0x20] sm:$0xff] %v2368
    %2416 = vst [vmem:[#allocation3 + $0x28] sm:$0xff] %v2397
    %2417 = vst [vmem:[#allocation3 + $0x30] sm:$0xff] %v2370
    %2418 = vst [vmem:[#allocation3 + $0x38] sm:$0xff] %v2399
    %2419 = vst [vmem:[#allocation3 + $0x40] sm:$0xff] %v2373
    %2420 = vst [vmem:[#allocation3 + $0x48] sm:$0xff] %v2402
    %2421 = vst [vmem:[#allocation3 + $0x50] sm:$0xff] %v2375
    %2422 = vst [vmem:[#allocation3 + $0x58] sm:$0xff] %v2404
    %2423 = vst [vmem:[#allocation3 + $0x60] sm:$0xff] %v2378
    %2424 = vst [vmem:[#allocation3 + $0x68] sm:$0xff] %v2407
    %2425 = vst [vmem:[#allocation3 + $0x70] sm:$0xff] %v2380
    %2426 = vst [vmem:[#allocation3 + $0x78] sm:$0xff] %v2409
    %s2427 = scalar_lea.vmem [#allocation4], 128
    %v2428 = vld [vmem:[%s2427] sm:$0xff]
    %v2429 = vld [vmem:[%s2427 + $0x8] sm:$0xff]
    %v2430 = vld [vmem:[%s2427 + $0x10] sm:$0xff]
    %v2431 = vld [vmem:[%s2427 + $0x18] sm:$0xff]
    %v2432 = vld [vmem:[%s2427 + $0x20] sm:$0xff]
    %v2433 = vld [vmem:[%s2427 + $0x28] sm:$0xff]
    %v2434 = vld [vmem:[%s2427 + $0x30] sm:$0xff]
    %v2435 = vld [vmem:[%s2427 + $0x38] sm:$0xff]
    %v2436 = vld [vmem:[%s2427 + $0x40] sm:$0xff]
    %v2437 = vld [vmem:[%s2427 + $0x48] sm:$0xff]
    %v2438 = vld [vmem:[%s2427 + $0x50] sm:$0xff]
    %v2439 = vld [vmem:[%s2427 + $0x58] sm:$0xff]
    %v2440 = vld [vmem:[%s2427 + $0x60] sm:$0xff]
    %v2441 = vld [vmem:[%s2427 + $0x68] sm:$0xff]
    %v2442 = vld [vmem:[%s2427 + $0x70] sm:$0xff]
    %v2443 = vld [vmem:[%s2427 + $0x78] sm:$0xff]
    %v2445 = vunpack.c.l.b16 %v2229
    %v2446 = vpack.c.b16 %v2259, %v2258
    %v2447 = vpack.c.b16 %v2261, %v2260
    %v2448 = vpack.c.b16 %v2263, %v2262
    %v2449 = vpack.c.b16 %v2445, %v2264
    %v2470 = vunpack.c.l.b16 %v2428
    %v2471 = vunpack.c.h.b16 %v2428
    %v2472 = vunpack.c.l.b16 %v2429
    %v2473 = vunpack.c.h.b16 %v2429
    %v2474 = vunpack.c.l.b16 %v2430
    %v2475 = vunpack.c.h.b16 %v2430
    %v2476 = vunpack.c.l.b16 %v2431
    %v2477 = vunpack.c.h.b16 %v2431
    %v2478 = vunpack.c.l.b16 %v2432
    %v2479 = vunpack.c.h.b16 %v2432
    %v2480 = vunpack.c.l.b16 %v2433
    %v2481 = vunpack.c.h.b16 %v2433
    %v2482 = vunpack.c.l.b16 %v2434
    %v2483 = vunpack.c.h.b16 %v2434
    %v2484 = vunpack.c.l.b16 %v2435
    %v2485 = vunpack.c.h.b16 %v2435
    %v2486 = vunpack.c.l.b16 %v2436
    %v2487 = vunpack.c.h.b16 %v2436
    %v2488 = vunpack.c.l.b16 %v2437
    %v2489 = vunpack.c.h.b16 %v2437
    %v2490 = vunpack.c.l.b16 %v2438
    %v2491 = vunpack.c.h.b16 %v2438
    %v2492 = vunpack.c.l.b16 %v2439
    %v2493 = vunpack.c.h.b16 %v2439
    %v2494 = vunpack.c.l.b16 %v2440
    %v2495 = vunpack.c.h.b16 %v2440
    %v2496 = vunpack.c.l.b16 %v2441
    %v2497 = vunpack.c.h.b16 %v2441
    %v2498 = vunpack.c.l.b16 %v2442
    %v2499 = vunpack.c.h.b16 %v2442
    %v2500 = vunpack.c.l.b16 %v2443
    %v2501 = vunpack.c.h.b16 %v2443
    %v2502 = vpack.c.b16 %v2472, %v2470
    %v2503 = vpack.c.b16 %v2473, %v2471
    %v2504 = vpack.c.b16 %v2476, %v2474
    %v2505 = vpack.c.b16 %v2477, %v2475
    %v2506 = vpack.c.b16 %v2480, %v2478
    %v2507 = vpack.c.b16 %v2481, %v2479
    %v2508 = vpack.c.b16 %v2484, %v2482
    %v2509 = vpack.c.b16 %v2485, %v2483
    %v2510 = vpack.c.b16 %v2488, %v2486
    %v2511 = vpack.c.b16 %v2489, %v2487
    %v2512 = vpack.c.b16 %v2492, %v2490
    %v2513 = vpack.c.b16 %v2493, %v2491
    %v2514 = vpack.c.b16 %v2496, %v2494
    %v2515 = vpack.c.b16 %v2497, %v2495
    %v2516 = vpack.c.b16 %v2500, %v2498
    %v2517 = vpack.c.b16 %v2501, %v2499
    %2534 = vmatpush.bf16.msra.mxu0 %v2516
    %2535 = vmatpush.bf16.msra.mxu0 %v2514
    %2536 = vmatpush.bf16.msra.mxu0 %v2512
    %2537 = vmatpush.bf16.msra.mxu0 %v2510
    %2538 = vmatpush.bf16.msra.mxu0 %v2508
    %2539 = vmatpush.bf16.msra.mxu0 %v2506
    %2540 = vmatpush.bf16.msra.mxu0 %v2504
    %2541 = vmatpush.bf16.msra.mxu0 %v2502
    %2542 = vmatmul.bf16.gmra.mxu0 %v2446
    %v2543 = vpop.f32.mrf.mxu0
    %v2544 = vadd.f32 0.0, %v2543
    %v2545 = vpop.f32.mrf.mxu0
    %v2546 = vadd.f32 0.0, %v2545
    %2547 = vmatmul.bf16.gmra.mxu0 %v2447
    %v2548 = vpop.f32.mrf.mxu0
    %v2549 = vadd.f32 0.0, %v2548
    %v2550 = vpop.f32.mrf.mxu0
    %v2551 = vadd.f32 0.0, %v2550
    %2552 = vmatmul.bf16.gmra.mxu0 %v2448
    %v2553 = vpop.f32.mrf.mxu0
    %v2554 = vadd.f32 0.0, %v2553
    %v2555 = vpop.f32.mrf.mxu0
    %v2556 = vadd.f32 0.0, %v2555
    %2557 = vmatmul.bf16.gmra.mxu0 %v2449
    %v2558 = vpop.f32.mrf.mxu0
    %v2559 = vadd.f32 0.0, %v2558
    %v2560 = vpop.f32.mrf.mxu0
    %v2561 = vadd.f32 0.0, %v2560
    %2562 = vdwg.mxu0
    %2563 = vmatpush.bf16.msra.mxu0 %v2517
    %2564 = vmatpush.bf16.msra.mxu0 %v2515
    %2565 = vmatpush.bf16.msra.mxu0 %v2513
    %2566 = vmatpush.bf16.msra.mxu0 %v2511
    %2567 = vmatpush.bf16.msra.mxu0 %v2509
    %2568 = vmatpush.bf16.msra.mxu0 %v2507
    %2569 = vmatpush.bf16.msra.mxu0 %v2505
    %2570 = vmatpush.bf16.msra.mxu0 %v2503
    %2571 = vmatmul.bf16.gmra.mxu0 %v2446
    %v2572 = vpop.f32.mrf.mxu0
    %v2573 = vadd.f32 0.0, %v2572
    %v2574 = vpop.f32.mrf.mxu0
    %v2575 = vadd.f32 0.0, %v2574
    %2576 = vmatmul.bf16.gmra.mxu0 %v2447
    %v2577 = vpop.f32.mrf.mxu0
    %v2578 = vadd.f32 0.0, %v2577
    %v2579 = vpop.f32.mrf.mxu0
    %v2580 = vadd.f32 0.0, %v2579
    %2581 = vmatmul.bf16.gmra.mxu0 %v2448
    %v2582 = vpop.f32.mrf.mxu0
    %v2583 = vadd.f32 0.0, %v2582
    %v2584 = vpop.f32.mrf.mxu0
    %v2585 = vadd.f32 0.0, %v2584
    %2586 = vmatmul.bf16.gmra.mxu0 %v2449
    %v2587 = vpop.f32.mrf.mxu0
    %v2588 = vadd.f32 0.0, %v2587
    %v2589 = vpop.f32.mrf.mxu0
    %v2590 = vadd.f32 0.0, %v2589
    %2591 = vdwg.mxu0
    %v2592 = vld [vmem:[#allocation3] sm:$0xff]
    %v2593 = vld [vmem:[#allocation3 + $0x8] sm:$0xff]
    %v2594 = vld [vmem:[#allocation3 + $0x10] sm:$0xff]
    %v2595 = vld [vmem:[#allocation3 + $0x18] sm:$0xff]
    %v2596 = vld [vmem:[#allocation3 + $0x20] sm:$0xff]
    %v2597 = vld [vmem:[#allocation3 + $0x28] sm:$0xff]
    %v2598 = vld [vmem:[#allocation3 + $0x30] sm:$0xff]
    %v2599 = vld [vmem:[#allocation3 + $0x38] sm:$0xff]
    %v2600 = vld [vmem:[#allocation3 + $0x40] sm:$0xff]
    %v2601 = vld [vmem:[#allocation3 + $0x48] sm:$0xff]
    %v2602 = vld [vmem:[#allocation3 + $0x50] sm:$0xff]
    %v2603 = vld [vmem:[#allocation3 + $0x58] sm:$0xff]
    %v2604 = vld [vmem:[#allocation3 + $0x60] sm:$0xff]
    %v2605 = vld [vmem:[#allocation3 + $0x68] sm:$0xff]
    %v2606 = vld [vmem:[#allocation3 + $0x70] sm:$0xff]
    %v2607 = vld [vmem:[#allocation3 + $0x78] sm:$0xff]
    %v2608 = vadd.f32 %v2592, %v2544
    %v2609 = vadd.f32 %v2593, %v2573
    %v2610 = vadd.f32 %v2594, %v2546
    %v2611 = vadd.f32 %v2595, %v2575
    %v2612 = vadd.f32 %v2596, %v2549
    %v2613 = vadd.f32 %v2597, %v2578
    %v2614 = vadd.f32 %v2598, %v2551
    %v2615 = vadd.f32 %v2599, %v2580
    %v2616 = vadd.f32 %v2600, %v2554
    %v2617 = vadd.f32 %v2601, %v2583
    %v2618 = vadd.f32 %v2602, %v2556
    %v2619 = vadd.f32 %v2603, %v2585
    %v2620 = vadd.f32 %v2604, %v2559
    %v2621 = vadd.f32 %v2605, %v2588
    %v2622 = vadd.f32 %v2606, %v2561
    %v2623 = vadd.f32 %v2607, %v2590
    %2624 = vst [vmem:[#allocation3] sm:$0xff] %v2608
    %2625 = vst [vmem:[#allocation3 + $0x8] sm:$0xff] %v2609
    %2626 = vst [vmem:[#allocation3 + $0x10] sm:$0xff] %v2610
    %2627 = vst [vmem:[#allocation3 + $0x18] sm:$0xff] %v2611
    %2628 = vst [vmem:[#allocation3 + $0x20] sm:$0xff] %v2612
    %2629 = vst [vmem:[#allocation3 + $0x28] sm:$0xff] %v2613
    %2630 = vst [vmem:[#allocation3 + $0x30] sm:$0xff] %v2614
    %2631 = vst [vmem:[#allocation3 + $0x38] sm:$0xff] %v2615
    %2632 = vst [vmem:[#allocation3 + $0x40] sm:$0xff] %v2616
    %2633 = vst [vmem:[#allocation3 + $0x48] sm:$0xff] %v2617
    %2634 = vst [vmem:[#allocation3 + $0x50] sm:$0xff] %v2618
    %2635 = vst [vmem:[#allocation3 + $0x58] sm:$0xff] %v2619
    %2636 = vst [vmem:[#allocation3 + $0x60] sm:$0xff] %v2620
    %2637 = vst [vmem:[#allocation3 + $0x68] sm:$0xff] %v2621
    %2638 = vst [vmem:[#allocation3 + $0x70] sm:$0xff] %v2622
    %2639 = vst [vmem:[#allocation3 + $0x78] sm:$0xff] %v2623
    %s2640 = scalar_lea.vmem [#allocation4], 256
    %v2641 = vld [vmem:[%s2640] sm:$0xff]
    %v2642 = vld [vmem:[%s2640 + $0x8] sm:$0xff]
    %v2643 = vld [vmem:[%s2640 + $0x10] sm:$0xff]
    %v2644 = vld [vmem:[%s2640 + $0x18] sm:$0xff]
    %v2645 = vld [vmem:[%s2640 + $0x20] sm:$0xff]
    %v2646 = vld [vmem:[%s2640 + $0x28] sm:$0xff]
    %v2647 = vld [vmem:[%s2640 + $0x30] sm:$0xff]
    %v2648 = vld [vmem:[%s2640 + $0x38] sm:$0xff]
    %v2649 = vld [vmem:[%s2640 + $0x40] sm:$0xff]
    %v2650 = vld [vmem:[%s2640 + $0x48] sm:$0xff]
    %v2651 = vld [vmem:[%s2640 + $0x50] sm:$0xff]
    %v2652 = vld [vmem:[%s2640 + $0x58] sm:$0xff]
    %v2653 = vld [vmem:[%s2640 + $0x60] sm:$0xff]
    %v2654 = vld [vmem:[%s2640 + $0x68] sm:$0xff]
    %v2655 = vld [vmem:[%s2640 + $0x70] sm:$0xff]
    %v2656 = vld [vmem:[%s2640 + $0x78] sm:$0xff]
    %v2658 = vunpack.c.l.b16 %v2230
    %v2659 = vpack.c.b16 %v2658, %v2445
    %v2677 = vunpack.c.l.b16 %v2641
    %v2678 = vunpack.c.h.b16 %v2641
    %v2679 = vunpack.c.l.b16 %v2642
    %v2680 = vunpack.c.h.b16 %v2642
    %v2681 = vunpack.c.l.b16 %v2643
    %v2682 = vunpack.c.h.b16 %v2643
    %v2683 = vunpack.c.l.b16 %v2644
    %v2684 = vunpack.c.h.b16 %v2644
    %v2685 = vunpack.c.l.b16 %v2645
    %v2686 = vunpack.c.h.b16 %v2645
    %v2687 = vunpack.c.l.b16 %v2646
    %v2688 = vunpack.c.h.b16 %v2646
    %v2689 = vunpack.c.l.b16 %v2647
    %v2690 = vunpack.c.h.b16 %v2647
    %v2691 = vunpack.c.l.b16 %v2648
    %v2692 = vunpack.c.h.b16 %v2648
    %v2693 = vunpack.c.l.b16 %v2649
    %v2694 = vunpack.c.h.b16 %v2649
    %v2695 = vunpack.c.l.b16 %v2650
    %v2696 = vunpack.c.h.b16 %v2650
    %v2697 = vunpack.c.l.b16 %v2651
    %v2698 = vunpack.c.h.b16 %v2651
    %v2699 = vunpack.c.l.b16 %v2652
    %v2700 = vunpack.c.h.b16 %v2652
    %v2701 = vunpack.c.l.b16 %v2653
    %v2702 = vunpack.c.h.b16 %v2653
    %v2703 = vunpack.c.l.b16 %v2654
    %v2704 = vunpack.c.h.b16 %v2654
    %v2705 = vunpack.c.l.b16 %v2655
    %v2706 = vunpack.c.h.b16 %v2655
    %v2707 = vunpack.c.l.b16 %v2656
    %v2708 = vunpack.c.h.b16 %v2656
    %v2709 = vpack.c.b16 %v2679, %v2677
    %v2710 = vpack.c.b16 %v2680, %v2678
    %v2711 = vpack.c.b16 %v2683, %v2681
    %v2712 = vpack.c.b16 %v2684, %v2682
    %v2713 = vpack.c.b16 %v2687, %v2685
    %v2714 = vpack.c.b16 %v2688, %v2686
    %v2715 = vpack.c.b16 %v2691, %v2689
    %v2716 = vpack.c.b16 %v2692, %v2690
    %v2717 = vpack.c.b16 %v2695, %v2693
    %v2718 = vpack.c.b16 %v2696, %v2694
    %v2719 = vpack.c.b16 %v2699, %v2697
    %v2720 = vpack.c.b16 %v2700, %v2698
    %v2721 = vpack.c.b16 %v2703, %v2701
    %v2722 = vpack.c.b16 %v2704, %v2702
    %v2723 = vpack.c.b16 %v2707, %v2705
    %v2724 = vpack.c.b16 %v2708, %v2706
    %2741 = vmatpush.bf16.msra.mxu0 %v2723
    %2742 = vmatpush.bf16.msra.mxu0 %v2721
    %2743 = vmatpush.bf16.msra.mxu0 %v2719
    %2744 = vmatpush.bf16.msra.mxu0 %v2717
    %2745 = vmatpush.bf16.msra.mxu0 %v2715
    %2746 = vmatpush.bf16.msra.mxu0 %v2713
    %2747 = vmatpush.bf16.msra.mxu0 %v2711
    %2748 = vmatpush.bf16.msra.mxu0 %v2709
    %2749 = vmatmul.bf16.gmra.mxu0 %v2266
    %v2750 = vpop.f32.mrf.mxu0
    %v2751 = vadd.f32 0.0, %v2750
    %v2752 = vpop.f32.mrf.mxu0
    %v2753 = vadd.f32 0.0, %v2752
    %2754 = vmatmul.bf16.gmra.mxu0 %v2267
    %v2755 = vpop.f32.mrf.mxu0
    %v2756 = vadd.f32 0.0, %v2755
    %v2757 = vpop.f32.mrf.mxu0
    %v2758 = vadd.f32 0.0, %v2757
    %2759 = vmatmul.bf16.gmra.mxu0 %v2268
    %v2760 = vpop.f32.mrf.mxu0
    %v2761 = vadd.f32 0.0, %v2760
    %v2762 = vpop.f32.mrf.mxu0
    %v2763 = vadd.f32 0.0, %v2762
    %2764 = vmatmul.bf16.gmra.mxu0 %v2659
    %v2765 = vpop.f32.mrf.mxu0
    %v2766 = vadd.f32 0.0, %v2765
    %v2767 = vpop.f32.mrf.mxu0
    %v2768 = vadd.f32 0.0, %v2767
    %2769 = vdwg.mxu0
    %2770 = vmatpush.bf16.msra.mxu0 %v2724
    %2771 = vmatpush.bf16.msra.mxu0 %v2722
    %2772 = vmatpush.bf16.msra.mxu0 %v2720
    %2773 = vmatpush.bf16.msra.mxu0 %v2718
    %2774 = vmatpush.bf16.msra.mxu0 %v2716
    %2775 = vmatpush.bf16.msra.mxu0 %v2714
    %2776 = vmatpush.bf16.msra.mxu0 %v2712
    %2777 = vmatpush.bf16.msra.mxu0 %v2710
    %2778 = vmatmul.bf16.gmra.mxu0 %v2266
    %v2779 = vpop.f32.mrf.mxu0
    %v2780 = vadd.f32 0.0, %v2779
    %v2781 = vpop.f32.mrf.mxu0
    %v2782 = vadd.f32 0.0, %v2781
    %2783 = vmatmul.bf16.gmra.mxu0 %v2267
    %v2784 = vpop.f32.mrf.mxu0
    %v2785 = vadd.f32 0.0, %v2784
    %v2786 = vpop.f32.mrf.mxu0
    %v2787 = vadd.f32 0.0, %v2786
    %2788 = vmatmul.bf16.gmra.mxu0 %v2268
    %v2789 = vpop.f32.mrf.mxu0
    %v2790 = vadd.f32 0.0, %v2789
    %v2791 = vpop.f32.mrf.mxu0
    %v2792 = vadd.f32 0.0, %v2791
    %2793 = vmatmul.bf16.gmra.mxu0 %v2659
    %v2794 = vpop.f32.mrf.mxu0
    %v2795 = vadd.f32 0.0, %v2794
    %v2796 = vpop.f32.mrf.mxu0
    %v2797 = vadd.f32 0.0, %v2796
    %2798 = vdwg.mxu0
    %v2799 = vld [vmem:[#allocation3] sm:$0xff]
    %v2800 = vld [vmem:[#allocation3 + $0x8] sm:$0xff]
    %v2801 = vld [vmem:[#allocation3 + $0x10] sm:$0xff]
    %v2802 = vld [vmem:[#allocation3 + $0x18] sm:$0xff]
    %v2803 = vld [vmem:[#allocation3 + $0x20] sm:$0xff]
    %v2804 = vld [vmem:[#allocation3 + $0x28] sm:$0xff]
    %v2805 = vld [vmem:[#allocation3 + $0x30] sm:$0xff]
    %v2806 = vld [vmem:[#allocation3 + $0x38] sm:$0xff]
    %v2807 = vld [vmem:[#allocation3 + $0x40] sm:$0xff]
    %v2808 = vld [vmem:[#allocation3 + $0x48] sm:$0xff]
    %v2809 = vld [vmem:[#allocation3 + $0x50] sm:$0xff]
    %v2810 = vld [vmem:[#allocation3 + $0x58] sm:$0xff]
    %v2811 = vld [vmem:[#allocation3 + $0x60] sm:$0xff]
    %v2812 = vld [vmem:[#allocation3 + $0x68] sm:$0xff]
    %v2813 = vld [vmem:[#allocation3 + $0x70] sm:$0xff]
    %v2814 = vld [vmem:[#allocation3 + $0x78] sm:$0xff]
    %v2815 = vadd.f32 %v2799, %v2751
    %v2816 = vadd.f32 %v2800, %v2780
    %v2817 = vadd.f32 %v2801, %v2753
    %v2818 = vadd.f32 %v2802, %v2782
    %v2819 = vadd.f32 %v2803, %v2756
    %v2820 = vadd.f32 %v2804, %v2785
    %v2821 = vadd.f32 %v2805, %v2758
    %v2822 = vadd.f32 %v2806, %v2787
    %v2823 = vadd.f32 %v2807, %v2761
    %v2824 = vadd.f32 %v2808, %v2790
    %v2825 = vadd.f32 %v2809, %v2763
    %v2826 = vadd.f32 %v2810, %v2792
    %v2827 = vadd.f32 %v2811, %v2766
    %v2828 = vadd.f32 %v2812, %v2795
    %v2829 = vadd.f32 %v2813, %v2768
    %v2830 = vadd.f32 %v2814, %v2797
    %2831 = vst [vmem:[#allocation3] sm:$0xff] %v2815
    %2832 = vst [vmem:[#allocation3 + $0x8] sm:$0xff] %v2816
    %2833 = vst [vmem:[#allocation3 + $0x10] sm:$0xff] %v2817
    %2834 = vst [vmem:[#allocation3 + $0x18] sm:$0xff] %v2818
    %2835 = vst [vmem:[#allocation3 + $0x20] sm:$0xff] %v2819
    %2836 = vst [vmem:[#allocation3 + $0x28] sm:$0xff] %v2820
    %2837 = vst [vmem:[#allocation3 + $0x30] sm:$0xff] %v2821
    %2838 = vst [vmem:[#allocation3 + $0x38] sm:$0xff] %v2822
    %2839 = vst [vmem:[#allocation3 + $0x40] sm:$0xff] %v2823
    %2840 = vst [vmem:[#allocation3 + $0x48] sm:$0xff] %v2824
    %2841 = vst [vmem:[#allocation3 + $0x50] sm:$0xff] %v2825
    %2842 = vst [vmem:[#allocation3 + $0x58] sm:$0xff] %v2826
    %2843 = vst [vmem:[#allocation3 + $0x60] sm:$0xff] %v2827
    %2844 = vst [vmem:[#allocation3 + $0x68] sm:$0xff] %v2828
    %2845 = vst [vmem:[#allocation3 + $0x70] sm:$0xff] %v2829
    %2846 = vst [vmem:[#allocation3 + $0x78] sm:$0xff] %v2830
    %s2847 = scalar_lea.vmem [#allocation4], 384
    %v2848 = vld [vmem:[%s2847] sm:$0xff]
    %v2849 = vld [vmem:[%s2847 + $0x8] sm:$0xff]
    %v2850 = vld [vmem:[%s2847 + $0x10] sm:$0xff]
    %v2851 = vld [vmem:[%s2847 + $0x18] sm:$0xff]
    %v2852 = vld [vmem:[%s2847 + $0x20] sm:$0xff]
    %v2853 = vld [vmem:[%s2847 + $0x28] sm:$0xff]
    %v2854 = vld [vmem:[%s2847 + $0x30] sm:$0xff]
    %v2855 = vld [vmem:[%s2847 + $0x38] sm:$0xff]
    %v2856 = vld [vmem:[%s2847 + $0x40] sm:$0xff]
    %v2857 = vld [vmem:[%s2847 + $0x48] sm:$0xff]
    %v2858 = vld [vmem:[%s2847 + $0x50] sm:$0xff]
    %v2859 = vld [vmem:[%s2847 + $0x58] sm:$0xff]
    %v2860 = vld [vmem:[%s2847 + $0x60] sm:$0xff]
    %v2861 = vld [vmem:[%s2847 + $0x68] sm:$0xff]
    %v2862 = vld [vmem:[%s2847 + $0x70] sm:$0xff]
    %v2863 = vld [vmem:[%s2847 + $0x78] sm:$0xff]
    %v2865 = vunpack.c.l.b16 %v2231
    %v2866 = vpack.c.b16 %v2865, %v2658
    %v2884 = vunpack.c.l.b16 %v2848
    %v2885 = vunpack.c.h.b16 %v2848
    %v2886 = vunpack.c.l.b16 %v2849
    %v2887 = vunpack.c.h.b16 %v2849
    %v2888 = vunpack.c.l.b16 %v2850
    %v2889 = vunpack.c.h.b16 %v2850
    %v2890 = vunpack.c.l.b16 %v2851
    %v2891 = vunpack.c.h.b16 %v2851
    %v2892 = vunpack.c.l.b16 %v2852
    %v2893 = vunpack.c.h.b16 %v2852
    %v2894 = vunpack.c.l.b16 %v2853
    %v2895 = vunpack.c.h.b16 %v2853
    %v2896 = vunpack.c.l.b16 %v2854
    %v2897 = vunpack.c.h.b16 %v2854
    %v2898 = vunpack.c.l.b16 %v2855
    %v2899 = vunpack.c.h.b16 %v2855
    %v2900 = vunpack.c.l.b16 %v2856
    %v2901 = vunpack.c.h.b16 %v2856
    %v2902 = vunpack.c.l.b16 %v2857
    %v2903 = vunpack.c.h.b16 %v2857
    %v2904 = vunpack.c.l.b16 %v2858
    %v2905 = vunpack.c.h.b16 %v2858
    %v2906 = vunpack.c.l.b16 %v2859
    %v2907 = vunpack.c.h.b16 %v2859
    %v2908 = vunpack.c.l.b16 %v2860
    %v2909 = vunpack.c.h.b16 %v2860
    %v2910 = vunpack.c.l.b16 %v2861
    %v2911 = vunpack.c.h.b16 %v2861
    %v2912 = vunpack.c.l.b16 %v2862
    %v2913 = vunpack.c.h.b16 %v2862
    %v2914 = vunpack.c.l.b16 %v2863
    %v2915 = vunpack.c.h.b16 %v2863
    %v2916 = vpack.c.b16 %v2886, %v2884
    %v2917 = vpack.c.b16 %v2887, %v2885
    %v2918 = vpack.c.b16 %v2890, %v2888
    %v2919 = vpack.c.b16 %v2891, %v2889
    %v2920 = vpack.c.b16 %v2894, %v2892
    %v2921 = vpack.c.b16 %v2895, %v2893
    %v2922 = vpack.c.b16 %v2898, %v2896
    %v2923 = vpack.c.b16 %v2899, %v2897
    %v2924 = vpack.c.b16 %v2902, %v2900
    %v2925 = vpack.c.b16 %v2903, %v2901
    %v2926 = vpack.c.b16 %v2906, %v2904
    %v2927 = vpack.c.b16 %v2907, %v2905
    %v2928 = vpack.c.b16 %v2910, %v2908
    %v2929 = vpack.c.b16 %v2911, %v2909
    %v2930 = vpack.c.b16 %v2914, %v2912
    %v2931 = vpack.c.b16 %v2915, %v2913
    %2948 = vmatpush.bf16.msra.mxu0 %v2930
    %2949 = vmatpush.bf16.msra.mxu0 %v2928
    %2950 = vmatpush.bf16.msra.mxu0 %v2926
    %2951 = vmatpush.bf16.msra.mxu0 %v2924
    %2952 = vmatpush.bf16.msra.mxu0 %v2922
    %2953 = vmatpush.bf16.msra.mxu0 %v2920
    %2954 = vmatpush.bf16.msra.mxu0 %v2918
    %2955 = vmatpush.bf16.msra.mxu0 %v2916
    %2956 = vmatmul.bf16.gmra.mxu0 %v2447
    %v2957 = vpop.f32.mrf.mxu0
    %v2958 = vadd.f32 0.0, %v2957
    %v2959 = vpop.f32.mrf.mxu0
    %v2960 = vadd.f32 0.0, %v2959
    %2961 = vmatmul.bf16.gmra.mxu0 %v2448
    %v2962 = vpop.f32.mrf.mxu0
    %v2963 = vadd.f32 0.0, %v2962
    %v2964 = vpop.f32.mrf.mxu0
    %v2965 = vadd.f32 0.0, %v2964
    %2966 = vmatmul.bf16.gmra.mxu0 %v2449
    %v2967 = vpop.f32.mrf.mxu0
    %v2968 = vadd.f32 0.0, %v2967
    %v2969 = vpop.f32.mrf.mxu0
    %v2970 = vadd.f32 0.0, %v2969
    %2971 = vmatmul.bf16.gmra.mxu0 %v2866
    %v2972 = vpop.f32.mrf.mxu0
    %v2973 = vadd.f32 0.0, %v2972
    %v2974 = vpop.f32.mrf.mxu0
    %v2975 = vadd.f32 0.0, %v2974
    %2976 = vdwg.mxu0
    %2977 = vmatpush.bf16.msra.mxu0 %v2931
    %2978 = vmatpush.bf16.msra.mxu0 %v2929
    %2979 = vmatpush.bf16.msra.mxu0 %v2927
    %2980 = vmatpush.bf16.msra.mxu0 %v2925
    %2981 = vmatpush.bf16.msra.mxu0 %v2923
    %2982 = vmatpush.bf16.msra.mxu0 %v2921
    %2983 = vmatpush.bf16.msra.mxu0 %v2919
    %2984 = vmatpush.bf16.msra.mxu0 %v2917
    %2985 = vmatmul.bf16.gmra.mxu0 %v2447
    %v2986 = vpop.f32.mrf.mxu0
    %v2987 = vadd.f32 0.0, %v2986
    %v2988 = vpop.f32.mrf.mxu0
    %v2989 = vadd.f32 0.0, %v2988
    %2990 = vmatmul.bf16.gmra.mxu0 %v2448
    %v2991 = vpop.f32.mrf.mxu0
    %v2992 = vadd.f32 0.0, %v2991
    %v2993 = vpop.f32.mrf.mxu0
    %v2994 = vadd.f32 0.0, %v2993
    %2995 = vmatmul.bf16.gmra.mxu0 %v2449
    %v2996 = vpop.f32.mrf.mxu0
    %v2997 = vadd.f32 0.0, %v2996
    %v2998 = vpop.f32.mrf.mxu0
    %v2999 = vadd.f32 0.0, %v2998
    %3000 = vmatmul.bf16.gmra.mxu0 %v2866
    %v3001 = vpop.f32.mrf.mxu0
    %v3002 = vadd.f32 0.0, %v3001
    %v3003 = vpop.f32.mrf.mxu0
    %v3004 = vadd.f32 0.0, %v3003
    %3005 = vdwg.mxu0
    %v3006 = vld [vmem:[#allocation3] sm:$0xff]
    %v3007 = vld [vmem:[#allocation3 + $0x8] sm:$0xff]
    %v3008 = vld [vmem:[#allocation3 + $0x10] sm:$0xff]
    %v3009 = vld [vmem:[#allocation3 + $0x18] sm:$0xff]
    %v3010 = vld [vmem:[#allocation3 + $0x20] sm:$0xff]
    %v3011 = vld [vmem:[#allocation3 + $0x28] sm:$0xff]
    %v3012 = vld [vmem:[#allocation3 + $0x30] sm:$0xff]
    %v3013 = vld [vmem:[#allocation3 + $0x38] sm:$0xff]
    %v3014 = vld [vmem:[#allocation3 + $0x40] sm:$0xff]
    %v3015 = vld [vmem:[#allocation3 + $0x48] sm:$0xff]
    %v3016 = vld [vmem:[#allocation3 + $0x50] sm:$0xff]
    %v3017 = vld [vmem:[#allocation3 + $0x58] sm:$0xff]
    %v3018 = vld [vmem:[#allocation3 + $0x60] sm:$0xff]
    %v3019 = vld [vmem:[#allocation3 + $0x68] sm:$0xff]
    %v3020 = vld [vmem:[#allocation3 + $0x70] sm:$0xff]
    %v3021 = vld [vmem:[#allocation3 + $0x78] sm:$0xff]
    %v3022 = vadd.f32 %v3006, %v2958
    %v3023 = vadd.f32 %v3007, %v2987
    %v3024 = vadd.f32 %v3008, %v2960
    %v3025 = vadd.f32 %v3009, %v2989
    %v3026 = vadd.f32 %v3010, %v2963
    %v3027 = vadd.f32 %v3011, %v2992
    %v3028 = vadd.f32 %v3012, %v2965
    %v3029 = vadd.f32 %v3013, %v2994
    %v3030 = vadd.f32 %v3014, %v2968
    %v3031 = vadd.f32 %v3015, %v2997
    %v3032 = vadd.f32 %v3016, %v2970
    %v3033 = vadd.f32 %v3017, %v2999
    %v3034 = vadd.f32 %v3018, %v2973
    %v3035 = vadd.f32 %v3019, %v3002
    %v3036 = vadd.f32 %v3020, %v2975
    %v3037 = vadd.f32 %v3021, %v3004
    %3038 = vst [vmem:[#allocation3] sm:$0xff] %v3022
    %3039 = vst [vmem:[#allocation3 + $0x8] sm:$0xff] %v3023
    %3040 = vst [vmem:[#allocation3 + $0x10] sm:$0xff] %v3024
    %3041 = vst [vmem:[#allocation3 + $0x18] sm:$0xff] %v3025
    %3042 = vst [vmem:[#allocation3 + $0x20] sm:$0xff] %v3026
    %3043 = vst [vmem:[#allocation3 + $0x28] sm:$0xff] %v3027
    %3044 = vst [vmem:[#allocation3 + $0x30] sm:$0xff] %v3028
    %3045 = vst [vmem:[#allocation3 + $0x38] sm:$0xff] %v3029
    %3046 = vst [vmem:[#allocation3 + $0x40] sm:$0xff] %v3030
    %3047 = vst [vmem:[#allocation3 + $0x48] sm:$0xff] %v3031
    %3048 = vst [vmem:[#allocation3 + $0x50] sm:$0xff] %v3032
    %3049 = vst [vmem:[#allocation3 + $0x58] sm:$0xff] %v3033
    %3050 = vst [vmem:[#allocation3 + $0x60] sm:$0xff] %v3034
    %3051 = vst [vmem:[#allocation3 + $0x68] sm:$0xff] %v3035
    %3052 = vst [vmem:[#allocation3 + $0x70] sm:$0xff] %v3036
    %3053 = vst [vmem:[#allocation3 + $0x78] sm:$0xff] %v3037
    %s3054 = scalar_lea.vmem [#allocation4], 512
    %v3055 = vld [vmem:[%s3054] sm:$0xff]
    %v3056 = vld [vmem:[%s3054 + $0x8] sm:$0xff]
    %v3057 = vld [vmem:[%s3054 + $0x10] sm:$0xff]
    %v3058 = vld [vmem:[%s3054 + $0x18] sm:$0xff]
    %v3059 = vld [vmem:[%s3054 + $0x20] sm:$0xff]
    %v3060 = vld [vmem:[%s3054 + $0x28] sm:$0xff]
    %v3061 = vld [vmem:[%s3054 + $0x30] sm:$0xff]
    %v3062 = vld [vmem:[%s3054 + $0x38] sm:$0xff]
    %v3063 = vld [vmem:[%s3054 + $0x40] sm:$0xff]
    %v3064 = vld [vmem:[%s3054 + $0x48] sm:$0xff]
    %v3065 = vld [vmem:[%s3054 + $0x50] sm:$0xff]
    %v3066 = vld [vmem:[%s3054 + $0x58] sm:$0xff]
    %v3067 = vld [vmem:[%s3054 + $0x60] sm:$0xff]
    %v3068 = vld [vmem:[%s3054 + $0x68] sm:$0xff]
    %v3069 = vld [vmem:[%s3054 + $0x70] sm:$0xff]
    %v3070 = vld [vmem:[%s3054 + $0x78] sm:$0xff]
    %v3072 = vunpack.c.l.b16 %v2232
    %v3073 = vpack.c.b16 %v3072, %v2865
    %v3091 = vunpack.c.l.b16 %v3055
    %v3092 = vunpack.c.h.b16 %v3055
    %v3093 = vunpack.c.l.b16 %v3056
    %v3094 = vunpack.c.h.b16 %v3056
    %v3095 = vunpack.c.l.b16 %v3057
    %v3096 = vunpack.c.h.b16 %v3057
    %v3097 = vunpack.c.l.b16 %v3058
    %v3098 = vunpack.c.h.b16 %v3058
    %v3099 = vunpack.c.l.b16 %v3059
    %v3100 = vunpack.c.h.b16 %v3059
    %v3101 = vunpack.c.l.b16 %v3060
    %v3102 = vunpack.c.h.b16 %v3060
    %v3103 = vunpack.c.l.b16 %v3061
    %v3104 = vunpack.c.h.b16 %v3061
    %v3105 = vunpack.c.l.b16 %v3062
    %v3106 = vunpack.c.h.b16 %v3062
    %v3107 = vunpack.c.l.b16 %v3063
    %v3108 = vunpack.c.h.b16 %v3063
    %v3109 = vunpack.c.l.b16 %v3064
    %v3110 = vunpack.c.h.b16 %v3064
    %v3111 = vunpack.c.l.b16 %v3065
    %v3112 = vunpack.c.h.b16 %v3065
    %v3113 = vunpack.c.l.b16 %v3066
    %v3114 = vunpack.c.h.b16 %v3066
    %v3115 = vunpack.c.l.b16 %v3067
    %v3116 = vunpack.c.h.b16 %v3067
    %v3117 = vunpack.c.l.b16 %v3068
    %v3118 = vunpack.c.h.b16 %v3068
    %v3119 = vunpack.c.l.b16 %v3069
    %v3120 = vunpack.c.h.b16 %v3069
    %v3121 = vunpack.c.l.b16 %v3070
    %v3122 = vunpack.c.h.b16 %v3070
    %v3123 = vpack.c.b16 %v3093, %v3091
    %v3124 = vpack.c.b16 %v3094, %v3092
    %v3125 = vpack.c.b16 %v3097, %v3095
    %v3126 = vpack.c.b16 %v3098, %v3096
    %v3127 = vpack.c.b16 %v3101, %v3099
    %v3128 = vpack.c.b16 %v3102, %v3100
    %v3129 = vpack.c.b16 %v3105, %v3103
    %v3130 = vpack.c.b16 %v3106, %v3104
    %v3131 = vpack.c.b16 %v3109, %v3107
    %v3132 = vpack.c.b16 %v3110, %v3108
    %v3133 = vpack.c.b16 %v3113, %v3111
    %v3134 = vpack.c.b16 %v3114, %v3112
    %v3135 = vpack.c.b16 %v3117, %v3115
    %v3136 = vpack.c.b16 %v3118, %v3116
    %v3137 = vpack.c.b16 %v3121, %v3119
    %v3138 = vpack.c.b16 %v3122, %v3120
    %3155 = vmatpush.bf16.msra.mxu0 %v3137
    %3156 = vmatpush.bf16.msra.mxu0 %v3135
    %3157 = vmatpush.bf16.msra.mxu0 %v3133
    %3158 = vmatpush.bf16.msra.mxu0 %v3131
    %3159 = vmatpush.bf16.msra.mxu0 %v3129
    %3160 = vmatpush.bf16.msra.mxu0 %v3127
    %3161 = vmatpush.bf16.msra.mxu0 %v3125
    %3162 = vmatpush.bf16.msra.mxu0 %v3123
    %3163 = vmatmul.bf16.gmra.mxu0 %v2267
    %v3164 = vpop.f32.mrf.mxu0
    %v3165 = vadd.f32 0.0, %v3164
    %v3166 = vpop.f32.mrf.mxu0
    %v3167 = vadd.f32 0.0, %v3166
    %3168 = vmatmul.bf16.gmra.mxu0 %v2268
    %v3169 = vpop.f32.mrf.mxu0
    %v3170 = vadd.f32 0.0, %v3169
    %v3171 = vpop.f32.mrf.mxu0
    %v3172 = vadd.f32 0.0, %v3171
    %3173 = vmatmul.bf16.gmra.mxu0 %v2659
    %v3174 = vpop.f32.mrf.mxu0
    %v3175 = vadd.f32 0.0, %v3174
    %v3176 = vpop.f32.mrf.mxu0
    %v3177 = vadd.f32 0.0, %v3176
    %3178 = vmatmul.bf16.gmra.mxu0 %v3073
    %v3179 = vpop.f32.mrf.mxu0
    %v3180 = vadd.f32 0.0, %v3179
    %v3181 = vpop.f32.mrf.mxu0
    %v3182 = vadd.f32 0.0, %v3181
    %3183 = vdwg.mxu0
    %3184 = vmatpush.bf16.msra.mxu0 %v3138
    %3185 = vmatpush.bf16.msra.mxu0 %v3136
    %3186 = vmatpush.bf16.msra.mxu0 %v3134
    %3187 = vmatpush.bf16.msra.mxu0 %v3132
    %3188 = vmatpush.bf16.msra.mxu0 %v3130
    %3189 = vmatpush.bf16.msra.mxu0 %v3128
    %3190 = vmatpush.bf16.msra.mxu0 %v3126
    %3191 = vmatpush.bf16.msra.mxu0 %v3124
    %3192 = vmatmul.bf16.gmra.mxu0 %v2267
    %v3193 = vpop.f32.mrf.mxu0
    %v3194 = vadd.f32 0.0, %v3193
    %v3195 = vpop.f32.mrf.mxu0
    %v3196 = vadd.f32 0.0, %v3195
    %3197 = vmatmul.bf16.gmra.mxu0 %v2268
    %v3198 = vpop.f32.mrf.mxu0
    %v3199 = vadd.f32 0.0, %v3198
    %v3200 = vpop.f32.mrf.mxu0
    %v3201 = vadd.f32 0.0, %v3200
    %3202 = vmatmul.bf16.gmra.mxu0 %v2659
    %v3203 = vpop.f32.mrf.mxu0
    %v3204 = vadd.f32 0.0, %v3203
    %v3205 = vpop.f32.mrf.mxu0
    %v3206 = vadd.f32 0.0, %v3205
    %3207 = vmatmul.bf16.gmra.mxu0 %v3073
    %v3208 = vpop.f32.mrf.mxu0
    %v3209 = vadd.f32 0.0, %v3208
    %v3210 = vpop.f32.mrf.mxu0
    %v3211 = vadd.f32 0.0, %v3210
    %3212 = vdwg.mxu0
    %v3213 = vld [vmem:[#allocation3] sm:$0xff]
    %v3214 = vld [vmem:[#allocation3 + $0x8] sm:$0xff]
    %v3215 = vld [vmem:[#allocation3 + $0x10] sm:$0xff]
    %v3216 = vld [vmem:[#allocation3 + $0x18] sm:$0xff]
    %v3217 = vld [vmem:[#allocation3 + $0x20] sm:$0xff]
    %v3218 = vld [vmem:[#allocation3 + $0x28] sm:$0xff]
    %v3219 = vld [vmem:[#allocation3 + $0x30] sm:$0xff]
    %v3220 = vld [vmem:[#allocation3 + $0x38] sm:$0xff]
    %v3221 = vld [vmem:[#allocation3 + $0x40] sm:$0xff]
    %v3222 = vld [vmem:[#allocation3 + $0x48] sm:$0xff]
    %v3223 = vld [vmem:[#allocation3 + $0x50] sm:$0xff]
    %v3224 = vld [vmem:[#allocation3 + $0x58] sm:$0xff]
    %v3225 = vld [vmem:[#allocation3 + $0x60] sm:$0xff]
    %v3226 = vld [vmem:[#allocation3 + $0x68] sm:$0xff]
    %v3227 = vld [vmem:[#allocation3 + $0x70] sm:$0xff]
    %v3228 = vld [vmem:[#allocation3 + $0x78] sm:$0xff]
    %v3229 = vadd.f32 %v3213, %v3165
    %v3230 = vadd.f32 %v3214, %v3194
    %v3231 = vadd.f32 %v3215, %v3167
    %v3232 = vadd.f32 %v3216, %v3196
    %v3233 = vadd.f32 %v3217, %v3170
    %v3234 = vadd.f32 %v3218, %v3199
    %v3235 = vadd.f32 %v3219, %v3172
    %v3236 = vadd.f32 %v3220, %v3201
    %v3237 = vadd.f32 %v3221, %v3175
    %v3238 = vadd.f32 %v3222, %v3204
    %v3239 = vadd.f32 %v3223, %v3177
    %v3240 = vadd.f32 %v3224, %v3206
    %v3241 = vadd.f32 %v3225, %v3180
    %v3242 = vadd.f32 %v3226, %v3209
    %v3243 = vadd.f32 %v3227, %v3182
    %v3244 = vadd.f32 %v3228, %v3211
    %3245 = vst [vmem:[#allocation3] sm:$0xff] %v3229
    %3246 = vst [vmem:[#allocation3 + $0x8] sm:$0xff] %v3230
    %3247 = vst [vmem:[#allocation3 + $0x10] sm:$0xff] %v3231
    %3248 = vst [vmem:[#allocation3 + $0x18] sm:$0xff] %v3232
    %3249 = vst [vmem:[#allocation3 + $0x20] sm:$0xff] %v3233
    %3250 = vst [vmem:[#allocation3 + $0x28] sm:$0xff] %v3234
    %3251 = vst [vmem:[#allocation3 + $0x30] sm:$0xff] %v3235
    %3252 = vst [vmem:[#allocation3 + $0x38] sm:$0xff] %v3236
    %3253 = vst [vmem:[#allocation3 + $0x40] sm:$0xff] %v3237
    %3254 = vst [vmem:[#allocation3 + $0x48] sm:$0xff] %v3238
    %3255 = vst [vmem:[#allocation3 + $0x50] sm:$0xff] %v3239
    %3256 = vst [vmem:[#allocation3 + $0x58] sm:$0xff] %v3240
    %3257 = vst [vmem:[#allocation3 + $0x60] sm:$0xff] %v3241
    %3258 = vst [vmem:[#allocation3 + $0x68] sm:$0xff] %v3242
    %3259 = vst [vmem:[#allocation3 + $0x70] sm:$0xff] %v3243
    %3260 = vst [vmem:[#allocation3 + $0x78] sm:$0xff] %v3244
    %v3261 = vld [vmem:[#allocation3] sm:$0xff]
    %v3262 = vld [vmem:[#allocation3 + $0x10] sm:$0xff]
    %v3263 = vld [vmem:[#allocation3 + $0x20] sm:$0xff]
    %v3264 = vld [vmem:[#allocation3 + $0x30] sm:$0xff]
    %v3265 = vld [vmem:[#allocation3 + $0x40] sm:$0xff]
    %v3266 = vld [vmem:[#allocation3 + $0x50] sm:$0xff]
    %v3267 = vld [vmem:[#allocation3 + $0x60] sm:$0xff]
    %v3268 = vld [vmem:[#allocation3 + $0x70] sm:$0xff]
    %v3269 = vld [vmem:[#allocation3 + $0x8] sm:$0xff]
    %v3270 = vld [vmem:[#allocation3 + $0x18] sm:$0xff]
    %v3271 = vld [vmem:[#allocation3 + $0x28] sm:$0xff]
    %v3272 = vld [vmem:[#allocation3 + $0x38] sm:$0xff]
    %v3273 = vld [vmem:[#allocation3 + $0x48] sm:$0xff]
    %v3274 = vld [vmem:[#allocation3 + $0x58] sm:$0xff]
    %v3275 = vld [vmem:[#allocation3 + $0x68] sm:$0xff]
    %v3276 = vld [vmem:[#allocation3 + $0x78] sm:$0xff]
    %v3277 = vmax.f32 %v3261, %v3269
    %v3278 = vmax.f32 %v3262, %v3270
    %v3279 = vmax.f32 %v3263, %v3271
    %v3280 = vmax.f32 %v3264, %v3272
    %v3281 = vmax.f32 %v3265, %v3273
    %v3282 = vmax.f32 %v3266, %v3274
    %v3283 = vmax.f32 %v3267, %v3275
    %v3284 = vmax.f32 %v3268, %v3276
    %v3285 = vmax.f32 %v3277, %v3278
    %v3286 = vld [vmem:[%s4] sm:$0x1]
    %v3288 = vperm.slane %v3286, 0
    %v3290 = vadd.f32 %v3285, %v3288
    %v3291 = vmax.f32 %v3290, 0.0
    %v3292 = vpack.c.bf16 %v3291, %v3291
    %v3293 = vmax.f32 %v3279, %v3280
    %v3294 = vadd.f32 %v3293, %v3288
    %v3295 = vmax.f32 %v3294, 0.0
    %v3296 = vpack.c.bf16 %v3295, %v3295
    %v3297 = vmax.f32 %v3281, %v3282
    %v3298 = vadd.f32 %v3297, %v3288
    %v3299 = vmax.f32 %v3298, 0.0
    %v3300 = vpack.c.bf16 %v3299, %v3299
    %v3301 = vmax.f32 %v3283, %v3284
    %v3302 = vadd.f32 %v3301, %v3288
    %v3303 = vmax.f32 %v3302, 0.0
    %v3304 = vpack.c.bf16 %v3303, %v3303
    %v3305 = vld [vmem:[%s5] sm:$0xf]
    %v3306 = vld [vmem:[%s5 + $0x4] sm:$0xf]
    %v3307 = vld [vmem:[%s5 + $0x8] sm:$0xf]
    %v3308 = vld [vmem:[%s5 + $0xc] sm:$0xf]
    %v3309 = vld [vmem:[%s5 + $0x10] sm:$0xf]
    %v3310 = vld [vmem:[%s5 + $0x14] sm:$0xf]
    %v3311 = vld [vmem:[%s5 + $0x18] sm:$0xf]
    %v3312 = vld [vmem:[%s5 + $0x1c] sm:$0xf]
    %v3313 = vld [vmem:[%s5 + $0x20] sm:$0xf]
    %v3314 = vld [vmem:[%s5 + $0x24] sm:$0xf]
    %v3315 = vld [vmem:[%s5 + $0x28] sm:$0xf]
    %v3316 = vld [vmem:[%s5 + $0x2c] sm:$0xf]
    %v3317 = vld [vmem:[%s5 + $0x30] sm:$0xf]
    %v3318 = vld [vmem:[%s5 + $0x34] sm:$0xf]
    %v3319 = vld [vmem:[%s5 + $0x38] sm:$0xf]
    %v3320 = vld [vmem:[%s5 + $0x3c] sm:$0xf]
    %v3321 = vld [vmem:[%s5 + $0x40] sm:$0xf]
    %v3322 = vld [vmem:[%s5 + $0x44] sm:$0xf]
    %v3323 = vld [vmem:[%s5 + $0x48] sm:$0xf]
    %v3324 = vld [vmem:[%s5 + $0x4c] sm:$0xf]
    %v3325 = vld [vmem:[%s5 + $0x50] sm:$0xf]
    %v3326 = vld [vmem:[%s5 + $0x54] sm:$0xf]
    %v3327 = vld [vmem:[%s5 + $0x58] sm:$0xf]
    %v3328 = vld [vmem:[%s5 + $0x5c] sm:$0xf]
    %v3329 = vld [vmem:[%s5 + $0x60] sm:$0xf]
    %v3330 = vld [vmem:[%s5 + $0x64] sm:$0xf]
    %v3331 = vld [vmem:[%s5 + $0x68] sm:$0xf]
    %v3332 = vld [vmem:[%s5 + $0x6c] sm:$0xf]
    %v3333 = vld [vmem:[%s5 + $0x70] sm:$0xf]
    %v3334 = vld [vmem:[%s5 + $0x74] sm:$0xf]
    %v3335 = vld [vmem:[%s5 + $0x78] sm:$0xf]
    %v3336 = vld [vmem:[%s5 + $0x7c] sm:$0xf]
    %v3337 = vld [vmem:[%s5 + $0x80] sm:$0xf]
    %v3338 = vld [vmem:[%s5 + $0x84] sm:$0xf]
    %v3339 = vld [vmem:[%s5 + $0x88] sm:$0xf]
    %v3340 = vld [vmem:[%s5 + $0x8c] sm:$0xf]
    %v3341 = vld [vmem:[%s5 + $0x90] sm:$0xf]
    %v3342 = vld [vmem:[%s5 + $0x94] sm:$0xf]
    %v3343 = vld [vmem:[%s5 + $0x98] sm:$0xf]
    %v3344 = vld [vmem:[%s5 + $0x9c] sm:$0xf]
    %v3345 = vld [vmem:[%s5 + $0xa0] sm:$0xf]
    %v3346 = vld [vmem:[%s5 + $0xa4] sm:$0xf]
    %v3347 = vld [vmem:[%s5 + $0xa8] sm:$0xf]
    %v3348 = vld [vmem:[%s5 + $0xac] sm:$0xf]
    %v3349 = vld [vmem:[%s5 + $0xb0] sm:$0xf]
    %v3350 = vld [vmem:[%s5 + $0xb4] sm:$0xf]
    %v3351 = vld [vmem:[%s5 + $0xb8] sm:$0xf]
    %v3352 = vld [vmem:[%s5 + $0xbc] sm:$0xf]
    %v3353 = vld [vmem:[%s5 + $0xc0] sm:$0xf]
    %v3354 = vld [vmem:[%s5 + $0xc4] sm:$0xf]
    %v3355 = vld [vmem:[%s5 + $0xc8] sm:$0xf]
    %v3356 = vld [vmem:[%s5 + $0xcc] sm:$0xf]
    %v3357 = vld [vmem:[%s5 + $0xd0] sm:$0xf]
    %v3358 = vld [vmem:[%s5 + $0xd4] sm:$0xf]
    %v3359 = vld [vmem:[%s5 + $0xd8] sm:$0xf]
    %v3360 = vld [vmem:[%s5 + $0xdc] sm:$0xf]
    %v3361 = vld [vmem:[%s5 + $0xe0] sm:$0xf]
    %v3362 = vld [vmem:[%s5 + $0xe4] sm:$0xf]
    %v3363 = vld [vmem:[%s5 + $0xe8] sm:$0xf]
    %v3364 = vld [vmem:[%s5 + $0xec] sm:$0xf]
    %v3365 = vld [vmem:[%s5 + $0xf0] sm:$0xf]
    %v3366 = vld [vmem:[%s5 + $0xf4] sm:$0xf]
    %v3367 = vld [vmem:[%s5 + $0xf8] sm:$0xf]
    %v3368 = vld [vmem:[%s5 + $0xfc] sm:$0xf]
    %v3369 = vld [vmem:[%s6] sm:$0x1]
    %v3371 = vperm.slane %v3369, 0
    %v3437 = vunpack.c.l.b16 %v3305
    %v3438 = vunpack.c.l.b16 %v3306
    %v3439 = vunpack.c.l.b16 %v3307
    %v3440 = vunpack.c.l.b16 %v3308
    %v3441 = vunpack.c.l.b16 %v3309
    %v3442 = vunpack.c.l.b16 %v3310
    %v3443 = vunpack.c.l.b16 %v3311
    %v3444 = vunpack.c.l.b16 %v3312
    %v3445 = vunpack.c.l.b16 %v3313
    %v3446 = vunpack.c.l.b16 %v3314
    %v3447 = vunpack.c.l.b16 %v3315
    %v3448 = vunpack.c.l.b16 %v3316
    %v3449 = vunpack.c.l.b16 %v3317
    %v3450 = vunpack.c.l.b16 %v3318
    %v3451 = vunpack.c.l.b16 %v3319
    %v3452 = vunpack.c.l.b16 %v3320
    %v3453 = vunpack.c.l.b16 %v3321
    %v3454 = vunpack.c.l.b16 %v3322
    %v3455 = vunpack.c.l.b16 %v3323
    %v3456 = vunpack.c.l.b16 %v3324
    %v3457 = vunpack.c.l.b16 %v3325
    %v3458 = vunpack.c.l.b16 %v3326
    %v3459 = vunpack.c.l.b16 %v3327
    %v3460 = vunpack.c.l.b16 %v3328
    %v3461 = vunpack.c.l.b16 %v3329
    %v3462 = vunpack.c.l.b16 %v3330
    %v3463 = vunpack.c.l.b16 %v3331
    %v3464 = vunpack.c.l.b16 %v3332
    %v3465 = vunpack.c.l.b16 %v3333
    %v3466 = vunpack.c.l.b16 %v3334
    %v3467 = vunpack.c.l.b16 %v3335
    %v3468 = vunpack.c.l.b16 %v3336
    %v3469 = vunpack.c.l.b16 %v3337
    %v3470 = vunpack.c.l.b16 %v3338
    %v3471 = vunpack.c.l.b16 %v3339
    %v3472 = vunpack.c.l.b16 %v3340
    %v3473 = vunpack.c.l.b16 %v3341
    %v3474 = vunpack.c.l.b16 %v3342
    %v3475 = vunpack.c.l.b16 %v3343
    %v3476 = vunpack.c.l.b16 %v3344
    %v3477 = vunpack.c.l.b16 %v3345
    %v3478 = vunpack.c.l.b16 %v3346
    %v3479 = vunpack.c.l.b16 %v3347
    %v3480 = vunpack.c.l.b16 %v3348
    %v3481 = vunpack.c.l.b16 %v3349
    %v3482 = vunpack.c.l.b16 %v3350
    %v3483 = vunpack.c.l.b16 %v3351
    %v3484 = vunpack.c.l.b16 %v3352
    %v3485 = vunpack.c.l.b16 %v3353
    %v3486 = vunpack.c.l.b16 %v3354
    %v3487 = vunpack.c.l.b16 %v3355
    %v3488 = vunpack.c.l.b16 %v3356
    %v3489 = vunpack.c.l.b16 %v3357
    %v3490 = vunpack.c.l.b16 %v3358
    %v3491 = vunpack.c.l.b16 %v3359
    %v3492 = vunpack.c.l.b16 %v3360
    %v3493 = vunpack.c.l.b16 %v3361
    %v3494 = vunpack.c.l.b16 %v3362
    %v3495 = vunpack.c.l.b16 %v3363
    %v3496 = vunpack.c.l.b16 %v3364
    %v3497 = vunpack.c.l.b16 %v3365
    %v3498 = vunpack.c.l.b16 %v3366
    %v3499 = vunpack.c.l.b16 %v3367
    %v3500 = vunpack.c.l.b16 %v3368
    %v3501 = vpack.c.b16 %v3438, %v3437
    %v3502 = vpack.c.b16 %v3440, %v3439
    %v3503 = vpack.c.b16 %v3442, %v3441
    %v3504 = vpack.c.b16 %v3444, %v3443
    %v3505 = vpack.c.b16 %v3446, %v3445
    %v3506 = vpack.c.b16 %v3448, %v3447
    %v3507 = vpack.c.b16 %v3450, %v3449
    %v3508 = vpack.c.b16 %v3452, %v3451
    %v3509 = vpack.c.b16 %v3454, %v3453
    %v3510 = vpack.c.b16 %v3456, %v3455
    %v3511 = vpack.c.b16 %v3458, %v3457
    %v3512 = vpack.c.b16 %v3460, %v3459
    %v3513 = vpack.c.b16 %v3462, %v3461
    %v3514 = vpack.c.b16 %v3464, %v3463
    %v3515 = vpack.c.b16 %v3466, %v3465
    %v3516 = vpack.c.b16 %v3468, %v3467
    %v3517 = vpack.c.b16 %v3470, %v3469
    %v3518 = vpack.c.b16 %v3472, %v3471
    %v3519 = vpack.c.b16 %v3474, %v3473
    %v3520 = vpack.c.b16 %v3476, %v3475
    %v3521 = vpack.c.b16 %v3478, %v3477
    %v3522 = vpack.c.b16 %v3480, %v3479
    %v3523 = vpack.c.b16 %v3482, %v3481
    %v3524 = vpack.c.b16 %v3484, %v3483
    %v3525 = vpack.c.b16 %v3486, %v3485
    %v3526 = vpack.c.b16 %v3488, %v3487
    %v3527 = vpack.c.b16 %v3490, %v3489
    %v3528 = vpack.c.b16 %v3492, %v3491
    %v3529 = vpack.c.b16 %v3494, %v3493
    %v3530 = vpack.c.b16 %v3496, %v3495
    %v3531 = vpack.c.b16 %v3498, %v3497
    %v3532 = vpack.c.b16 %v3500, %v3499
    %3565 = vmatpush.bf16.msra.mxu0 %v3508
    %3566 = vmatpush.bf16.msra.mxu0 %v3507
    %3567 = vmatpush.bf16.msra.mxu0 %v3506
    %3568 = vmatpush.bf16.msra.mxu0 %v3505
    %3569 = vmatpush.bf16.msra.mxu0 %v3504
    %3570 = vmatpush.bf16.msra.mxu0 %v3503
    %3571 = vmatpush.bf16.msra.mxu0 %v3502
    %3572 = vmatpush.bf16.msra.mxu0 %v3501
    %3573 = vmatmul.bf16.gmra.mxu0 %v3292
    %v3574 = vpop.f32.mrf.mxu0
    %v3575 = vadd.f32 %v3371, %v3574
    %v3576 = vpop.f32.mrf.mxu0
    %3577 = vdwg.mxu0
    %3578 = vmatpush.bf16.msra.mxu0 %v3516
    %3579 = vmatpush.bf16.msra.mxu0 %v3515
    %3580 = vmatpush.bf16.msra.mxu0 %v3514
    %3581 = vmatpush.bf16.msra.mxu0 %v3513
    %3582 = vmatpush.bf16.msra.mxu0 %v3512
    %3583 = vmatpush.bf16.msra.mxu0 %v3511
    %3584 = vmatpush.bf16.msra.mxu0 %v3510
    %3585 = vmatpush.bf16.msra.mxu0 %v3509
    %3586 = vmatmul.bf16.gmra.mxu0 %v3296
    %v3587 = vpop.f32.mrf.mxu0
    %v3588 = vadd.f32 %v3575, %v3587
    %v3589 = vpop.f32.mrf.mxu0
    %3590 = vdwg.mxu0
    %3591 = vmatpush.bf16.msra.mxu0 %v3524
    %3592 = vmatpush.bf16.msra.mxu0 %v3523
    %3593 = vmatpush.bf16.msra.mxu0 %v3522
    %3594 = vmatpush.bf16.msra.mxu0 %v3521
    %3595 = vmatpush.bf16.msra.mxu0 %v3520
    %3596 = vmatpush.bf16.msra.mxu0 %v3519
    %3597 = vmatpush.bf16.msra.mxu0 %v3518
    %3598 = vmatpush.bf16.msra.mxu0 %v3517
    %3599 = vmatmul.bf16.gmra.mxu0 %v3300
    %v3600 = vpop.f32.mrf.mxu0
    %v3601 = vadd.f32 %v3588, %v3600
    %v3602 = vpop.f32.mrf.mxu0
    %3603 = vdwg.mxu0
    %3604 = vmatpush.bf16.msra.mxu0 %v3532
    %3605 = vmatpush.bf16.msra.mxu0 %v3531
    %3606 = vmatpush.bf16.msra.mxu0 %v3530
    %3607 = vmatpush.bf16.msra.mxu0 %v3529
    %3608 = vmatpush.bf16.msra.mxu0 %v3528
    %3609 = vmatpush.bf16.msra.mxu0 %v3527
    %3610 = vmatpush.bf16.msra.mxu0 %v3526
    %3611 = vmatpush.bf16.msra.mxu0 %v3525
    %3612 = vmatmul.bf16.gmra.mxu0 %v3304
    %v3613 = vpop.f32.mrf.mxu0
    %v3614 = vadd.f32 %v3601, %v3613
    %v3615 = vpop.f32.mrf.mxu0
    %3616 = vdwg.mxu0
    %v3617 = vmax.f32 %v3614, 0.0
    %v3618 = vpack.c.bf16 %v3617, %v3617
    %v3619 = vld [vmem:[%s7] sm:$0xf]
    %v3620 = vld [vmem:[%s7 + $0x4] sm:$0xf]
    %v3621 = vld [vmem:[%s7 + $0x8] sm:$0xf]
    %v3622 = vld [vmem:[%s7 + $0xc] sm:$0xf]
    %v3623 = vld [vmem:[%s7 + $0x10] sm:$0xf]
    %v3624 = vld [vmem:[%s7 + $0x14] sm:$0xf]
    %v3625 = vld [vmem:[%s7 + $0x18] sm:$0x1]
    %v3626 = vld [vmem:[%s8] sm:$0x1]
    %v3628 = vperm.slane %v3626, 0
    %v3637 = vunpack.c.l.b16 %v3619
    %v3638 = vunpack.c.l.b16 %v3620
    %v3639 = vunpack.c.l.b16 %v3621
    %v3640 = vunpack.c.l.b16 %v3622
    %v3641 = vunpack.c.l.b16 %v3623
    %v3642 = vunpack.c.l.b16 %v3624
    %v3643 = vunpack.c.l.b16 %v3625
    %v3644 = vpack.c.b16 %v3638, %v3637
    %v3645 = vpack.c.b16 %v3640, %v3639
    %v3646 = vpack.c.b16 %v3642, %v3641
    %v3647 = vpack.c.b16 %v3643, %v3643
    %vm3651 = vcmask 408576
    %v3653 = vsel %vm3651, %v3618, 0
    %vm3655 = vcmask 1040384
    %v3657 = vsel %vm3655, %v3647, 0
    %3659 = vmatpush.bf16.msra.mxu0 0
    %3660 = vmatpush.bf16.msra.mxu0 0
    %3661 = vmatpush.bf16.msra.mxu0 0
    %3662 = vmatpush.bf16.msra.mxu0 0
    %3663 = vmatpush.bf16.msra.mxu0 %v3657
    %3664 = vmatpush.bf16.msra.mxu0 %v3646
    %3665 = vmatpush.bf16.msra.mxu0 %v3645
    %3666 = vmatpush.bf16.msra.mxu0 %v3644
    %3667 = vmatmul.bf16.gmra.mxu0 %v3653
    %v3668 = vpop.f32.mrf.mxu0
    %v3669 = vadd.f32 %v3628, %v3668
    %v3670 = vpop.f32.mrf.mxu0
    %3671 = vdwg.mxu0
    %vm3672 = vcmask 80896
    %v3673 = vsel %vm3672, %v3669, -inf
    %3674 = vmax.xlane.f32.xlu0 %v3673
    %v3675 = vpop.xlane.xlu0 %3674
    %v3676 = vsub.f32 %v3669, %v3675
    %v3677 = vmul.f32 %v3676, 1.442695
    %v3678 = vpow.pop %v3677
    %v3679 = vsel %vm3672, %v3678, 0.0
    %3680 = vadd.xlane.f32.xlu0 %v3679
    %v3681 = vpop.xlane.xlu0 %3680
    %v3682 = vrcp.pop %v3681
    %v3683 = vmul.f32 %v3681, %v3682
    %v3684 = vsub.f32 1.0, %v3683
    %v3685 = vmul.f32 %v3682, %v3684
    %v3686 = vadd.f32 %v3682, %v3685
    %vm3687 = vweird.f32 %v3681
    %vm3688 = vweird.f32 %v3682
    %vm3689 = vmor %vm3687, %vm3688
    %v3690 = vsel %vm3689, %v3682, %v3686
    %v3691 = vand.u32 2147483647, %v3681
    %vm3692 = vcmp.eq.f32.partialorder %v3691, 8.507059e+37
    %v3693 = vand.u32 %v3681, 2147483648
    %v3694 = vor.u32 1.1754944e-38, %v3693
    %v3695 = vsel %vm3692, %v3694, %v3690
    %v3696 = vmul.f32 %v3678, %v3695
    %3697 = vst.msk [vmem:[%s9] sm:$0xff] %vm3672, %v3696
    // Predicated region
    $region42: #{cnn_forward.1} parent=1 // pred_check
      _
    $region43: #{cnn_forward.1} parent=1 // pred_check_branch
      %3699 = sbr.rel (0) target = $region45
    $region44: #{cnn_forward.1} parent=1 // pred_region
      _
    $region45: #{cnn_forward.1} parent=1 // pred_fallthru
      _
    // Predicated region
    $region46: #{cnn_forward.1} parent=1 // pred_check
      _
    $region47: #{cnn_forward.1} parent=1 // pred_check_branch
      %3701 = sbr.rel (0) target = $region49
    $region48: #{cnn_forward.1} parent=1 // pred_region
      _
    $region49: #{cnn_forward.1} parent=1 // pred_fallthru
      _
    %3702 = vsyncpa [#allocation5], 1

</llo_original>
